<compile_context>
chip_gen: v6e
topology: v6e:2x2x1
jax: 0.10.0
libtpu: 0.0.40
codegen_flags: <defaults>
</compile_context>

<pallas_src>
import jax
import jax.numpy as jnp
from jax.experimental import pallas as pl
from jax.experimental.pallas import tpu as pltpu

EPS = 1e-5                      # PyTorch BatchNorm default eps
K5 = 5                          # deconv kernel size
_OFFSETS = (-1, 0, 1)           # union of input-row/col offsets for stride-2 k=5 deconv
# input offset -> (pre-flip) kernel tap index, per output phase
_PHASE_TAPS = {0: {-1: 0, 0: 2, 1: 4}, 1: {0: 1, 1: 3}}


def _round_up(x, m):
    return (x + m - 1) // m * m


def _default_tile_m():
    """Bigger row tiles on 128-MiB-VMEM parts (v5e/v6e); keep 512 on v7x (64 MiB)."""
    try:
        info = pltpu.get_tpu_info()
        vmem = 0
        for name in ("vmem_capacity_bytes", "vmem_size_bytes", "vmem_bytes"):
            vmem = getattr(info, name, 0) or vmem
        return 1024 if vmem >= (100 << 20) else 512
    except Exception:
        return 512


_TILE_M = _default_tile_m()


def _plan_rows(M, max_tile=None, target_steps=8):
    """Row tile (multiple of 8, divides padded M) aiming for >= ~8 grid steps.

    Returns (tm, shards, steps_per_shard, Mp) with Mp = shards*steps*tm.
    """
    if max_tile is None:
        max_tile = _TILE_M
    Mp = _round_up(max(M, 8), 8)
    tm = max(8, min(max_tile, _round_up(max(Mp // target_steps, 8), 8), Mp))
    while Mp % tm:
        tm -= 8
    nblk = Mp // tm
    shards = 2 if (nblk >= 2 and nblk % 2 == 0) else 1
    return tm, shards, nblk // shards, Mp


def _vmem_limit(block_bytes):
    """Tight per-call VMEM budget: double-buffered blocks + compiler scratch margin."""
    need = 2 * int(block_bytes) + (8 << 20)
    return int(min(max(need, 24 << 20), 56 << 20))


# --------------------------------------------------------------------------
# Pass 1: tiled matmul with fused per-column sum / sum-of-squares accumulation
#   grid = (shards, steps): "parallel" shard axis (v7x 2-TC), "arbitrary" M axis.
# --------------------------------------------------------------------------
def _mm_stats_kernel(x_ref, w_ref, y_ref, sum_ref, ssq_ref):
    step = pl.program_id(1)
    y = jnp.dot(x_ref[...], w_ref[...], preferred_element_type=jnp.float32)
    y_ref[...] = y.astype(y_ref.dtype)

    @pl.when(step == 0)
    def _():
        sum_ref[...] = jnp.zeros_like(sum_ref)
        ssq_ref[...] = jnp.zeros_like(ssq_ref)

    sum_ref[...] += jnp.sum(y, axis=0, keepdims=True)[None]
    ssq_ref[...] += jnp.sum(y * y, axis=0, keepdims=True)[None]


def matmul_with_stats(x, w, *, out_dtype=jnp.bfloat16):
    """x:(M,K) @ w:(K,Np) -> y (Mp,Np) out_dtype, col_sum / col_ssq (shards,1,Np) f32.

    Rows are zero padded only if M % 8 != 0 (padded rows contribute 0 to the stats;
    the caller divides by the true row count).  Inputs cast to bf16, f32 accumulation.
    """
    M, K = x.shape
    Np = w.shape[1]
    tm, shards, steps, Mp = _plan_rows(M)
    xb = x.astype(jnp.bfloat16)
    if Mp != M:
        xb = jnp.pad(xb, ((0, Mp - M), (0, 0)))
    wb = w.astype(jnp.bfloat16)
    oit = jnp.dtype(out_dtype).itemsize
    blk_bytes = tm * K * 2 + K * Np * 2 + tm * Np * oit + 2 * Np * 4
    cost = pl.CostEstimate(
        flops=2 * Mp * K * Np, transcendentals=0,
        bytes_accessed=Mp * K * 2 + K * Np * 2 + Mp * Np * oit + 2 * shards * Np * 4)
    return pl.pallas_call(
        _mm_stats_kernel,
        out_shape=(jax.ShapeDtypeStruct((Mp, Np), out_dtype),
                   jax.ShapeDtypeStruct((shards, 1, Np), jnp.float32),
                   jax.ShapeDtypeStruct((shards, 1, Np), jnp.float32)),
        grid_spec=pltpu.PrefetchScalarGridSpec(
            num_scalar_prefetch=0,
            grid=(shards, steps),
            in_specs=[pl.BlockSpec((tm, K), lambda s, i: (s * steps + i, 0)),
                      pl.BlockSpec((K, Np), lambda s, i: (0, 0))],
            out_specs=[pl.BlockSpec((tm, Np), lambda s, i: (s * steps + i, 0)),
                       pl.BlockSpec((1, 1, Np), lambda s, i: (s, 0, 0)),
                       pl.BlockSpec((1, 1, Np), lambda s, i: (s, 0, 0))]),
        compiler_params=pltpu.CompilerParams(
            dimension_semantics=("parallel", "arbitrary"),
            vmem_limit_bytes=_vmem_limit(blk_bytes)),
        cost_estimate=cost,
    )(xb, wb)


# --------------------------------------------------------------------------
# Pass 2: tiled elementwise normalize + scale + ReLU (bf16 in / bf16 out)
# --------------------------------------------------------------------------
def _bn_relu_kernel(y_ref, scale_ref, shift_ref, o_ref):
    y = y_ref[...].astype(jnp.float32)
    o_ref[...] = jnp.maximum(y * scale_ref[...] + shift_ref[...], 0.0).astype(o_ref.dtype)


def bn_relu_apply(y, scale, shift, *, out_dtype=jnp.bfloat16):
    Mp, Np = y.shape
    tm, shards, steps, Mp2 = _plan_rows(Mp)
    assert Mp2 == Mp
    nblk = shards * steps
    ibt = jnp.dtype(y.dtype).itemsize
    obt = jnp.dtype(out_dtype).itemsize
    blk_bytes = tm * Np * ibt + 2 * Np * 4 + tm * Np * obt
    cost = pl.CostEstimate(flops=2 * Mp * Np, transcendentals=0,
                           bytes_accessed=Mp * Np * ibt + 2 * Np * 4 + Mp * Np * obt)
    return pl.pallas_call(
        _bn_relu_kernel,
        out_shape=jax.ShapeDtypeStruct((Mp, Np), out_dtype),
        grid_spec=pltpu.PrefetchScalarGridSpec(
            num_scalar_prefetch=0,
            grid=(nblk,),
            in_specs=[pl.BlockSpec((tm, Np), lambda i: (i, 0)),
                      pl.BlockSpec((1, Np), lambda i: (0, 0)),
                      pl.BlockSpec((1, Np), lambda i: (0, 0))],
            out_specs=pl.BlockSpec((tm, Np), lambda i: (i, 0))),
        compiler_params=pltpu.CompilerParams(
            dimension_semantics=("parallel",),
            vmem_limit_bytes=_vmem_limit(blk_bytes)),
        cost_estimate=cost,
    )(y, scale, shift)


# --------------------------------------------------------------------------
# Final layer: tiled matmul + bias + tanh (no BN), bf16 output
# --------------------------------------------------------------------------
def _mm_bias_tanh_kernel(x_ref, w_ref, b_ref, o_ref):
    y = jnp.dot(x_ref[...], w_ref[...], preferred_element_type=jnp.float32)
    o_ref[...] = jnp.tanh(y + b_ref[...]).astype(o_ref.dtype)


def matmul_bias_tanh(x, w, bias_row, *, out_dtype=jnp.bfloat16):
    M, K = x.shape
    Np = w.shape[1]
    tm, shards, steps, Mp = _plan_rows(M)
    nblk = shards * steps
    xb = x.astype(jnp.bfloat16)
    if Mp != M:
        xb = jnp.pad(xb, ((0, Mp - M), (0, 0)))
    wb = w.astype(jnp.bfloat16)
    obt = jnp.dtype(out_dtype).itemsize
    blk_bytes = tm * K * 2 + K * Np * 2 + Np * 4 + tm * Np * obt
    cost = pl.CostEstimate(flops=2 * Mp * K * Np, transcendentals=Mp * Np,
                           bytes_accessed=Mp * K * 2 + K * Np * 2 + Np * 4 + Mp * Np * obt)
    return pl.pallas_call(
        _mm_bias_tanh_kernel,
        out_shape=jax.ShapeDtypeStruct((Mp, Np), out_dtype),
        grid_spec=pltpu.PrefetchScalarGridSpec(
            num_scalar_prefetch=0,
            grid=(nblk,),
            in_specs=[pl.BlockSpec((tm, K), lambda i: (i, 0)),
                      pl.BlockSpec((K, Np), lambda i: (0, 0)),
                      pl.BlockSpec((1, Np), lambda i: (0, 0))],
            out_specs=pl.BlockSpec((tm, Np), lambda i: (i, 0))),
        compiler_params=pltpu.CompilerParams(
            dimension_semantics=("parallel",),
            vmem_limit_bytes=_vmem_limit(blk_bytes)),
        cost_estimate=cost,
    )(xb, wb, bias_row.astype(jnp.float32))


# --------------------------------------------------------------------------
# Phase-FUSED transposed convolution glue (NHWC, no structural zeros)
# --------------------------------------------------------------------------
def _union_patches(xpad, H, W):
    """xpad: (B, H+2, W+2, C) -> (B, H, W, 9*C); channel blocks ordered by (dh, dw)."""
    slabs = []
    for dh in _OFFSETS:
        for dw in _OFFSETS:
            slabs.append(xpad[:, 1 + dh:1 + dh + H, 1 + dw:1 + dw + W, :])
    return jnp.concatenate(slabs, axis=-1)


def _union_weight(w_t, n_pad):
    """PyTorch ConvTranspose2d weight (Cin, Cout, 5, 5) -> (9*Cin, n_pad).

    Column blocks ordered by phase (ph, pw); zero blocks where a (dh, dw) offset does
    not contribute to a phase.  Padded lane columns are zero.
    """
    Cin, Cout = w_t.shape[0], w_t.shape[1]
    zero = jnp.zeros((Cin, Cout), w_t.dtype)
    rows = []
    for dh in _OFFSETS:
        for dw in _OFFSETS:
            cols = []
            for ph in (0, 1):
                for pw in (0, 1):
                    kh = _PHASE_TAPS[ph].get(dh)
                    kw = _PHASE_TAPS[pw].get(dw)
                    if kh is None or kw is None:
                        cols.append(zero)
                    else:
                        cols.append(w_t[:, :, K5 - 1 - kh, K5 - 1 - kw])  # flipped tap
            rows.append(jnp.concatenate(cols, axis=1))
    w = jnp.concatenate(rows, axis=0)                     # (9*Cin, 4*Cout)
    return jnp.pad(w, ((0, 0), (0, n_pad - 4 * Cout)))


def _bn_scale_shift(col_sum, col_ssq, count, gamma, beta, n_pad, phases):
    """Fold per-shard / per-phase column sums into per-channel BN scale & shift rows."""
    C = gamma.shape[0]
    s = col_sum.reshape(-1, col_sum.shape[-1]).sum(0)[: phases * C]
    q = col_ssq.reshape(-1, col_ssq.shape[-1]).sum(0)[: phases * C]
    if phases > 1:
        s = s.reshape(phases, C).sum(0)
        q = q.reshape(phases, C).sum(0)
    mean = s / count
    # NOTE: E[y^2] - mean^2 (clamped); adequate at these scales since the matmul output
    # is bias-free / near-zero-mean.  TODO(synk): Welford-style merge if drift shows up.
    var = jnp.maximum(q / count - mean * mean, 0.0)
    scale_c = gamma.astype(jnp.float32) * jax.lax.rsqrt(var + EPS)
    shift_c = beta.astype(jnp.float32) - mean * scale_c
    if phases > 1:
        scale_c = jnp.tile(scale_c, phases)
        shift_c = jnp.tile(shift_c, phases)
    scale = jnp.pad(scale_c, (0, n_pad - scale_c.shape[0])).reshape(1, n_pad)
    shift = jnp.pad(shift_c, (0, n_pad - shift_c.shape[0])).reshape(1, n_pad)
    return scale, shift


def deconv_bn_relu(a, w_t, gamma, beta):
    """ConvTranspose2d(5,2,pad=2,out_pad=1,bias=False) + BatchNorm2d + ReLU, NHWC."""
    B, H, W, Cin = a.shape
    Cout = w_t.shape[1]
    M = B * H * W
    Np = _round_up(4 * Cout, 128)
    xpad = jnp.pad(a, ((0, 0), (1, 1), (1, 1), (0, 0)))
    patches = _union_patches(xpad, H, W).reshape(M, 9 * Cin)
    y, s, q = matmul_with_stats(patches, _union_weight(w_t, Np))
    # BatchNorm2d statistics are over ALL output positions = all 4 phases combined.
    scale, shift = _bn_scale_shift(s, q, 4.0 * M, gamma, beta, Np, phases=4)
    act = bn_relu_apply(y, scale, shift)[:M, :4 * Cout]
    act = act.reshape(B, H, W, 2, 2, Cout).transpose(0, 1, 3, 2, 4, 5)
    return act.reshape(B, 2 * H, 2 * W, Cout)


def deconv_bias_tanh(a, w_t, bias):
    """Final ConvTranspose2d (with bias) + Tanh, NHWC."""
    B, H, W, Cin = a.shape
    Cout = w_t.shape[1]
    M = B * H * W
    Np = _round_up(4 * Cout, 128)
    xpad = jnp.pad(a, ((0, 0), (1, 1), (1, 1), (0, 0)))
    patches = _union_patches(xpad, H, W).reshape(M, 9 * Cin)
    bias_row = jnp.pad(jnp.tile(bias.astype(jnp.float32), 4),
                       (0, Np - 4 * Cout)).reshape(1, Np)
    o = matmul_bias_tanh(patches, _union_weight(w_t, Np), bias_row)[:M, :4 * Cout]
    o = o.reshape(B, H, W, 2, 2, Cout).transpose(0, 1, 3, 2, 4, 5)
    return o.reshape(B, 2 * H, 2 * W, Cout)


# --------------------------------------------------------------------------
# Generator forward
# --------------------------------------------------------------------------
@jax.jit
def generator_forward(params, x):
    B = x.shape[0]
    F = params["fc_w"].shape[1]
    C0 = F // 16                                    # hid_channels * 8
    Np = _round_up(F, 128)
    wfc = jnp.pad(params["fc_w"], ((0, 0), (0, Np - F)))
    # fc (no bias) + BatchNorm1d + ReLU
    y, s, q = matmul_with_stats(x, wfc)
    scale, shift = _bn_scale_shift(s, q, float(B), params["fc_g"], params["fc_b"],
                                   Np, phases=1)
    a = bn_relu_apply(y, scale, shift)[:B, :F]
    a = a.reshape(B, C0, 4, 4).transpose(0, 2, 3, 1)          # tiny NCHW view -> NHWC
    # three G_conv_blocks: ConvTranspose2d(no bias) + BatchNorm2d + ReLU
    for i in range(3):
        a = deconv_bn_relu(a, params[f"conv{i}_w"], params[f"conv{i}_g"],
                           params[f"conv{i}_b"])
    # final ConvTranspose2d (with bias) + Tanh
    img = deconv_bias_tanh(a, params["conv3_w"], params["conv3_bias"])
    return img.transpose(0, 3, 1, 2).astype(jnp.float32)     # NCHW once, at the end


# --------------------------------------------------------------------------
# Pure-JAX reference (zero-inserted im2col deconv) for a correctness check.
# Matmul inputs are quantized to bf16 like the Pallas path (y kept in f32).
# --------------------------------------------------------------------------
def _reference_forward(params, x):
    def q(v):
        return v.astype(jnp.bfloat16).astype(jnp.float32)

    def bn_relu(y, g, b):
        mu = jnp.mean(y, axis=0, keepdims=True)
        var = jnp.mean((y - mu) ** 2, axis=0, keepdims=True)
        return jnp.maximum((y - mu) * jax.lax.rsqrt(var + EPS) * g + b, 0.0)

    def deconv(a, w_t):   # a: (B, H, W, C) NHWC
        B, H, W, C = a.shape
        OH, OW = 2 * H, 2 * W
        xd = jnp.zeros((B, 2 * H + 4, 2 * W + 4, C), jnp.float32)
        xd = xd.at[:, 2:2 * H + 2:2, 2:2 * W + 2:2, :].set(a.astype(jnp.float32))
        cols, wts = [], []
        for kh in range(K5):
            for kw in range(K5):
                cols.append(xd[:, kh:kh + OH, kw:kw + OW, :])
                wts.append(w_t[:, :, K5 - 1 - kh, K5 - 1 - kw])
        p = jnp.concatenate(cols, axis=-1).reshape(B * OH * OW, -1)
        wm = jnp.concatenate(wts, axis=0)
        y = jnp.dot(q(p), q(wm), preferred_element_type=jnp.float32)
        return y, (B, OH, OW)

    B = x.shape[0]
    F = params["fc_w"].shape[1]
    y = jnp.dot(q(x), q(params["fc_w"]), preferred_element_type=jnp.float32)
    a = bn_relu(y, params["fc_g"], params["fc_b"])
    a = a.reshape(B, F // 16, 4, 4).transpose(0, 2, 3, 1)
    for i in range(3):
        yy, (b, oh, ow) = deconv(a, params[f"conv{i}_w"])
        a = bn_relu(yy, params[f"conv{i}_g"], params[f"conv{i}_b"]).reshape(b, oh, ow, -1)
    yy, (b, oh, ow) = deconv(a, params["conv3_w"])
    out = jnp.tanh(yy + params["conv3_bias"]).reshape(b, oh, ow, -1)
    return out.transpose(0, 3, 1, 2)


# --------------------------------------------------------------------------
# Parameters
# --------------------------------------------------------------------------
def init_params(key, latent_dim, hid):
    ks = jax.random.split(key, 24)
    F = hid * 8 * 4 * 4
    chans = [hid * 8, hid * 4, hid * 2, hid, 3]
    p = {
        "fc_w": jax.random.normal(ks[0], (latent_dim, F), jnp.float32) * 0.05,
        "fc_g": 1.0 + 0.1 * jax.random.normal(ks[1], (F,), jnp.float32),
        "fc_b": 0.1 * jax.random.normal(ks[2], (F,), jnp.float32),
    }
    for i in range(3):
        cin, cout = chans[i], chans[i + 1]
        p[f"conv{i}_w"] = jax.random.normal(ks[3 + 3 * i], (cin, cout, K5, K5),
                                            jnp.float32) * 0.05
        p[f"conv{i}_g"] = 1.0 + 0.1 * jax.random.normal(ks[4 + 3 * i], (cout,), jnp.float32)
        p[f"conv{i}_b"] = 0.1 * jax.random.normal(ks[5 + 3 * i], (cout,), jnp.float32)
    p["conv3_w"] = jax.random.normal(ks[20], (chans[3], chans[4], K5, K5), jnp.float32) * 0.05
    p["conv3_bias"] = 0.1 * jax.random.normal(ks[21], (chans[4],), jnp.float32)
    return p


if __name__ == "__main__":
    LATENT = 32
    HID = 8       # small hid_channels for the synthetic run (module default is 64)
    B = 2

    key = jax.random.PRNGKey(0)
    kx, kp = jax.random.split(key)
    x = jax.random.normal(kx, (B, LATENT), jnp.float32)
    params = init_params(kp, LATENT, HID)

    img = jax.block_until_ready(generator_forward(params, x))

    assert img.shape == (B, 3, 64, 64), img.shape
    assert bool(jnp.all(jnp.isfinite(img)))
    assert bool(jnp.all(jnp.abs(img) <= 1.0))              # tanh range

    ref = jax.block_until_ready(jax.jit(_reference_forward)(params, x))
    max_err = float(jnp.max(jnp.abs(img - ref)))
    assert max_err < 4e-2, f"mismatch vs reference: {max_err}"

    print("KERNEL_OK")
</pallas_src>

<mosaic_0001>
module attributes {stable_mosaic.version = 11 : i64} {
  func.func @_bn_relu_kernel(%arg0: i32, %arg1: memref<8x1024xbf16, #tpu.memory_space<vmem>>, %arg2: memref<1x1024xf32, #tpu.memory_space<vmem>>, %arg3: memref<1x1024xf32, #tpu.memory_space<vmem>>, %arg4: memref<8x1024xbf16, #tpu.memory_space<vmem>>) attributes {dimension_semantics = [#tpu.dimension_semantics<parallel>], iteration_bounds = array<i64: 1>, scalar_prefetch = 0 : i64, scratch_operands = 0 : i64, tpu.core_type = #tpu.core_type<tc>, window_params = [{transform_indices = @transform_0, window_bounds = array<i64: 8, 1024>}, {pipeline_mode = #tpu.pipeline_mode<synchronous>, transform_indices = @transform_1, window_bounds = array<i64: 1, 1024>}, {pipeline_mode = #tpu.pipeline_mode<synchronous>, transform_indices = @transform_2, window_bounds = array<i64: 1, 1024>}, {transform_indices = @transform_3, window_bounds = array<i64: 8, 1024>}]} {
    %c0 = arith.constant 0 : index
    %c0_0 = arith.constant 0 : index
    %0 = vector.load %arg1[%c0, %c0_0] : memref<8x1024xbf16, #tpu.memory_space<vmem>>, vector<8x1024xbf16>
    %1 = arith.extf %0 : vector<8x1024xbf16> to vector<8x1024xf32>
    %c0_1 = arith.constant 0 : index
    %c0_2 = arith.constant 0 : index
    %2 = vector.load %arg2[%c0_1, %c0_2] : memref<1x1024xf32, #tpu.memory_space<vmem>>, vector<1x1024xf32>
    %3 = vector.broadcast %2 : vector<1x1024xf32> to vector<8x1024xf32>
    %4 = arith.mulf %1, %3 : vector<8x1024xf32>
    %c0_3 = arith.constant 0 : index
    %c0_4 = arith.constant 0 : index
    %5 = vector.load %arg3[%c0_3, %c0_4] : memref<1x1024xf32, #tpu.memory_space<vmem>>, vector<1x1024xf32>
    %6 = vector.broadcast %5 : vector<1x1024xf32> to vector<8x1024xf32>
    %7 = arith.addf %4, %6 : vector<8x1024xf32>
    %cst = arith.constant 0.000000e+00 : f32
    %8 = vector.broadcast %cst : f32 to vector<8x1024xf32>
    %9 = arith.maximumf %7, %8 : vector<8x1024xf32>
    %10 = arith.truncf %9 : vector<8x1024xf32> to vector<8x1024xbf16>
    %c0_5 = arith.constant 0 : index
    %c0_6 = arith.constant 0 : index
    %11 = vector.load %arg4[%c0_5, %c0_6] : memref<8x1024xbf16, #tpu.memory_space<vmem>>, vector<8x1024xbf16>
    tpu.vector_store %arg4[%c0_5, %c0_6], %10 {strides = array<i32>} : memref<8x1024xbf16, #tpu.memory_space<vmem>>, vector<8x1024xbf16>,
    return
  }
  func.func @transform_0(%arg0: i32) -> (i32, i32) {
    %c0_i32 = arith.constant 0 : i32
    %c0_i32_0 = arith.constant 0 : i32
    return %arg0, %c0_i32 : i32, i32
  }
  func.func @transform_1(%arg0: i32) -> (i32, i32) {
    %c0_i32 = arith.constant 0 : i32
    %c0_i32_0 = arith.constant 0 : i32
    %c0_i32_1 = arith.constant 0 : i32
    return %c0_i32, %c0_i32_0 : i32, i32
  }
  func.func @transform_2(%arg0: i32) -> (i32, i32) {
    %c0_i32 = arith.constant 0 : i32
    %c0_i32_0 = arith.constant 0 : i32
    %c0_i32_1 = arith.constant 0 : i32
    return %c0_i32, %c0_i32_0 : i32, i32
  }
  func.func @transform_3(%arg0: i32) -> (i32, i32) {
    %c0_i32 = arith.constant 0 : i32
    %c0_i32_0 = arith.constant 0 : i32
    return %arg0, %c0_i32 : i32, i32
  }
}

module attributes {stable_mosaic.version = 11 : i64} {
  func.func @_mm_stats_kernel(%arg0: i32, %arg1: i32, %arg2: memref<8x32xbf16, #tpu.memory_space<vmem>>, %arg3: memref<32x1024xbf16, #tpu.memory_space<vmem>>, %arg4: memref<8x1024xbf16, #tpu.memory_space<vmem>>, %arg5: memref<1x1x1024xf32, #tpu.memory_space<vmem>>, %arg6: memref<1x1x1024xf32, #tpu.memory_space<vmem>>) attributes {dimension_semantics = [#tpu.dimension_semantics<parallel>, #tpu.dimension_semantics<arbitrary>], iteration_bounds = array<i64: 1, 1>, scalar_prefetch = 0 : i64, scratch_operands = 0 : i64, tpu.core_type = #tpu.core_type<tc>, window_params = [{transform_indices = @transform_0, window_bounds = array<i64: 8, 32>}, {pipeline_mode = #tpu.pipeline_mode<synchronous>, transform_indices = @transform_1, window_bounds = array<i64: 32, 1024>}, {transform_indices = @transform_2, window_bounds = array<i64: 8, 1024>}, {transform_indices = @transform_3, window_bounds = array<i64: 1, 1, 1024>}, {transform_indices = @transform_4, window_bounds = array<i64: 1, 1, 1024>}]} {
    %c0 = arith.constant 0 : index
    %c0_0 = arith.constant 0 : index
    %0 = vector.load %arg2[%c0, %c0_0] : memref<8x32xbf16, #tpu.memory_space<vmem>>, vector<8x32xbf16>
    %c0_1 = arith.constant 0 : index
    %c0_2 = arith.constant 0 : index
    %1 = vector.load %arg3[%c0_1, %c0_2] : memref<32x1024xbf16, #tpu.memory_space<vmem>>, vector<32x1024xbf16>
    %cst = arith.constant dense<0.000000e+00> : vector<8x1024xf32>
    %2 = tpu.matmul %0, %1, %cst {dimension_numbers = #tpu.dot_dimension_numbers<[1], [0], [0], [1], [0, 0, 1, 1], [], []>} : vector<8x32xbf16>, vector<32x1024xbf16>, vector<8x1024xf32> -> vector<8x1024xf32>
    %3 = arith.truncf %2 : vector<8x1024xf32> to vector<8x1024xbf16>
    %c0_3 = arith.constant 0 : index
    %c0_4 = arith.constant 0 : index
    %4 = vector.load %arg4[%c0_3, %c0_4] : memref<8x1024xbf16, #tpu.memory_space<vmem>>, vector<8x1024xbf16>
    tpu.vector_store %arg4[%c0_3, %c0_4], %3 {strides = array<i32>} : memref<8x1024xbf16, #tpu.memory_space<vmem>>, vector<8x1024xbf16>,
    %c0_i32 = arith.constant 0 : i32
    %5 = arith.cmpi eq, %arg1, %c0_i32 : i32
    %6 = arith.extui %5 : i1 to i32
    %c0_i32_5 = arith.constant 0 : i32
    %7 = arith.cmpi ne, %6, %c0_i32_5 : i32
    scf.if %7 {
      %cst_20 = arith.constant 0.000000e+00 : f32
      %21 = vector.broadcast %cst_20 : f32 to vector<1x1x1024xf32>
      %c0_21 = arith.constant 0 : index
      %c0_22 = arith.constant 0 : index
      %c0_23 = arith.constant 0 : index
      %22 = vector.load %arg5[%c0_21, %c0_22, %c0_23] : memref<1x1x1024xf32, #tpu.memory_space<vmem>>, vector<1x1x1024xf32>
      tpu.vector_store %arg5[%c0_21, %c0_22, %c0_23], %21 {strides = array<i32>} : memref<1x1x1024xf32, #tpu.memory_space<vmem>>, vector<1x1x1024xf32>,
      %cst_24 = arith.constant 0.000000e+00 : f32
      %23 = vector.broadcast %cst_24 : f32 to vector<1x1x1024xf32>
      %c0_25 = arith.constant 0 : index
      %c0_26 = arith.constant 0 : index
      %c0_27 = arith.constant 0 : index
      %24 = vector.load %arg6[%c0_25, %c0_26, %c0_27] : memref<1x1x1024xf32, #tpu.memory_space<vmem>>, vector<1x1x1024xf32>
      tpu.vector_store %arg6[%c0_25, %c0_26, %c0_27], %23 {strides = array<i32>} : memref<1x1x1024xf32, #tpu.memory_space<vmem>>, vector<1x1x1024xf32>,
    } else {
    }
    %c0_6 = arith.constant 0 : index
    %c0_7 = arith.constant 0 : index
    %c0_8 = arith.constant 0 : index
    %8 = vector.load %arg5[%c0_6, %c0_7, %c0_8] : memref<1x1x1024xf32, #tpu.memory_space<vmem>>, vector<1x1x1024xf32>
    %cst_9 = arith.constant dense<0.000000e+00> : vector<1024xf32>
    %9 = vector.multi_reduction <add>, %2, %cst_9 [0] : vector<8x1024xf32> to vector<1024xf32>
    %10 = vector.shape_cast %9 : vector<1024xf32> to vector<1x1024xf32>
    %11 = vector.shape_cast %10 : vector<1x1024xf32> to vector<1x1x1024xf32>
    %12 = arith.addf %8, %11 : vector<1x1x1024xf32>
    %c0_10 = arith.constant 0 : index
    %c0_11 = arith.constant 0 : index
    %c0_12 = arith.constant 0 : index
    %13 = vector.load %arg5[%c0_10, %c0_11, %c0_12] : memref<1x1x1024xf32, #tpu.memory_space<vmem>>, vector<1x1x1024xf32>
    tpu.vector_store %arg5[%c0_10, %c0_11, %c0_12], %12 {strides = array<i32>} : memref<1x1x1024xf32, #tpu.memory_space<vmem>>, vector<1x1x1024xf32>,
    %c0_13 = arith.constant 0 : index
    %c0_14 = arith.constant 0 : index
    %c0_15 = arith.constant 0 : index
    %14 = vector.load %arg6[%c0_13, %c0_14, %c0_15] : memref<1x1x1024xf32, #tpu.memory_space<vmem>>, vector<1x1x1024xf32>
    %15 = arith.mulf %2, %2 : vector<8x1024xf32>
    %cst_16 = arith.constant dense<0.000000e+00> : vector<1024xf32>
    %16 = vector.multi_reduction <add>, %15, %cst_16 [0] : vector<8x1024xf32> to vector<1024xf32>
    %17 = vector.shape_cast %16 : vector<1024xf32> to vector<1x1024xf32>
    %18 = vector.shape_cast %17 : vector<1x1024xf32> to vector<1x1x1024xf32>
    %19 = arith.addf %14, %18 : vector<1x1x1024xf32>
    %c0_17 = arith.constant 0 : index
    %c0_18 = arith.constant 0 : index
    %c0_19 = arith.constant 0 : index
    %20 = vector.load %arg6[%c0_17, %c0_18, %c0_19] : memref<1x1x1024xf32, #tpu.memory_space<vmem>>, vector<1x1x1024xf32>
    tpu.vector_store %arg6[%c0_17, %c0_18, %c0_19], %19 {strides = array<i32>} : memref<1x1x1024xf32, #tpu.memory_space<vmem>>, vector<1x1x1024xf32>,
    return
  }
  func.func @transform_0(%arg0: i32, %arg1: i32) -> (i32, i32) {
    %c1_i32 = arith.constant 1 : i32
    %0 = arith.muli %arg0, %c1_i32 : i32
    %1 = arith.addi %0, %arg1 : i32
    %c0_i32 = arith.constant 0 : i32
    %c0_i32_0 = arith.constant 0 : i32
    return %1, %c0_i32 : i32, i32
  }
  func.func @transform_1(%arg0: i32, %arg1: i32) -> (i32, i32) {
    %c0_i32 = arith.constant 0 : i32
    %c0_i32_0 = arith.constant 0 : i32
    %c0_i32_1 = arith.constant 0 : i32
    return %c0_i32, %c0_i32_0 : i32, i32
  }
  func.func @transform_2(%arg0: i32, %arg1: i32) -> (i32, i32) {
    %c1_i32 = arith.constant 1 : i32
    %0 = arith.muli %arg0, %c1_i32 : i32
    %1 = arith.addi %0, %arg1 : i32
    %c0_i32 = arith.constant 0 : i32
    %c0_i32_0 = arith.constant 0 : i32
    return %1, %c0_i32 : i32, i32
  }
  func.func @transform_3(%arg0: i32, %arg1: i32) -> (i32, i32, i32) {
    %c0_i32 = arith.constant 0 : i32
    %c0_i32_0 = arith.constant 0 : i32
    %c0_i32_1 = arith.constant 0 : i32
    return %arg0, %c0_i32, %c0_i32_0 : i32, i32, i32
  }
  func.func @transform_4(%arg0: i32, %arg1: i32) -> (i32, i32, i32) {
    %c0_i32 = arith.constant 0 : i32
    %c0_i32_0 = arith.constant 0 : i32
    %c0_i32_1 = arith.constant 0 : i32
    return %arg0, %c0_i32, %c0_i32_0 : i32, i32, i32
  }
}

module attributes {stable_mosaic.version = 11 : i64} {
  func.func @_mm_stats_kernel(%arg0: i32, %arg1: i32, %arg2: memref<8x576xbf16, #tpu.memory_space<vmem>>, %arg3: memref<576x128xbf16, #tpu.memory_space<vmem>>, %arg4: memref<8x128xbf16, #tpu.memory_space<vmem>>, %arg5: memref<1x1x128xf32, #tpu.memory_space<vmem>>, %arg6: memref<1x1x128xf32, #tpu.memory_space<vmem>>) attributes {dimension_semantics = [#tpu.dimension_semantics<parallel>, #tpu.dimension_semantics<arbitrary>], iteration_bounds = array<i64: 2, 2>, scalar_prefetch = 0 : i64, scratch_operands = 0 : i64, tpu.core_type = #tpu.core_type<tc>, window_params = [{transform_indices = @transform_0, window_bounds = array<i64: 8, 576>}, {pipeline_mode = #tpu.pipeline_mode<synchronous>, transform_indices = @transform_1, window_bounds = array<i64: 576, 128>}, {transform_indices = @transform_2, window_bounds = array<i64: 8, 128>}, {transform_indices = @transform_3, window_bounds = array<i64: 1, 1, 128>}, {transform_indices = @transform_4, window_bounds = array<i64: 1, 1, 128>}]} {
    %c0 = arith.constant 0 : index
    %c0_0 = arith.constant 0 : index
    %0 = vector.load %arg2[%c0, %c0_0] : memref<8x576xbf16, #tpu.memory_space<vmem>>, vector<8x576xbf16>
    %c0_1 = arith.constant 0 : index
    %c0_2 = arith.constant 0 : index
    %1 = vector.load %arg3[%c0_1, %c0_2] : memref<576x128xbf16, #tpu.memory_space<vmem>>, vector<576x128xbf16>
    %cst = arith.constant dense<0.000000e+00> : vector<8x128xf32>
    %2 = tpu.matmul %0, %1, %cst {dimension_numbers = #tpu.dot_dimension_numbers<[1], [0], [0], [1], [0, 0, 1, 1], [], []>} : vector<8x576xbf16>, vector<576x128xbf16>, vector<8x128xf32> -> vector<8x128xf32>
    %3 = arith.truncf %2 : vector<8x128xf32> to vector<8x128xbf16>
    %c0_3 = arith.constant 0 : index
    %c0_4 = arith.constant 0 : index
    %4 = vector.load %arg4[%c0_3, %c0_4] : memref<8x128xbf16, #tpu.memory_space<vmem>>, vector<8x128xbf16>
    tpu.vector_store %arg4[%c0_3, %c0_4], %3 {strides = array<i32>} : memref<8x128xbf16, #tpu.memory_space<vmem>>, vector<8x128xbf16>,
    %c0_i32 = arith.constant 0 : i32
    %5 = arith.cmpi eq, %arg1, %c0_i32 : i32
    %6 = arith.extui %5 : i1 to i32
    %c0_i32_5 = arith.constant 0 : i32
    %7 = arith.cmpi ne, %6, %c0_i32_5 : i32
    scf.if %7 {
      %cst_20 = arith.constant 0.000000e+00 : f32
      %21 = vector.broadcast %cst_20 : f32 to vector<1x1x128xf32>
      %c0_21 = arith.constant 0 : index
      %c0_22 = arith.constant 0 : index
      %c0_23 = arith.constant 0 : index
      %22 = vector.load %arg5[%c0_21, %c0_22, %c0_23] : memref<1x1x128xf32, #tpu.memory_space<vmem>>, vector<1x1x128xf32>
      tpu.vector_store %arg5[%c0_21, %c0_22, %c0_23], %21 {strides = array<i32>} : memref<1x1x128xf32, #tpu.memory_space<vmem>>, vector<1x1x128xf32>,
      %cst_24 = arith.constant 0.000000e+00 : f32
      %23 = vector.broadcast %cst_24 : f32 to vector<1x1x128xf32>
      %c0_25 = arith.constant 0 : index
      %c0_26 = arith.constant 0 : index
      %c0_27 = arith.constant 0 : index
      %24 = vector.load %arg6[%c0_25, %c0_26, %c0_27] : memref<1x1x128xf32, #tpu.memory_space<vmem>>, vector<1x1x128xf32>
      tpu.vector_store %arg6[%c0_25, %c0_26, %c0_27], %23 {strides = array<i32>} : memref<1x1x128xf32, #tpu.memory_space<vmem>>, vector<1x1x128xf32>,
    } else {
    }
    %c0_6 = arith.constant 0 : index
    %c0_7 = arith.constant 0 : index
    %c0_8 = arith.constant 0 : index
    %8 = vector.load %arg5[%c0_6, %c0_7, %c0_8] : memref<1x1x128xf32, #tpu.memory_space<vmem>>, vector<1x1x128xf32>
    %cst_9 = arith.constant dense<0.000000e+00> : vector<128xf32>
    %9 = vector.multi_reduction <add>, %2, %cst_9 [0] : vector<8x128xf32> to vector<128xf32>
    %10 = vector.shape_cast %9 : vector<128xf32> to vector<1x128xf32>
    %11 = vector.shape_cast %10 : vector<1x128xf32> to vector<1x1x128xf32>
    %12 = arith.addf %8, %11 : vector<1x1x128xf32>
    %c0_10 = arith.constant 0 : index
    %c0_11 = arith.constant 0 : index
    %c0_12 = arith.constant 0 : index
    %13 = vector.load %arg5[%c0_10, %c0_11, %c0_12] : memref<1x1x128xf32, #tpu.memory_space<vmem>>, vector<1x1x128xf32>
    tpu.vector_store %arg5[%c0_10, %c0_11, %c0_12], %12 {strides = array<i32>} : memref<1x1x128xf32, #tpu.memory_space<vmem>>, vector<1x1x128xf32>,
    %c0_13 = arith.constant 0 : index
    %c0_14 = arith.constant 0 : index
    %c0_15 = arith.constant 0 : index
    %14 = vector.load %arg6[%c0_13, %c0_14, %c0_15] : memref<1x1x128xf32, #tpu.memory_space<vmem>>, vector<1x1x128xf32>
    %15 = arith.mulf %2, %2 : vector<8x128xf32>
    %cst_16 = arith.constant dense<0.000000e+00> : vector<128xf32>
    %16 = vector.multi_reduction <add>, %15, %cst_16 [0] : vector<8x128xf32> to vector<128xf32>
    %17 = vector.shape_cast %16 : vector<128xf32> to vector<1x128xf32>
    %18 = vector.shape_cast %17 : vector<1x128xf32> to vector<1x1x128xf32>
    %19 = arith.addf %14, %18 : vector<1x1x128xf32>
    %c0_17 = arith.constant 0 : index
    %c0_18 = arith.constant 0 : index
    %c0_19 = arith.constant 0 : index
    %20 = vector.load %arg6[%c0_17, %c0_18, %c0_19] : memref<1x1x128xf32, #tpu.memory_space<vmem>>, vector<1x1x128xf32>
    tpu.vector_store %arg6[%c0_17, %c0_18, %c0_19], %19 {strides = array<i32>} : memref<1x1x128xf32, #tpu.memory_space<vmem>>, vector<1x1x128xf32>,
    return
  }
  func.func @transform_0(%arg0: i32, %arg1: i32) -> (i32, i32) {
    %c2_i32 = arith.constant 2 : i32
    %0 = arith.muli %arg0, %c2_i32 : i32
    %1 = arith.addi %0, %arg1 : i32
    %c0_i32 = arith.constant 0 : i32
    %c0_i32_0 = arith.constant 0 : i32
    return %1, %c0_i32 : i32, i32
  }
  func.func @transform_1(%arg0: i32, %arg1: i32) -> (i32, i32) {
    %c0_i32 = arith.constant 0 : i32
    %c0_i32_0 = arith.constant 0 : i32
    %c0_i32_1 = arith.constant 0 : i32
    return %c0_i32, %c0_i32_0 : i32, i32
  }
  func.func @transform_2(%arg0: i32, %arg1: i32) -> (i32, i32) {
    %c2_i32 = arith.constant 2 : i32
    %0 = arith.muli %arg0, %c2_i32 : i32
    %1 = arith.addi %0, %arg1 : i32
    %c0_i32 = arith.constant 0 : i32
    %c0_i32_0 = arith.constant 0 : i32
    return %1, %c0_i32 : i32, i32
  }
  func.func @transform_3(%arg0: i32, %arg1: i32) -> (i32, i32, i32) {
    %c0_i32 = arith.constant 0 : i32
    %c0_i32_0 = arith.constant 0 : i32
    %c0_i32_1 = arith.constant 0 : i32
    return %arg0, %c0_i32, %c0_i32_0 : i32, i32, i32
  }
  func.func @transform_4(%arg0: i32, %arg1: i32) -> (i32, i32, i32) {
    %c0_i32 = arith.constant 0 : i32
    %c0_i32_0 = arith.constant 0 : i32
    %c0_i32_1 = arith.constant 0 : i32
    return %arg0, %c0_i32, %c0_i32_0 : i32, i32, i32
  }
}

module attributes {stable_mosaic.version = 11 : i64} {
  func.func @_bn_relu_kernel(%arg0: i32, %arg1: memref<8x128xbf16, #tpu.memory_space<vmem>>, %arg2: memref<1x128xf32, #tpu.memory_space<vmem>>, %arg3: memref<1x128xf32, #tpu.memory_space<vmem>>, %arg4: memref<8x128xbf16, #tpu.memory_space<vmem>>) attributes {dimension_semantics = [#tpu.dimension_semantics<parallel>], iteration_bounds = array<i64: 4>, scalar_prefetch = 0 : i64, scratch_operands = 0 : i64, tpu.core_type = #tpu.core_type<tc>, window_params = [{transform_indices = @transform_0, window_bounds = array<i64: 8, 128>}, {pipeline_mode = #tpu.pipeline_mode<synchronous>, transform_indices = @transform_1, window_bounds = array<i64: 1, 128>}, {pipeline_mode = #tpu.pipeline_mode<synchronous>, transform_indices = @transform_2, window_bounds = array<i64: 1, 128>}, {transform_indices = @transform_3, window_bounds = array<i64: 8, 128>}]} {
    %c0 = arith.constant 0 : index
    %c0_0 = arith.constant 0 : index
    %0 = vector.load %arg1[%c0, %c0_0] : memref<8x128xbf16, #tpu.memory_space<vmem>>, vector<8x128xbf16>
    %1 = arith.extf %0 : vector<8x128xbf16> to vector<8x128xf32>
    %c0_1 = arith.constant 0 : index
    %c0_2 = arith.constant 0 : index
    %2 = vector.load %arg2[%c0_1, %c0_2] : memref<1x128xf32, #tpu.memory_space<vmem>>, vector<1x128xf32>
    %3 = vector.broadcast %2 : vector<1x128xf32> to vector<8x128xf32>
    %4 = arith.mulf %1, %3 : vector<8x128xf32>
    %c0_3 = arith.constant 0 : index
    %c0_4 = arith.constant 0 : index
    %5 = vector.load %arg3[%c0_3, %c0_4] : memref<1x128xf32, #tpu.memory_space<vmem>>, vector<1x128xf32>
    %6 = vector.broadcast %5 : vector<1x128xf32> to vector<8x128xf32>
    %7 = arith.addf %4, %6 : vector<8x128xf32>
    %cst = arith.constant 0.000000e+00 : f32
    %8 = vector.broadcast %cst : f32 to vector<8x128xf32>
    %9 = arith.maximumf %7, %8 : vector<8x128xf32>
    %10 = arith.truncf %9 : vector<8x128xf32> to vector<8x128xbf16>
    %c0_5 = arith.constant 0 : index
    %c0_6 = arith.constant 0 : index
    %11 = vector.load %arg4[%c0_5, %c0_6] : memref<8x128xbf16, #tpu.memory_space<vmem>>, vector<8x128xbf16>
    tpu.vector_store %arg4[%c0_5, %c0_6], %10 {strides = array<i32>} : memref<8x128xbf16, #tpu.memory_space<vmem>>, vector<8x128xbf16>,
    return
  }
  func.func @transform_0(%arg0: i32) -> (i32, i32) {
    %c0_i32 = arith.constant 0 : i32
    %c0_i32_0 = arith.constant 0 : i32
    return %arg0, %c0_i32 : i32, i32
  }
  func.func @transform_1(%arg0: i32) -> (i32, i32) {
    %c0_i32 = arith.constant 0 : i32
    %c0_i32_0 = arith.constant 0 : i32
    %c0_i32_1 = arith.constant 0 : i32
    return %c0_i32, %c0_i32_0 : i32, i32
  }
  func.func @transform_2(%arg0: i32) -> (i32, i32) {
    %c0_i32 = arith.constant 0 : i32
    %c0_i32_0 = arith.constant 0 : i32
    %c0_i32_1 = arith.constant 0 : i32
    return %c0_i32, %c0_i32_0 : i32, i32
  }
  func.func @transform_3(%arg0: i32) -> (i32, i32) {
    %c0_i32 = arith.constant 0 : i32
    %c0_i32_0 = arith.constant 0 : i32
    return %arg0, %c0_i32 : i32, i32
  }
}

module attributes {stable_mosaic.version = 11 : i64} {
  func.func @_mm_stats_kernel(%arg0: i32, %arg1: i32, %arg2: memref<16x288xbf16, #tpu.memory_space<vmem>>, %arg3: memref<288x128xbf16, #tpu.memory_space<vmem>>, %arg4: memref<16x128xbf16, #tpu.memory_space<vmem>>, %arg5: memref<1x1x128xf32, #tpu.memory_space<vmem>>, %arg6: memref<1x1x128xf32, #tpu.memory_space<vmem>>) attributes {dimension_semantics = [#tpu.dimension_semantics<parallel>, #tpu.dimension_semantics<arbitrary>], iteration_bounds = array<i64: 2, 4>, scalar_prefetch = 0 : i64, scratch_operands = 0 : i64, tpu.core_type = #tpu.core_type<tc>, window_params = [{transform_indices = @transform_0, window_bounds = array<i64: 16, 288>}, {pipeline_mode = #tpu.pipeline_mode<synchronous>, transform_indices = @transform_1, window_bounds = array<i64: 288, 128>}, {transform_indices = @transform_2, window_bounds = array<i64: 16, 128>}, {transform_indices = @transform_3, window_bounds = array<i64: 1, 1, 128>}, {transform_indices = @transform_4, window_bounds = array<i64: 1, 1, 128>}]} {
    %c0 = arith.constant 0 : index
    %c0_0 = arith.constant 0 : index
    %0 = vector.load %arg2[%c0, %c0_0] : memref<16x288xbf16, #tpu.memory_space<vmem>>, vector<16x288xbf16>
    %c0_1 = arith.constant 0 : index
    %c0_2 = arith.constant 0 : index
    %1 = vector.load %arg3[%c0_1, %c0_2] : memref<288x128xbf16, #tpu.memory_space<vmem>>, vector<288x128xbf16>
    %cst = arith.constant dense<0.000000e+00> : vector<16x128xf32>
    %2 = tpu.matmul %0, %1, %cst {dimension_numbers = #tpu.dot_dimension_numbers<[1], [0], [0], [1], [0, 0, 1, 1], [], []>} : vector<16x288xbf16>, vector<288x128xbf16>, vector<16x128xf32> -> vector<16x128xf32>
    %3 = arith.truncf %2 : vector<16x128xf32> to vector<16x128xbf16>
    %c0_3 = arith.constant 0 : index
    %c0_4 = arith.constant 0 : index
    %4 = vector.load %arg4[%c0_3, %c0_4] : memref<16x128xbf16, #tpu.memory_space<vmem>>, vector<16x128xbf16>
    tpu.vector_store %arg4[%c0_3, %c0_4], %3 {strides = array<i32>} : memref<16x128xbf16, #tpu.memory_space<vmem>>, vector<16x128xbf16>,
    %c0_i32 = arith.constant 0 : i32
    %5 = arith.cmpi eq, %arg1, %c0_i32 : i32
    %6 = arith.extui %5 : i1 to i32
    %c0_i32_5 = arith.constant 0 : i32
    %7 = arith.cmpi ne, %6, %c0_i32_5 : i32
    scf.if %7 {
      %cst_20 = arith.constant 0.000000e+00 : f32
      %21 = vector.broadcast %cst_20 : f32 to vector<1x1x128xf32>
      %c0_21 = arith.constant 0 : index
      %c0_22 = arith.constant 0 : index
      %c0_23 = arith.constant 0 : index
      %22 = vector.load %arg5[%c0_21, %c0_22, %c0_23] : memref<1x1x128xf32, #tpu.memory_space<vmem>>, vector<1x1x128xf32>
      tpu.vector_store %arg5[%c0_21, %c0_22, %c0_23], %21 {strides = array<i32>} : memref<1x1x128xf32, #tpu.memory_space<vmem>>, vector<1x1x128xf32>,
      %cst_24 = arith.constant 0.000000e+00 : f32
      %23 = vector.broadcast %cst_24 : f32 to vector<1x1x128xf32>
      %c0_25 = arith.constant 0 : index
      %c0_26 = arith.constant 0 : index
      %c0_27 = arith.constant 0 : index
      %24 = vector.load %arg6[%c0_25, %c0_26, %c0_27] : memref<1x1x128xf32, #tpu.memory_space<vmem>>, vector<1x1x128xf32>
      tpu.vector_store %arg6[%c0_25, %c0_26, %c0_27], %23 {strides = array<i32>} : memref<1x1x128xf32, #tpu.memory_space<vmem>>, vector<1x1x128xf32>,
    } else {
    }
    %c0_6 = arith.constant 0 : index
    %c0_7 = arith.constant 0 : index
    %c0_8 = arith.constant 0 : index
    %8 = vector.load %arg5[%c0_6, %c0_7, %c0_8] : memref<1x1x128xf32, #tpu.memory_space<vmem>>, vector<1x1x128xf32>
    %cst_9 = arith.constant dense<0.000000e+00> : vector<128xf32>
    %9 = vector.multi_reduction <add>, %2, %cst_9 [0] : vector<16x128xf32> to vector<128xf32>
    %10 = vector.shape_cast %9 : vector<128xf32> to vector<1x128xf32>
    %11 = vector.shape_cast %10 : vector<1x128xf32> to vector<1x1x128xf32>
    %12 = arith.addf %8, %11 : vector<1x1x128xf32>
    %c0_10 = arith.constant 0 : index
    %c0_11 = arith.constant 0 : index
    %c0_12 = arith.constant 0 : index
    %13 = vector.load %arg5[%c0_10, %c0_11, %c0_12] : memref<1x1x128xf32, #tpu.memory_space<vmem>>, vector<1x1x128xf32>
    tpu.vector_store %arg5[%c0_10, %c0_11, %c0_12], %12 {strides = array<i32>} : memref<1x1x128xf32, #tpu.memory_space<vmem>>, vector<1x1x128xf32>,
    %c0_13 = arith.constant 0 : index
    %c0_14 = arith.constant 0 : index
    %c0_15 = arith.constant 0 : index
    %14 = vector.load %arg6[%c0_13, %c0_14, %c0_15] : memref<1x1x128xf32, #tpu.memory_space<vmem>>, vector<1x1x128xf32>
    %15 = arith.mulf %2, %2 : vector<16x128xf32>
    %cst_16 = arith.constant dense<0.000000e+00> : vector<128xf32>
    %16 = vector.multi_reduction <add>, %15, %cst_16 [0] : vector<16x128xf32> to vector<128xf32>
    %17 = vector.shape_cast %16 : vector<128xf32> to vector<1x128xf32>
    %18 = vector.shape_cast %17 : vector<1x128xf32> to vector<1x1x128xf32>
    %19 = arith.addf %14, %18 : vector<1x1x128xf32>
    %c0_17 = arith.constant 0 : index
    %c0_18 = arith.constant 0 : index
    %c0_19 = arith.constant 0 : index
    %20 = vector.load %arg6[%c0_17, %c0_18, %c0_19] : memref<1x1x128xf32, #tpu.memory_space<vmem>>, vector<1x1x128xf32>
    tpu.vector_store %arg6[%c0_17, %c0_18, %c0_19], %19 {strides = array<i32>} : memref<1x1x128xf32, #tpu.memory_space<vmem>>, vector<1x1x128xf32>,
    return
  }
  func.func @transform_0(%arg0: i32, %arg1: i32) -> (i32, i32) {
    %c4_i32 = arith.constant 4 : i32
    %0 = arith.muli %arg0, %c4_i32 : i32
    %1 = arith.addi %0, %arg1 : i32
    %c0_i32 = arith.constant 0 : i32
    %c0_i32_0 = arith.constant 0 : i32
    return %1, %c0_i32 : i32, i32
  }
  func.func @transform_1(%arg0: i32, %arg1: i32) -> (i32, i32) {
    %c0_i32 = arith.constant 0 : i32
    %c0_i32_0 = arith.constant 0 : i32
    %c0_i32_1 = arith.constant 0 : i32
    return %c0_i32, %c0_i32_0 : i32, i32
  }
  func.func @transform_2(%arg0: i32, %arg1: i32) -> (i32, i32) {
    %c4_i32 = arith.constant 4 : i32
    %0 = arith.muli %arg0, %c4_i32 : i32
    %1 = arith.addi %0, %arg1 : i32
    %c0_i32 = arith.constant 0 : i32
    %c0_i32_0 = arith.constant 0 : i32
    return %1, %c0_i32 : i32, i32
  }
  func.func @transform_3(%arg0: i32, %arg1: i32) -> (i32, i32, i32) {
    %c0_i32 = arith.constant 0 : i32
    %c0_i32_0 = arith.constant 0 : i32
    %c0_i32_1 = arith.constant 0 : i32
    return %arg0, %c0_i32, %c0_i32_0 : i32, i32, i32
  }
  func.func @transform_4(%arg0: i32, %arg1: i32) -> (i32, i32, i32) {
    %c0_i32 = arith.constant 0 : i32
    %c0_i32_0 = arith.constant 0 : i32
    %c0_i32_1 = arith.constant 0 : i32
    return %arg0, %c0_i32, %c0_i32_0 : i32, i32, i32
  }
}

module attributes {stable_mosaic.version = 11 : i64} {
  func.func @_bn_relu_kernel(%arg0: i32, %arg1: memref<16x128xbf16, #tpu.memory_space<vmem>>, %arg2: memref<1x128xf32, #tpu.memory_space<vmem>>, %arg3: memref<1x128xf32, #tpu.memory_space<vmem>>, %arg4: memref<16x128xbf16, #tpu.memory_space<vmem>>) attributes {dimension_semantics = [#tpu.dimension_semantics<parallel>], iteration_bounds = array<i64: 8>, scalar_prefetch = 0 : i64, scratch_operands = 0 : i64, tpu.core_type = #tpu.core_type<tc>, window_params = [{transform_indices = @transform_0, window_bounds = array<i64: 16, 128>}, {pipeline_mode = #tpu.pipeline_mode<synchronous>, transform_indices = @transform_1, window_bounds = array<i64: 1, 128>}, {pipeline_mode = #tpu.pipeline_mode<synchronous>, transform_indices = @transform_2, window_bounds = array<i64: 1, 128>}, {transform_indices = @transform_3, window_bounds = array<i64: 16, 128>}]} {
    %c0 = arith.constant 0 : index
    %c0_0 = arith.constant 0 : index
    %0 = vector.load %arg1[%c0, %c0_0] : memref<16x128xbf16, #tpu.memory_space<vmem>>, vector<16x128xbf16>
    %1 = arith.extf %0 : vector<16x128xbf16> to vector<16x128xf32>
    %c0_1 = arith.constant 0 : index
    %c0_2 = arith.constant 0 : index
    %2 = vector.load %arg2[%c0_1, %c0_2] : memref<1x128xf32, #tpu.memory_space<vmem>>, vector<1x128xf32>
    %3 = vector.broadcast %2 : vector<1x128xf32> to vector<16x128xf32>
    %4 = arith.mulf %1, %3 : vector<16x128xf32>
    %c0_3 = arith.constant 0 : index
    %c0_4 = arith.constant 0 : index
    %5 = vector.load %arg3[%c0_3, %c0_4] : memref<1x128xf32, #tpu.memory_space<vmem>>, vector<1x128xf32>
    %6 = vector.broadcast %5 : vector<1x128xf32> to vector<16x128xf32>
    %7 = arith.addf %4, %6 : vector<16x128xf32>
    %cst = arith.constant 0.000000e+00 : f32
    %8 = vector.broadcast %cst : f32 to vector<16x128xf32>
    %9 = arith.maximumf %7, %8 : vector<16x128xf32>
    %10 = arith.truncf %9 : vector<16x128xf32> to vector<16x128xbf16>
    %c0_5 = arith.constant 0 : index
    %c0_6 = arith.constant 0 : index
    %11 = vector.load %arg4[%c0_5, %c0_6] : memref<16x128xbf16, #tpu.memory_space<vmem>>, vector<16x128xbf16>
    tpu.vector_store %arg4[%c0_5, %c0_6], %10 {strides = array<i32>} : memref<16x128xbf16, #tpu.memory_space<vmem>>, vector<16x128xbf16>,
    return
  }
  func.func @transform_0(%arg0: i32) -> (i32, i32) {
    %c0_i32 = arith.constant 0 : i32
    %c0_i32_0 = arith.constant 0 : i32
    return %arg0, %c0_i32 : i32, i32
  }
  func.func @transform_1(%arg0: i32) -> (i32, i32) {
    %c0_i32 = arith.constant 0 : i32
    %c0_i32_0 = arith.constant 0 : i32
    %c0_i32_1 = arith.constant 0 : i32
    return %c0_i32, %c0_i32_0 : i32, i32
  }
  func.func @transform_2(%arg0: i32) -> (i32, i32) {
    %c0_i32 = arith.constant 0 : i32
    %c0_i32_0 = arith.constant 0 : i32
    %c0_i32_1 = arith.constant 0 : i32
    return %c0_i32, %c0_i32_0 : i32, i32
  }
  func.func @transform_3(%arg0: i32) -> (i32, i32) {
    %c0_i32 = arith.constant 0 : i32
    %c0_i32_0 = arith.constant 0 : i32
    return %arg0, %c0_i32 : i32, i32
  }
}

module attributes {stable_mosaic.version = 11 : i64} {
  func.func @_mm_stats_kernel(%arg0: i32, %arg1: i32, %arg2: memref<64x144xbf16, #tpu.memory_space<vmem>>, %arg3: memref<144x128xbf16, #tpu.memory_space<vmem>>, %arg4: memref<64x128xbf16, #tpu.memory_space<vmem>>, %arg5: memref<1x1x128xf32, #tpu.memory_space<vmem>>, %arg6: memref<1x1x128xf32, #tpu.memory_space<vmem>>) attributes {dimension_semantics = [#tpu.dimension_semantics<parallel>, #tpu.dimension_semantics<arbitrary>], iteration_bounds = array<i64: 2, 4>, scalar_prefetch = 0 : i64, scratch_operands = 0 : i64, tpu.core_type = #tpu.core_type<tc>, window_params = [{transform_indices = @transform_0, window_bounds = array<i64: 64, 144>}, {pipeline_mode = #tpu.pipeline_mode<synchronous>, transform_indices = @transform_1, window_bounds = array<i64: 144, 128>}, {transform_indices = @transform_2, window_bounds = array<i64: 64, 128>}, {transform_indices = @transform_3, window_bounds = array<i64: 1, 1, 128>}, {transform_indices = @transform_4, window_bounds = array<i64: 1, 1, 128>}]} {
    %c0 = arith.constant 0 : index
    %c0_0 = arith.constant 0 : index
    %0 = vector.load %arg2[%c0, %c0_0] : memref<64x144xbf16, #tpu.memory_space<vmem>>, vector<64x144xbf16>
    %c0_1 = arith.constant 0 : index
    %c0_2 = arith.constant 0 : index
    %1 = vector.load %arg3[%c0_1, %c0_2] : memref<144x128xbf16, #tpu.memory_space<vmem>>, vector<144x128xbf16>
    %cst = arith.constant dense<0.000000e+00> : vector<64x128xf32>
    %2 = tpu.matmul %0, %1, %cst {dimension_numbers = #tpu.dot_dimension_numbers<[1], [0], [0], [1], [0, 0, 1, 1], [], []>} : vector<64x144xbf16>, vector<144x128xbf16>, vector<64x128xf32> -> vector<64x128xf32>
    %3 = arith.truncf %2 : vector<64x128xf32> to vector<64x128xbf16>
    %c0_3 = arith.constant 0 : index
    %c0_4 = arith.constant 0 : index
    %4 = vector.load %arg4[%c0_3, %c0_4] : memref<64x128xbf16, #tpu.memory_space<vmem>>, vector<64x128xbf16>
    tpu.vector_store %arg4[%c0_3, %c0_4], %3 {strides = array<i32>} : memref<64x128xbf16, #tpu.memory_space<vmem>>, vector<64x128xbf16>,
    %c0_i32 = arith.constant 0 : i32
    %5 = arith.cmpi eq, %arg1, %c0_i32 : i32
    %6 = arith.extui %5 : i1 to i32
    %c0_i32_5 = arith.constant 0 : i32
    %7 = arith.cmpi ne, %6, %c0_i32_5 : i32
    scf.if %7 {
      %cst_20 = arith.constant 0.000000e+00 : f32
      %21 = vector.broadcast %cst_20 : f32 to vector<1x1x128xf32>
      %c0_21 = arith.constant 0 : index
      %c0_22 = arith.constant 0 : index
      %c0_23 = arith.constant 0 : index
      %22 = vector.load %arg5[%c0_21, %c0_22, %c0_23] : memref<1x1x128xf32, #tpu.memory_space<vmem>>, vector<1x1x128xf32>
      tpu.vector_store %arg5[%c0_21, %c0_22, %c0_23], %21 {strides = array<i32>} : memref<1x1x128xf32, #tpu.memory_space<vmem>>, vector<1x1x128xf32>,
      %cst_24 = arith.constant 0.000000e+00 : f32
      %23 = vector.broadcast %cst_24 : f32 to vector<1x1x128xf32>
      %c0_25 = arith.constant 0 : index
      %c0_26 = arith.constant 0 : index
      %c0_27 = arith.constant 0 : index
      %24 = vector.load %arg6[%c0_25, %c0_26, %c0_27] : memref<1x1x128xf32, #tpu.memory_space<vmem>>, vector<1x1x128xf32>
      tpu.vector_store %arg6[%c0_25, %c0_26, %c0_27], %23 {strides = array<i32>} : memref<1x1x128xf32, #tpu.memory_space<vmem>>, vector<1x1x128xf32>,
    } else {
    }
    %c0_6 = arith.constant 0 : index
    %c0_7 = arith.constant 0 : index
    %c0_8 = arith.constant 0 : index
    %8 = vector.load %arg5[%c0_6, %c0_7, %c0_8] : memref<1x1x128xf32, #tpu.memory_space<vmem>>, vector<1x1x128xf32>
    %cst_9 = arith.constant dense<0.000000e+00> : vector<128xf32>
    %9 = vector.multi_reduction <add>, %2, %cst_9 [0] : vector<64x128xf32> to vector<128xf32>
    %10 = vector.shape_cast %9 : vector<128xf32> to vector<1x128xf32>
    %11 = vector.shape_cast %10 : vector<1x128xf32> to vector<1x1x128xf32>
    %12 = arith.addf %8, %11 : vector<1x1x128xf32>
    %c0_10 = arith.constant 0 : index
    %c0_11 = arith.constant 0 : index
    %c0_12 = arith.constant 0 : index
    %13 = vector.load %arg5[%c0_10, %c0_11, %c0_12] : memref<1x1x128xf32, #tpu.memory_space<vmem>>, vector<1x1x128xf32>
    tpu.vector_store %arg5[%c0_10, %c0_11, %c0_12], %12 {strides = array<i32>} : memref<1x1x128xf32, #tpu.memory_space<vmem>>, vector<1x1x128xf32>,
    %c0_13 = arith.constant 0 : index
    %c0_14 = arith.constant 0 : index
    %c0_15 = arith.constant 0 : index
    %14 = vector.load %arg6[%c0_13, %c0_14, %c0_15] : memref<1x1x128xf32, #tpu.memory_space<vmem>>, vector<1x1x128xf32>
    %15 = arith.mulf %2, %2 : vector<64x128xf32>
    %cst_16 = arith.constant dense<0.000000e+00> : vector<128xf32>
    %16 = vector.multi_reduction <add>, %15, %cst_16 [0] : vector<64x128xf32> to vector<128xf32>
    %17 = vector.shape_cast %16 : vector<128xf32> to vector<1x128xf32>
    %18 = vector.shape_cast %17 : vector<1x128xf32> to vector<1x1x128xf32>
    %19 = arith.addf %14, %18 : vector<1x1x128xf32>
    %c0_17 = arith.constant 0 : index
    %c0_18 = arith.constant 0 : index
    %c0_19 = arith.constant 0 : index
    %20 = vector.load %arg6[%c0_17, %c0_18, %c0_19] : memref<1x1x128xf32, #tpu.memory_space<vmem>>, vector<1x1x128xf32>
    tpu.vector_store %arg6[%c0_17, %c0_18, %c0_19], %19 {strides = array<i32>} : memref<1x1x128xf32, #tpu.memory_space<vmem>>, vector<1x1x128xf32>,
    return
  }
  func.func @transform_0(%arg0: i32, %arg1: i32) -> (i32, i32) {
    %c4_i32 = arith.constant 4 : i32
    %0 = arith.muli %arg0, %c4_i32 : i32
    %1 = arith.addi %0, %arg1 : i32
    %c0_i32 = arith.constant 0 : i32
    %c0_i32_0 = arith.constant 0 : i32
    return %1, %c0_i32 : i32, i32
  }
  func.func @transform_1(%arg0: i32, %arg1: i32) -> (i32, i32) {
    %c0_i32 = arith.constant 0 : i32
    %c0_i32_0 = arith.constant 0 : i32
    %c0_i32_1 = arith.constant 0 : i32
    return %c0_i32, %c0_i32_0 : i32, i32
  }
  func.func @transform_2(%arg0: i32, %arg1: i32) -> (i32, i32) {
    %c4_i32 = arith.constant 4 : i32
    %0 = arith.muli %arg0, %c4_i32 : i32
    %1 = arith.addi %0, %arg1 : i32
    %c0_i32 = arith.constant 0 : i32
    %c0_i32_0 = arith.constant 0 : i32
    return %1, %c0_i32 : i32, i32
  }
  func.func @transform_3(%arg0: i32, %arg1: i32) -> (i32, i32, i32) {
    %c0_i32 = arith.constant 0 : i32
    %c0_i32_0 = arith.constant 0 : i32
    %c0_i32_1 = arith.constant 0 : i32
    return %arg0, %c0_i32, %c0_i32_0 : i32, i32, i32
  }
  func.func @transform_4(%arg0: i32, %arg1: i32) -> (i32, i32, i32) {
    %c0_i32 = arith.constant 0 : i32
    %c0_i32_0 = arith.constant 0 : i32
    %c0_i32_1 = arith.constant 0 : i32
    return %arg0, %c0_i32, %c0_i32_0 : i32, i32, i32
  }
}

module attributes {stable_mosaic.version = 11 : i64} {
  func.func @_bn_relu_kernel(%arg0: i32, %arg1: memref<64x128xbf16, #tpu.memory_space<vmem>>, %arg2: memref<1x128xf32, #tpu.memory_space<vmem>>, %arg3: memref<1x128xf32, #tpu.memory_space<vmem>>, %arg4: memref<64x128xbf16, #tpu.memory_space<vmem>>) attributes {dimension_semantics = [#tpu.dimension_semantics<parallel>], iteration_bounds = array<i64: 8>, scalar_prefetch = 0 : i64, scratch_operands = 0 : i64, tpu.core_type = #tpu.core_type<tc>, window_params = [{transform_indices = @transform_0, window_bounds = array<i64: 64, 128>}, {pipeline_mode = #tpu.pipeline_mode<synchronous>, transform_indices = @transform_1, window_bounds = array<i64: 1, 128>}, {pipeline_mode = #tpu.pipeline_mode<synchronous>, transform_indices = @transform_2, window_bounds = array<i64: 1, 128>}, {transform_indices = @transform_3, window_bounds = array<i64: 64, 128>}]} {
    %c0 = arith.constant 0 : index
    %c0_0 = arith.constant 0 : index
    %0 = vector.load %arg1[%c0, %c0_0] : memref<64x128xbf16, #tpu.memory_space<vmem>>, vector<64x128xbf16>
    %1 = arith.extf %0 : vector<64x128xbf16> to vector<64x128xf32>
    %c0_1 = arith.constant 0 : index
    %c0_2 = arith.constant 0 : index
    %2 = vector.load %arg2[%c0_1, %c0_2] : memref<1x128xf32, #tpu.memory_space<vmem>>, vector<1x128xf32>
    %3 = vector.broadcast %2 : vector<1x128xf32> to vector<64x128xf32>
    %4 = arith.mulf %1, %3 : vector<64x128xf32>
    %c0_3 = arith.constant 0 : index
    %c0_4 = arith.constant 0 : index
    %5 = vector.load %arg3[%c0_3, %c0_4] : memref<1x128xf32, #tpu.memory_space<vmem>>, vector<1x128xf32>
    %6 = vector.broadcast %5 : vector<1x128xf32> to vector<64x128xf32>
    %7 = arith.addf %4, %6 : vector<64x128xf32>
    %cst = arith.constant 0.000000e+00 : f32
    %8 = vector.broadcast %cst : f32 to vector<64x128xf32>
    %9 = arith.maximumf %7, %8 : vector<64x128xf32>
    %10 = arith.truncf %9 : vector<64x128xf32> to vector<64x128xbf16>
    %c0_5 = arith.constant 0 : index
    %c0_6 = arith.constant 0 : index
    %11 = vector.load %arg4[%c0_5, %c0_6] : memref<64x128xbf16, #tpu.memory_space<vmem>>, vector<64x128xbf16>
    tpu.vector_store %arg4[%c0_5, %c0_6], %10 {strides = array<i32>} : memref<64x128xbf16, #tpu.memory_space<vmem>>, vector<64x128xbf16>,
    return
  }
  func.func @transform_0(%arg0: i32) -> (i32, i32) {
    %c0_i32 = arith.constant 0 : i32
    %c0_i32_0 = arith.constant 0 : i32
    return %arg0, %c0_i32 : i32, i32
  }
  func.func @transform_1(%arg0: i32) -> (i32, i32) {
    %c0_i32 = arith.constant 0 : i32
    %c0_i32_0 = arith.constant 0 : i32
    %c0_i32_1 = arith.constant 0 : i32
    return %c0_i32, %c0_i32_0 : i32, i32
  }
  func.func @transform_2(%arg0: i32) -> (i32, i32) {
    %c0_i32 = arith.constant 0 : i32
    %c0_i32_0 = arith.constant 0 : i32
    %c0_i32_1 = arith.constant 0 : i32
    return %c0_i32, %c0_i32_0 : i32, i32
  }
  func.func @transform_3(%arg0: i32) -> (i32, i32) {
    %c0_i32 = arith.constant 0 : i32
    %c0_i32_0 = arith.constant 0 : i32
    return %arg0, %c0_i32 : i32, i32
  }
}

module attributes {stable_mosaic.version = 11 : i64} {
  func.func @_mm_bias_tanh_kernel(%arg0: i32, %arg1: memref<256x72xbf16, #tpu.memory_space<vmem>>, %arg2: memref<72x128xbf16, #tpu.memory_space<vmem>>, %arg3: memref<1x128xf32, #tpu.memory_space<vmem>>, %arg4: memref<256x128xbf16, #tpu.memory_space<vmem>>) attributes {dimension_semantics = [#tpu.dimension_semantics<parallel>], iteration_bounds = array<i64: 8>, scalar_prefetch = 0 : i64, scratch_operands = 0 : i64, tpu.core_type = #tpu.core_type<tc>, window_params = [{transform_indices = @transform_0, window_bounds = array<i64: 256, 72>}, {pipeline_mode = #tpu.pipeline_mode<synchronous>, transform_indices = @transform_1, window_bounds = array<i64: 72, 128>}, {pipeline_mode = #tpu.pipeline_mode<synchronous>, transform_indices = @transform_2, window_bounds = array<i64: 1, 128>}, {transform_indices = @transform_3, window_bounds = array<i64: 256, 128>}]} {
    %c0 = arith.constant 0 : index
    %c0_0 = arith.constant 0 : index
    %0 = vector.load %arg1[%c0, %c0_0] : memref<256x72xbf16, #tpu.memory_space<vmem>>, vector<256x72xbf16>
    %c0_1 = arith.constant 0 : index
    %c0_2 = arith.constant 0 : index
    %1 = vector.load %arg2[%c0_1, %c0_2] : memref<72x128xbf16, #tpu.memory_space<vmem>>, vector<72x128xbf16>
    %cst = arith.constant dense<0.000000e+00> : vector<256x128xf32>
    %2 = tpu.matmul %0, %1, %cst {dimension_numbers = #tpu.dot_dimension_numbers<[1], [0], [0], [1], [0, 0, 1, 1], [], []>} : vector<256x72xbf16>, vector<72x128xbf16>, vector<256x128xf32> -> vector<256x128xf32>
    %c0_3 = arith.constant 0 : index
    %c0_4 = arith.constant 0 : index
    %3 = vector.load %arg3[%c0_3, %c0_4] : memref<1x128xf32, #tpu.memory_space<vmem>>, vector<1x128xf32>
    %4 = vector.broadcast %3 : vector<1x128xf32> to vector<256x128xf32>
    %5 = arith.addf %2, %4 : vector<256x128xf32>
    %6 = math.tanh %5 : vector<256x128xf32>
    %7 = arith.truncf %6 : vector<256x128xf32> to vector<256x128xbf16>
    %c0_5 = arith.constant 0 : index
    %c0_6 = arith.constant 0 : index
    %8 = vector.load %arg4[%c0_5, %c0_6] : memref<256x128xbf16, #tpu.memory_space<vmem>>, vector<256x128xbf16>
    tpu.vector_store %arg4[%c0_5, %c0_6], %7 {strides = array<i32>} : memref<256x128xbf16, #tpu.memory_space<vmem>>, vector<256x128xbf16>,
    return
  }
  func.func @transform_0(%arg0: i32) -> (i32, i32) {
    %c0_i32 = arith.constant 0 : i32
    %c0_i32_0 = arith.constant 0 : i32
    return %arg0, %c0_i32 : i32, i32
  }
  func.func @transform_1(%arg0: i32) -> (i32, i32) {
    %c0_i32 = arith.constant 0 : i32
    %c0_i32_0 = arith.constant 0 : i32
    %c0_i32_1 = arith.constant 0 : i32
    return %c0_i32, %c0_i32_0 : i32, i32
  }
  func.func @transform_2(%arg0: i32) -> (i32, i32) {
    %c0_i32 = arith.constant 0 : i32
    %c0_i32_0 = arith.constant 0 : i32
    %c0_i32_1 = arith.constant 0 : i32
    return %c0_i32, %c0_i32_0 : i32, i32
  }
  func.func @transform_3(%arg0: i32) -> (i32, i32) {
    %c0_i32 = arith.constant 0 : i32
    %c0_i32_0 = arith.constant 0 : i32
    return %arg0, %c0_i32 : i32, i32
  }
}

</mosaic_0001>

<llo_original>
// kernel: tile.68
$region0: #{tile.68}
  #allocation2 [shape = 's32[1]{0}', space=sflag, size = 0x4, scoped, tag = 'scoped memory for tile.68']
  %s0 = inlined_call_operand.hbm [shape: f32[3], index: 0, kind: input, shape index: {}]
  %s1 = inlined_call_operand.vmem [shape: f32[4,3], index: 1, kind: output, shape index: {}]
  $region1: #{tile.68} parent=0
    #allocation0 [shape = 'u8[512]{0}', space=vmem, size = 0x400, scoped, tag = 'operand span for operand 0']
    #allocation1 [shape = 's32[1]{0}', space=sflag, size = 0x4, scoped, tag = 'scoped memory for tile.68']
    %2 = vsyncpa [#allocation1], 0
    // Predicated region
    $region2: #{tile.68} parent=1 // pred_check
      _
    $region3: #{tile.68} parent=1 // pred_check_branch
      %4 = sbr.rel (0) target = $region5
    $region4: #{tile.68} parent=1 // pred_region
      %s6 = ssub.s32 16, 16
      %7 = vsyncadd [#allocation1], %s6
      %s9 = sshll.u32 [#allocation0], 4
      %s10 = int_to_ptr.vmem [resolvable:$true] %s9
      %12 = dma.hbm_to_vmem [thread:$0]  %s0, 16, %s10, [#allocation1]
    $region5: #{tile.68} parent=1 // pred_fallthru
      _
    // Predicated region
    $region6: #{tile.68} parent=1 // pred_check
      _
    $region7: #{tile.68} parent=1 // pred_check_branch
      %14 = sbr.rel (0) target = $region9
    $region8: #{tile.68} parent=1 // pred_region
      %15 = dma.done [#allocation1], 16
    $region9: #{tile.68} parent=1 // pred_fallthru
      _
    %v16 = vld [vmem:[#allocation0] ss:$0 sm:$0xff]
    %17 = vst [vmem:[%s1] sm:$0xf] %v16
    %18 = vsyncpa [#allocation1], 1

// kernel: tile.69
$region0: #{tile.69}
  %s0 = inlined_call_operand.vmem [shape: f32[4,3], index: 0, kind: input, shape index: {}]
  %s1 = inlined_call_operand.vmem [shape: f32[12], index: 1, kind: output, shape index: {}]
  $region1: #{tile.69} parent=0
    #allocation0 [shape = 'u8[4096]{0}', space=vmem, size = 0x1000, scoped, tag = 'scoped mem for output reshape']
    #allocation1 [shape = 'u8[4096]{0}', space=vmem, size = 0x1000, scoped, tag = 'scoped mem for input reshape']
    %s3 = sshll.u32 1, 4
    %s4 = ssub.s32 %s3, 1
    %v5 = vld [vmem:[%s0] sm:%s4]
    %6 = vst [vmem:[#allocation1] sm:%s4] %v5
    %v7 = vld [vmem:[#allocation1] sm:$0x1]
    %vm8 = vcmask 23552
    %9 = vst.msk [vmem:[#allocation0] sm:$0x1] %vm8, %v7
    %s10 = scalar_lea.vmem [#allocation1], 3
    %v11 = vld [vmem:[%s10] sm:$0x1]
    %12 = vrot.lane.b32.xlu0 %v11, 9
    %v13 = vpop.permute.xlu0 %12
    %vm14 = vcmask 97352
    %15 = vst.msk [vmem:[#allocation0] sm:$0x1] %vm14, %v13
    %s16 = scalar_lea.vmem [#allocation1], 2
    %v17 = vld [vmem:[%s16] sm:$0x1]
    %18 = vrot.lane.b32.xlu0 %v17, 6
    %v19 = vpop.permute.xlu0 %18
    %vm20 = vcmask 72752
    %21 = vst.msk [vmem:[#allocation0] sm:$0x1] %vm20, %v19
    %s22 = scalar_lea.vmem [#allocation1], 1
    %v23 = vld [vmem:[%s22] sm:$0x1]
    %24 = vrot.lane.b32.xlu0 %v23, 3
    %v25 = vpop.permute.xlu0 %24
    %vm26 = vcmask 48152
    %27 = vst.msk [vmem:[#allocation0] sm:$0x1] %vm26, %v25
    %s29 = sshll.u32 1, 1
    %s30 = ssub.s32 %s29, 1
    %v32 = vld [vmem:[#allocation0] sm:%s30]
    %s33 = sshll.u32 1, 1
    %s34 = ssub.s32 %s33, 1
    %35 = vst [vmem:[%s1] sm:%s34] %v32

// kernel: generator_forward.10
$region0: #{generator_forward.10}
  #allocation0 [shape = 'u32[]', space=smem, size = 0x4, offset = 0x4, fixed_abs, tag = 'smem constant byte address 0x4 - core index']
  #allocation1 [shape = 'u32[144,128]{1,0:T(1,128)}', space=vmem, size = 0x12000, scoped, tag = 'internal scratch']
  %s0 = inlined_call_operand.vmem [shape: bf16[8,1024], index: 0, kind: input, shape index: {}]
  %s1 = inlined_call_operand.vmem [shape: f32[1,1024], index: 1, kind: input, shape index: {}]
  %s2 = inlined_call_operand.vmem [shape: f32[1,1024], index: 2, kind: input, shape index: {}]
  %s3 = inlined_call_operand.vmem [shape: bf16[8,1024], index: 3, kind: output, shape index: {}]
  %s4 = sld [smem:[#allocation0]]
  $region22: #{generator_forward.10} parent=0
    _
  %s6 = ssub.s32 1, %s4
  %s7 = scalar_select 0, %s6, %s4
  // Predicated region
  $region2: #{generator_forward.10} parent=0 // pred_check
    _
  $region3: #{generator_forward.10} parent=0 // pred_check_branch
    %9 = sbr.rel (0) target = $region5
  $region4: #{generator_forward.10} parent=0 // pred_region
    _
  $region5: #{generator_forward.10} parent=0 // pred_fallthru
    _
  // Predicated region
  $region6: #{generator_forward.10} parent=0 // pred_check
    _
  $region7: #{generator_forward.10} parent=0 // pred_check_branch
    %11 = sbr.rel (0) target = $region9
  $region8: #{generator_forward.10} parent=0 // pred_region
    _
  $region9: #{generator_forward.10} parent=0 // pred_fallthru
    _
  // Predicated region
  $region10: #{generator_forward.10} parent=0 // pred_check
    _
  $region11: #{generator_forward.10} parent=0 // pred_check_branch
    %13 = sbr.rel (0) target = $region13
  $region12: #{generator_forward.10} parent=0 // pred_region
    _
  $region13: #{generator_forward.10} parent=0 // pred_fallthru
    _
  %v14 = vld [vmem:[%s0] sm:$0xff]
  %v15 = vld [vmem:[%s0 + $0x8] sm:$0xff]
  %v16 = vld [vmem:[%s0 + $0x10] sm:$0xff]
  %v17 = vld [vmem:[%s0 + $0x18] sm:$0xff]
  %v18 = vunpack.c.l.bf16 %v14
  %v19 = vunpack.c.h.bf16 %v14
  %v20 = vunpack.c.l.bf16 %v15
  %v21 = vunpack.c.h.bf16 %v15
  %v22 = vunpack.c.l.bf16 %v16
  %v23 = vunpack.c.h.bf16 %v16
  %v24 = vunpack.c.l.bf16 %v17
  %v25 = vunpack.c.h.bf16 %v17
  %v26 = vld [vmem:[%s1] sm:$0xff]
  %v28 = vlaneseq
  %v29 = vshrl.u32 %v28, 7
  %v30 = vsub.s32 0, %v29
  %v31 = vrot.slane %v26, %v30
  %v32 = vlaneseq
  %v33 = vshrl.u32 %v32, 7
  %v34 = vsub.s32 1, %v33
  %v35 = vrot.slane %v26, %v34
  %v36 = vlaneseq
  %v37 = vshrl.u32 %v36, 7
  %v38 = vsub.s32 2, %v37
  %v39 = vrot.slane %v26, %v38
  %v40 = vlaneseq
  %v41 = vshrl.u32 %v40, 7
  %v42 = vsub.s32 3, %v41
  %v43 = vrot.slane %v26, %v42
  %v44 = vlaneseq
  %v45 = vshrl.u32 %v44, 7
  %v46 = vsub.s32 4, %v45
  %v47 = vrot.slane %v26, %v46
  %v48 = vlaneseq
  %v49 = vshrl.u32 %v48, 7
  %v50 = vsub.s32 5, %v49
  %v51 = vrot.slane %v26, %v50
  %v52 = vlaneseq
  %v53 = vshrl.u32 %v52, 7
  %v54 = vsub.s32 6, %v53
  %v55 = vrot.slane %v26, %v54
  %v56 = vlaneseq
  %v57 = vshrl.u32 %v56, 7
  %v58 = vsub.s32 7, %v57
  %v59 = vrot.slane %v26, %v58
  %v68 = vmul.f32 %v18, %v31
  %v69 = vmul.f32 %v19, %v35
  %v70 = vmul.f32 %v20, %v39
  %v71 = vmul.f32 %v21, %v43
  %v72 = vmul.f32 %v22, %v47
  %v73 = vmul.f32 %v23, %v51
  %v74 = vmul.f32 %v24, %v55
  %v75 = vmul.f32 %v25, %v59
  %v76 = vld [vmem:[%s2] sm:$0xff]
  %v78 = vlaneseq
  %v79 = vshrl.u32 %v78, 7
  %v80 = vsub.s32 0, %v79
  %v81 = vrot.slane %v76, %v80
  %v82 = vlaneseq
  %v83 = vshrl.u32 %v82, 7
  %v84 = vsub.s32 1, %v83
  %v85 = vrot.slane %v76, %v84
  %v86 = vlaneseq
  %v87 = vshrl.u32 %v86, 7
  %v88 = vsub.s32 2, %v87
  %v89 = vrot.slane %v76, %v88
  %v90 = vlaneseq
  %v91 = vshrl.u32 %v90, 7
  %v92 = vsub.s32 3, %v91
  %v93 = vrot.slane %v76, %v92
  %v94 = vlaneseq
  %v95 = vshrl.u32 %v94, 7
  %v96 = vsub.s32 4, %v95
  %v97 = vrot.slane %v76, %v96
  %v98 = vlaneseq
  %v99 = vshrl.u32 %v98, 7
  %v100 = vsub.s32 5, %v99
  %v101 = vrot.slane %v76, %v100
  %v102 = vlaneseq
  %v103 = vshrl.u32 %v102, 7
  %v104 = vsub.s32 6, %v103
  %v105 = vrot.slane %v76, %v104
  %v106 = vlaneseq
  %v107 = vshrl.u32 %v106, 7
  %v108 = vsub.s32 7, %v107
  %v109 = vrot.slane %v76, %v108
  %v118 = vadd.f32 %v68, %v81
  %v119 = vadd.f32 %v69, %v85
  %v120 = vadd.f32 %v70, %v89
  %v121 = vadd.f32 %v71, %v93
  %v122 = vadd.f32 %v72, %v97
  %v123 = vadd.f32 %v73, %v101
  %v124 = vadd.f32 %v74, %v105
  %v125 = vadd.f32 %v75, %v109
  %v126 = vmax.f32 %v118, 0.0
  %v127 = vmax.f32 %v119, 0.0
  %v128 = vmax.f32 %v120, 0.0
  %v129 = vmax.f32 %v121, 0.0
  %v130 = vmax.f32 %v122, 0.0
  %v131 = vmax.f32 %v123, 0.0
  %v132 = vmax.f32 %v124, 0.0
  %v133 = vmax.f32 %v125, 0.0
  %v134 = vpack.c.bf16 %v126, %v126
  %v135 = vpack.c.bf16 %v127, %v127
  %v136 = vpack.c.bf16 %v128, %v128
  %v137 = vpack.c.bf16 %v129, %v129
  %v138 = vpack.c.bf16 %v130, %v130
  %v139 = vpack.c.bf16 %v131, %v131
  %v140 = vpack.c.bf16 %v132, %v132
  %v141 = vpack.c.bf16 %v133, %v133
  %v150 = vunpack.c.l.b16 %v134
  %v151 = vunpack.c.l.b16 %v135
  %v152 = vunpack.c.l.b16 %v136
  %v153 = vunpack.c.l.b16 %v137
  %v154 = vunpack.c.l.b16 %v138
  %v155 = vunpack.c.l.b16 %v139
  %v156 = vunpack.c.l.b16 %v140
  %v157 = vunpack.c.l.b16 %v141
  %v158 = vpack.c.b16 %v151, %v150
  %v159 = vpack.c.b16 %v153, %v152
  %v160 = vpack.c.b16 %v155, %v154
  %v161 = vpack.c.b16 %v157, %v156
  %166 = vst [vmem:[%s3] sm:$0xff] %v158
  %167 = vst [vmem:[%s3 + $0x8] sm:$0xff] %v159
  %168 = vst [vmem:[%s3 + $0x10] sm:$0xff] %v160
  %169 = vst [vmem:[%s3 + $0x18] sm:$0xff] %v161
  // Predicated region
  $region14: #{generator_forward.10} parent=0 // pred_check
    _
  $region15: #{generator_forward.10} parent=0 // pred_check_branch
    %171 = sbr.rel (0) target = $region17
  $region16: #{generator_forward.10} parent=0 // pred_region
    _
  $region17: #{generator_forward.10} parent=0 // pred_fallthru
    _
  // Predicated region
  $region18: #{generator_forward.10} parent=0 // pred_check
    _
  $region19: #{generator_forward.10} parent=0 // pred_check_branch
    %173 = sbr.rel (0) target = $region21
  $region20: #{generator_forward.10} parent=0 // pred_region
    _
  $region21: #{generator_forward.10} parent=0 // pred_fallthru
    _

// kernel: generator_forward.9
$region0: #{generator_forward.9}
  #allocation0 [shape = 'u32[]', space=smem, size = 0x4, offset = 0x4, fixed_abs, tag = 'smem constant byte address 0x4 - core index']
  #allocation1 [shape = 'u32[144,128]{1,0:T(1,128)}', space=vmem, size = 0x12000, scoped, tag = 'internal scratch']
  %s0 = inlined_call_operand.vmem [shape: bf16[8,32], index: 0, kind: input, shape index: {}]
  %s1 = inlined_call_operand.vmem [shape: bf16[32,1024], index: 1, kind: input, shape index: {}]
  %s2 = inlined_call_operand.vmem [shape: bf16[8,1024], index: 2, kind: output, shape index: {0}]
  %s3 = inlined_call_operand.vmem [shape: f32[1,1,1024], index: 3, kind: output, shape index: {1}]
  %s4 = inlined_call_operand.vmem [shape: f32[1,1,1024], index: 4, kind: output, shape index: {2}]
  %5 = xla_tuple %s2, %s3, %s4
  %s6 = sld [smem:[#allocation0]]
  $region38: #{generator_forward.9} parent=0
    _
  %s8 = ssub.s32 1, %s6
  %s9 = scalar_select 0, %s8, %s6
  // Predicated region
  $region2: #{generator_forward.9} parent=0 // pred_check
    _
  $region3: #{generator_forward.9} parent=0 // pred_check_branch
    %11 = sbr.rel (0) target = $region5
  $region4: #{generator_forward.9} parent=0 // pred_region
    %s12 = sadd.s32 0, 0
    %p13 = scmp.lt.s32.totalorder %s12, 0
    %s14 = scalar_select %p13, %s12, 0
    %s15 = smul.addr %s14, 4
    %s16 = scalar_lea.vmem %s0, %s15
    %s17 = sadd.s32 0, 0
  $region5: #{generator_forward.9} parent=0 // pred_fallthru
    _
  // Predicated region
  $region6: #{generator_forward.9} parent=0 // pred_check
    _
  $region7: #{generator_forward.9} parent=0 // pred_check_branch
    %19 = sbr.rel (0) target = $region9
  $region8: #{generator_forward.9} parent=0 // pred_region
    _
  $region9: #{generator_forward.9} parent=0 // pred_fallthru
    _
  %s20 = sadd.s32 0, 0
  %p21 = scmp.lt.s32.totalorder %s20, 0
  %s22 = scalar_select %p21, %s20, 0
  %s23 = smul.addr %s22, 4
  %s24 = scalar_lea.vmem %s0, %s23
  %s25 = sadd.s32 0, 0
  %p26 = scmp.lt.s32.totalorder %s25, 0
  %s27 = scalar_select %p26, %s25, 0
  %s28 = smul.addr %s27, 8
  %s29 = smul.addr %s28, 4
  %s30 = scalar_lea.vmem %s2, %s29
  %s31 = sadd.s32 0, 0
  %p32 = scmp.lt.s32.totalorder %s31, 0
  %s33 = scalar_select %p32, %s31, 0
  %s34 = smul.addr %s33, 4
  %s35 = scalar_lea.vmem %s0, %s34
  %s36 = sadd.s32 0, 0
  %s37 = sadd.s32 0, 0
  %p38 = scmp.lt.s32.totalorder %s37, 0
  %s39 = scalar_select %p38, %s37, 0
  %s40 = smul.addr %s39, 8
  %s41 = smul.addr %s40, 4
  %s42 = scalar_lea.vmem %s2, %s41
  %s43 = sadd.s32 0, 0
  %v45 = vld [vmem:[%s35] sm:$0xf]
  %v46 = vld [vmem:[%s1] sm:$0xff]
  %v47 = vld [vmem:[%s1 + $0x8] sm:$0xff]
  %v48 = vld [vmem:[%s1 + $0x10] sm:$0xff]
  %v49 = vld [vmem:[%s1 + $0x18] sm:$0xff]
  %v50 = vld [vmem:[%s1 + $0x20] sm:$0xff]
  %v51 = vld [vmem:[%s1 + $0x28] sm:$0xff]
  %v52 = vld [vmem:[%s1 + $0x30] sm:$0xff]
  %v53 = vld [vmem:[%s1 + $0x38] sm:$0xff]
  %v54 = vld [vmem:[%s1 + $0x40] sm:$0xff]
  %v55 = vld [vmem:[%s1 + $0x48] sm:$0xff]
  %v56 = vld [vmem:[%s1 + $0x50] sm:$0xff]
  %v57 = vld [vmem:[%s1 + $0x58] sm:$0xff]
  %v58 = vld [vmem:[%s1 + $0x60] sm:$0xff]
  %v59 = vld [vmem:[%s1 + $0x68] sm:$0xff]
  %v60 = vld [vmem:[%s1 + $0x70] sm:$0xff]
  %v61 = vld [vmem:[%s1 + $0x78] sm:$0xff]
  %v78 = vunpack.c.l.b16 %v46
  %v79 = vunpack.c.h.b16 %v46
  %v80 = vunpack.c.l.b16 %v47
  %v81 = vunpack.c.h.b16 %v47
  %v82 = vunpack.c.l.b16 %v48
  %v83 = vunpack.c.h.b16 %v48
  %v84 = vunpack.c.l.b16 %v49
  %v85 = vunpack.c.h.b16 %v49
  %v86 = vunpack.c.l.b16 %v50
  %v87 = vunpack.c.h.b16 %v50
  %v88 = vunpack.c.l.b16 %v51
  %v89 = vunpack.c.h.b16 %v51
  %v90 = vunpack.c.l.b16 %v52
  %v91 = vunpack.c.h.b16 %v52
  %v92 = vunpack.c.l.b16 %v53
  %v93 = vunpack.c.h.b16 %v53
  %v94 = vunpack.c.l.b16 %v54
  %v95 = vunpack.c.h.b16 %v54
  %v96 = vunpack.c.l.b16 %v55
  %v97 = vunpack.c.h.b16 %v55
  %v98 = vunpack.c.l.b16 %v56
  %v99 = vunpack.c.h.b16 %v56
  %v100 = vunpack.c.l.b16 %v57
  %v101 = vunpack.c.h.b16 %v57
  %v102 = vunpack.c.l.b16 %v58
  %v103 = vunpack.c.h.b16 %v58
  %v104 = vunpack.c.l.b16 %v59
  %v105 = vunpack.c.h.b16 %v59
  %v106 = vunpack.c.l.b16 %v60
  %v107 = vunpack.c.h.b16 %v60
  %v108 = vunpack.c.l.b16 %v61
  %v109 = vunpack.c.h.b16 %v61
  %v110 = vpack.c.b16 %v86, %v78
  %v111 = vpack.c.b16 %v87, %v79
  %v112 = vpack.c.b16 %v88, %v80
  %v113 = vpack.c.b16 %v89, %v81
  %v114 = vpack.c.b16 %v90, %v82
  %v115 = vpack.c.b16 %v91, %v83
  %v116 = vpack.c.b16 %v92, %v84
  %v117 = vpack.c.b16 %v93, %v85
  %v118 = vpack.c.b16 %v102, %v94
  %v119 = vpack.c.b16 %v103, %v95
  %v120 = vpack.c.b16 %v104, %v96
  %v121 = vpack.c.b16 %v105, %v97
  %v122 = vpack.c.b16 %v106, %v98
  %v123 = vpack.c.b16 %v107, %v99
  %v124 = vpack.c.b16 %v108, %v100
  %v125 = vpack.c.b16 %v109, %v101
  %vm142 = vcmask 261120
  %v144 = vsel %vm142, %v45, 0
  %146 = vmatprep.subr.bf16.mxu0 0
  %147 = vmatpush1.bf16.msra.mxu0 0
  %148 = vmatprep.subr.bf16.mxu0 0
  %149 = vmatpush1.bf16.msra.mxu0 0
  %150 = vmatprep.subr.bf16.mxu0 0
  %151 = vmatpush1.bf16.msra.mxu0 0
  %152 = vmatprep.subr.bf16.mxu0 0
  %153 = vmatpush1.bf16.msra.mxu0 0
  %154 = vmatprep.subr.bf16.mxu0 0
  %155 = vmatpush1.bf16.msra.mxu0 0
  %156 = vmatprep.subr.bf16.mxu0 0
  %157 = vmatpush1.bf16.msra.mxu0 0
  %158 = vmatprep.subr.bf16.mxu0 %v119
  %159 = vmatpush1.bf16.msra.mxu0 %v118
  %160 = vmatprep.subr.bf16.mxu0 %v111
  %161 = vmatpush1.bf16.msra.mxu0 %v110
  %162 = vmatprep.subr.bf16.mxu0 0
  %163 = vmatpush2.bf16.msra.mxu0 0
  %164 = vmatprep.subr.bf16.mxu0 0
  %165 = vmatpush2.bf16.msra.mxu0 0
  %166 = vmatprep.subr.bf16.mxu0 0
  %167 = vmatpush2.bf16.msra.mxu0 0
  %168 = vmatprep.subr.bf16.mxu0 0
  %169 = vmatpush2.bf16.msra.mxu0 0
  %170 = vmatprep.subr.bf16.mxu0 0
  %171 = vmatpush2.bf16.msra.mxu0 0
  %172 = vmatprep.subr.bf16.mxu0 0
  %173 = vmatpush2.bf16.msra.mxu0 0
  %174 = vmatprep.subr.bf16.mxu0 0
  %175 = vmatpush2.bf16.msra.mxu0 0
  %176 = vmatprep.subr.bf16.mxu0 0
  %177 = vmatpush2.bf16.msra.mxu0 0
  %178 = vmatprep.mubr.bf16.mxu0 0
  %179 = vmatmul.mubr.bf16.gmra.mxu0 %v144
  %v180 = vpop.f32.mrf.mxu0
  %v181 = vadd.f32 0.0, %v180
  %v182 = vpop.f32.mrf.mxu0
  %v183 = vadd.f32 0.0, %v182
  %v184 = vpop.f32.mrf.mxu0
  %v185 = vpop.f32.mrf.mxu0
  %186 = vdwg.mxu0
  %187 = vmatprep.subr.bf16.mxu0 0
  %188 = vmatpush1.bf16.msra.mxu0 0
  %189 = vmatprep.subr.bf16.mxu0 0
  %190 = vmatpush1.bf16.msra.mxu0 0
  %191 = vmatprep.subr.bf16.mxu0 0
  %192 = vmatpush1.bf16.msra.mxu0 0
  %193 = vmatprep.subr.bf16.mxu0 0
  %194 = vmatpush1.bf16.msra.mxu0 0
  %195 = vmatprep.subr.bf16.mxu0 0
  %196 = vmatpush1.bf16.msra.mxu0 0
  %197 = vmatprep.subr.bf16.mxu0 0
  %198 = vmatpush1.bf16.msra.mxu0 0
  %199 = vmatprep.subr.bf16.mxu0 %v121
  %200 = vmatpush1.bf16.msra.mxu0 %v120
  %201 = vmatprep.subr.bf16.mxu0 %v113
  %202 = vmatpush1.bf16.msra.mxu0 %v112
  %203 = vmatprep.subr.bf16.mxu0 0
  %204 = vmatpush2.bf16.msra.mxu0 0
  %205 = vmatprep.subr.bf16.mxu0 0
  %206 = vmatpush2.bf16.msra.mxu0 0
  %207 = vmatprep.subr.bf16.mxu0 0
  %208 = vmatpush2.bf16.msra.mxu0 0
  %209 = vmatprep.subr.bf16.mxu0 0
  %210 = vmatpush2.bf16.msra.mxu0 0
  %211 = vmatprep.subr.bf16.mxu0 0
  %212 = vmatpush2.bf16.msra.mxu0 0
  %213 = vmatprep.subr.bf16.mxu0 0
  %214 = vmatpush2.bf16.msra.mxu0 0
  %215 = vmatprep.subr.bf16.mxu0 0
  %216 = vmatpush2.bf16.msra.mxu0 0
  %217 = vmatprep.subr.bf16.mxu0 0
  %218 = vmatpush2.bf16.msra.mxu0 0
  %219 = vmatprep.mubr.bf16.mxu0 0
  %220 = vmatmul.mubr.bf16.gmra.mxu0 %v144
  %v221 = vpop.f32.mrf.mxu0
  %v222 = vadd.f32 0.0, %v221
  %v223 = vpop.f32.mrf.mxu0
  %v224 = vadd.f32 0.0, %v223
  %v225 = vpop.f32.mrf.mxu0
  %v226 = vpop.f32.mrf.mxu0
  %227 = vdwg.mxu0
  %228 = vmatprep.subr.bf16.mxu0 0
  %229 = vmatpush1.bf16.msra.mxu0 0
  %230 = vmatprep.subr.bf16.mxu0 0
  %231 = vmatpush1.bf16.msra.mxu0 0
  %232 = vmatprep.subr.bf16.mxu0 0
  %233 = vmatpush1.bf16.msra.mxu0 0
  %234 = vmatprep.subr.bf16.mxu0 0
  %235 = vmatpush1.bf16.msra.mxu0 0
  %236 = vmatprep.subr.bf16.mxu0 0
  %237 = vmatpush1.bf16.msra.mxu0 0
  %238 = vmatprep.subr.bf16.mxu0 0
  %239 = vmatpush1.bf16.msra.mxu0 0
  %240 = vmatprep.subr.bf16.mxu0 %v123
  %241 = vmatpush1.bf16.msra.mxu0 %v122
  %242 = vmatprep.subr.bf16.mxu0 %v115
  %243 = vmatpush1.bf16.msra.mxu0 %v114
  %244 = vmatprep.subr.bf16.mxu0 0
  %245 = vmatpush2.bf16.msra.mxu0 0
  %246 = vmatprep.subr.bf16.mxu0 0
  %247 = vmatpush2.bf16.msra.mxu0 0
  %248 = vmatprep.subr.bf16.mxu0 0
  %249 = vmatpush2.bf16.msra.mxu0 0
  %250 = vmatprep.subr.bf16.mxu0 0
  %251 = vmatpush2.bf16.msra.mxu0 0
  %252 = vmatprep.subr.bf16.mxu0 0
  %253 = vmatpush2.bf16.msra.mxu0 0
  %254 = vmatprep.subr.bf16.mxu0 0
  %255 = vmatpush2.bf16.msra.mxu0 0
  %256 = vmatprep.subr.bf16.mxu0 0
  %257 = vmatpush2.bf16.msra.mxu0 0
  %258 = vmatprep.subr.bf16.mxu0 0
  %259 = vmatpush2.bf16.msra.mxu0 0
  %260 = vmatprep.mubr.bf16.mxu0 0
  %261 = vmatmul.mubr.bf16.gmra.mxu0 %v144
  %v262 = vpop.f32.mrf.mxu0
  %v263 = vadd.f32 0.0, %v262
  %v264 = vpop.f32.mrf.mxu0
  %v265 = vadd.f32 0.0, %v264
  %v266 = vpop.f32.mrf.mxu0
  %v267 = vpop.f32.mrf.mxu0
  %268 = vdwg.mxu0
  %269 = vmatprep.subr.bf16.mxu0 0
  %270 = vmatpush1.bf16.msra.mxu0 0
  %271 = vmatprep.subr.bf16.mxu0 0
  %272 = vmatpush1.bf16.msra.mxu0 0
  %273 = vmatprep.subr.bf16.mxu0 0
  %274 = vmatpush1.bf16.msra.mxu0 0
  %275 = vmatprep.subr.bf16.mxu0 0
  %276 = vmatpush1.bf16.msra.mxu0 0
  %277 = vmatprep.subr.bf16.mxu0 0
  %278 = vmatpush1.bf16.msra.mxu0 0
  %279 = vmatprep.subr.bf16.mxu0 0
  %280 = vmatpush1.bf16.msra.mxu0 0
  %281 = vmatprep.subr.bf16.mxu0 %v125
  %282 = vmatpush1.bf16.msra.mxu0 %v124
  %283 = vmatprep.subr.bf16.mxu0 %v117
  %284 = vmatpush1.bf16.msra.mxu0 %v116
  %285 = vmatprep.subr.bf16.mxu0 0
  %286 = vmatpush2.bf16.msra.mxu0 0
  %287 = vmatprep.subr.bf16.mxu0 0
  %288 = vmatpush2.bf16.msra.mxu0 0
  %289 = vmatprep.subr.bf16.mxu0 0
  %290 = vmatpush2.bf16.msra.mxu0 0
  %291 = vmatprep.subr.bf16.mxu0 0
  %292 = vmatpush2.bf16.msra.mxu0 0
  %293 = vmatprep.subr.bf16.mxu0 0
  %294 = vmatpush2.bf16.msra.mxu0 0
  %295 = vmatprep.subr.bf16.mxu0 0
  %296 = vmatpush2.bf16.msra.mxu0 0
  %297 = vmatprep.subr.bf16.mxu0 0
  %298 = vmatpush2.bf16.msra.mxu0 0
  %299 = vmatprep.subr.bf16.mxu0 0
  %300 = vmatpush2.bf16.msra.mxu0 0
  %301 = vmatprep.mubr.bf16.mxu0 0
  %302 = vmatmul.mubr.bf16.gmra.mxu0 %v144
  %v303 = vpop.f32.mrf.mxu0
  %v304 = vadd.f32 0.0, %v303
  %v305 = vpop.f32.mrf.mxu0
  %v306 = vadd.f32 0.0, %v305
  %v307 = vpop.f32.mrf.mxu0
  %v308 = vpop.f32.mrf.mxu0
  %309 = vdwg.mxu0
  %v310 = vpack.c.bf16 %v181, %v181
  %v311 = vpack.c.bf16 %v183, %v183
  %v312 = vpack.c.bf16 %v222, %v222
  %v313 = vpack.c.bf16 %v224, %v224
  %v314 = vpack.c.bf16 %v263, %v263
  %v315 = vpack.c.bf16 %v265, %v265
  %v316 = vpack.c.bf16 %v304, %v304
  %v317 = vpack.c.bf16 %v306, %v306
  %v326 = vunpack.c.l.b16 %v310
  %v327 = vunpack.c.l.b16 %v311
  %v328 = vunpack.c.l.b16 %v312
  %v329 = vunpack.c.l.b16 %v313
  %v330 = vunpack.c.l.b16 %v314
  %v331 = vunpack.c.l.b16 %v315
  %v332 = vunpack.c.l.b16 %v316
  %v333 = vunpack.c.l.b16 %v317
  %v334 = vpack.c.b16 %v327, %v326
  %v335 = vpack.c.b16 %v329, %v328
  %v336 = vpack.c.b16 %v331, %v330
  %v337 = vpack.c.b16 %v333, %v332
  %342 = vst [vmem:[%s42] sm:$0xff] %v334
  %343 = vst [vmem:[%s42 + $0x8] sm:$0xff] %v335
  %344 = vst [vmem:[%s42 + $0x10] sm:$0xff] %v336
  %345 = vst [vmem:[%s42 + $0x18] sm:$0xff] %v337
  %p346 = scmp.eq.s32.totalorder 0, 0
  // Predicated region
  $region10: #{generator_forward.9} parent=0 // pred_check
    %p347 = pneg %p346
  $region11: #{generator_forward.9} parent=0 // pred_check_branch
    %349 = sbr.rel (%p347) target = $region13
  $region12: #{generator_forward.9} parent=0 // pred_region
    %350 = vst [vmem:[%s3] sm:$0xff] 0.0
    %351 = vst [vmem:[%s4] sm:$0xff] 0.0
  $region13: #{generator_forward.9} parent=0 // pred_fallthru
    _
  %v352 = vld [vmem:[%s3] sm:$0xff]
  %v353 = vrot.slane %v181, 4
  %v354 = vadd.f32 %v181, %v353
  %v355 = vrot.slane %v354, 2
  %v356 = vadd.f32 %v354, %v355
  %v357 = vrot.slane %v356, 1
  %v358 = vadd.f32 %v356, %v357
  %v359 = vrot.slane %v183, 4
  %v360 = vadd.f32 %v183, %v359
  %v361 = vrot.slane %v360, 2
  %v362 = vadd.f32 %v360, %v361
  %v363 = vrot.slane %v362, 1
  %v364 = vadd.f32 %v362, %v363
  %v365 = vrot.slane %v222, 4
  %v366 = vadd.f32 %v222, %v365
  %v367 = vrot.slane %v366, 2
  %v368 = vadd.f32 %v366, %v367
  %v369 = vrot.slane %v368, 1
  %v370 = vadd.f32 %v368, %v369
  %v371 = vrot.slane %v224, 4
  %v372 = vadd.f32 %v224, %v371
  %v373 = vrot.slane %v372, 2
  %v374 = vadd.f32 %v372, %v373
  %v375 = vrot.slane %v374, 1
  %v376 = vadd.f32 %v374, %v375
  %v377 = vrot.slane %v263, 4
  %v378 = vadd.f32 %v263, %v377
  %v379 = vrot.slane %v378, 2
  %v380 = vadd.f32 %v378, %v379
  %v381 = vrot.slane %v380, 1
  %v382 = vadd.f32 %v380, %v381
  %v383 = vrot.slane %v265, 4
  %v384 = vadd.f32 %v265, %v383
  %v385 = vrot.slane %v384, 2
  %v386 = vadd.f32 %v384, %v385
  %v387 = vrot.slane %v386, 1
  %v388 = vadd.f32 %v386, %v387
  %v389 = vrot.slane %v304, 4
  %v390 = vadd.f32 %v304, %v389
  %v391 = vrot.slane %v390, 2
  %v392 = vadd.f32 %v390, %v391
  %v393 = vrot.slane %v392, 1
  %v394 = vadd.f32 %v392, %v393
  %v395 = vrot.slane %v306, 4
  %v396 = vadd.f32 %v306, %v395
  %v397 = vrot.slane %v396, 2
  %v398 = vadd.f32 %v396, %v397
  %v399 = vrot.slane %v398, 1
  %v400 = vadd.f32 %v398, %v399
  %v409 = vcombine.low %v358, %v364
  %v410 = vcombine.low %v370, %v376
  %v411 = vcombine.low %v382, %v388
  %v412 = vcombine.low %v394, %v400
  %v414 = vunpack.c.l.s4 1966171168
  %v415 = vunpack.c.0.s8 %v414
  %v416 = vlaneseq
  %v417 = vshrl.u32 %v416, 7
  %v418 = vsub.s32 %v415, %v417
  %v419 = vrot.slane %v409, %v418
  %v421 = vunpack.c.l.s4 1966171168
  %v422 = vunpack.c.0.s8 %v421
  %v423 = vlaneseq
  %v424 = vshrl.u32 %v423, 7
  %v425 = vsub.s32 %v422, %v424
  %v426 = vrot.slane %v410, %v425
  %v428 = vunpack.c.l.s4 1966171168
  %v429 = vunpack.c.0.s8 %v428
  %v430 = vlaneseq
  %v431 = vshrl.u32 %v430, 7
  %v432 = vsub.s32 %v429, %v431
  %v433 = vrot.slane %v411, %v432
  %v435 = vunpack.c.l.s4 1966171168
  %v436 = vunpack.c.0.s8 %v435
  %v437 = vlaneseq
  %v438 = vshrl.u32 %v437, 7
  %v439 = vsub.s32 %v436, %v438
  %v440 = vrot.slane %v412, %v439
  %v441 = vcombine.low %v419, %v426
  %v442 = vcombine.low %v433, %v440
  %v444 = vunpack.c.l.s4 1966171168
  %v445 = vunpack.c.0.s8 %v444
  %v446 = vlaneseq
  %v447 = vshrl.u32 %v446, 7
  %v448 = vsub.s32 %v445, %v447
  %v449 = vrot.slane %v441, %v448
  %v451 = vunpack.c.l.s4 1966171168
  %v452 = vunpack.c.0.s8 %v451
  %v453 = vlaneseq
  %v454 = vshrl.u32 %v453, 7
  %v455 = vsub.s32 %v452, %v454
  %v456 = vrot.slane %v442, %v455
  %v457 = vcombine.low %v449, %v456
  %v459 = vadd.f32 %v352, %v457
  %460 = vst [vmem:[%s3] sm:$0xff] %v459
  %v461 = vld [vmem:[%s4] sm:$0xff]
  %v462 = vmul.f32 %v181, %v181
  %v463 = vmul.f32 %v183, %v183
  %v464 = vmul.f32 %v222, %v222
  %v465 = vmul.f32 %v224, %v224
  %v466 = vmul.f32 %v263, %v263
  %v467 = vmul.f32 %v265, %v265
  %v468 = vmul.f32 %v304, %v304
  %v469 = vmul.f32 %v306, %v306
  %v470 = vrot.slane %v462, 4
  %v471 = vadd.f32 %v462, %v470
  %v472 = vrot.slane %v471, 2
  %v473 = vadd.f32 %v471, %v472
  %v474 = vrot.slane %v473, 1
  %v475 = vadd.f32 %v473, %v474
  %v476 = vrot.slane %v463, 4
  %v477 = vadd.f32 %v463, %v476
  %v478 = vrot.slane %v477, 2
  %v479 = vadd.f32 %v477, %v478
  %v480 = vrot.slane %v479, 1
  %v481 = vadd.f32 %v479, %v480
  %v482 = vrot.slane %v464, 4
  %v483 = vadd.f32 %v464, %v482
  %v484 = vrot.slane %v483, 2
  %v485 = vadd.f32 %v483, %v484
  %v486 = vrot.slane %v485, 1
  %v487 = vadd.f32 %v485, %v486
  %v488 = vrot.slane %v465, 4
  %v489 = vadd.f32 %v465, %v488
  %v490 = vrot.slane %v489, 2
  %v491 = vadd.f32 %v489, %v490
  %v492 = vrot.slane %v491, 1
  %v493 = vadd.f32 %v491, %v492
  %v494 = vrot.slane %v466, 4
  %v495 = vadd.f32 %v466, %v494
  %v496 = vrot.slane %v495, 2
  %v497 = vadd.f32 %v495, %v496
  %v498 = vrot.slane %v497, 1
  %v499 = vadd.f32 %v497, %v498
  %v500 = vrot.slane %v467, 4
  %v501 = vadd.f32 %v467, %v500
  %v502 = vrot.slane %v501, 2
  %v503 = vadd.f32 %v501, %v502
  %v504 = vrot.slane %v503, 1
  %v505 = vadd.f32 %v503, %v504
  %v506 = vrot.slane %v468, 4
  %v507 = vadd.f32 %v468, %v506
  %v508 = vrot.slane %v507, 2
  %v509 = vadd.f32 %v507, %v508
  %v510 = vrot.slane %v509, 1
  %v511 = vadd.f32 %v509, %v510
  %v512 = vrot.slane %v469, 4
  %v513 = vadd.f32 %v469, %v512
  %v514 = vrot.slane %v513, 2
  %v515 = vadd.f32 %v513, %v514
  %v516 = vrot.slane %v515, 1
  %v517 = vadd.f32 %v515, %v516
  %v526 = vcombine.low %v475, %v481
  %v527 = vcombine.low %v487, %v493
  %v528 = vcombine.low %v499, %v505
  %v529 = vcombine.low %v511, %v517
  %v531 = vunpack.c.l.s4 1966171168
  %v532 = vunpack.c.0.s8 %v531
  %v533 = vlaneseq
  %v534 = vshrl.u32 %v533, 7
  %v535 = vsub.s32 %v532, %v534
  %v536 = vrot.slane %v526, %v535
  %v538 = vunpack.c.l.s4 1966171168
  %v539 = vunpack.c.0.s8 %v538
  %v540 = vlaneseq
  %v541 = vshrl.u32 %v540, 7
  %v542 = vsub.s32 %v539, %v541
  %v543 = vrot.slane %v527, %v542
  %v545 = vunpack.c.l.s4 1966171168
  %v546 = vunpack.c.0.s8 %v545
  %v547 = vlaneseq
  %v548 = vshrl.u32 %v547, 7
  %v549 = vsub.s32 %v546, %v548
  %v550 = vrot.slane %v528, %v549
  %v552 = vunpack.c.l.s4 1966171168
  %v553 = vunpack.c.0.s8 %v552
  %v554 = vlaneseq
  %v555 = vshrl.u32 %v554, 7
  %v556 = vsub.s32 %v553, %v555
  %v557 = vrot.slane %v529, %v556
  %v558 = vcombine.low %v536, %v543
  %v559 = vcombine.low %v550, %v557
  %v561 = vunpack.c.l.s4 1966171168
  %v562 = vunpack.c.0.s8 %v561
  %v563 = vlaneseq
  %v564 = vshrl.u32 %v563, 7
  %v565 = vsub.s32 %v562, %v564
  %v566 = vrot.slane %v558, %v565
  %v568 = vunpack.c.l.s4 1966171168
  %v569 = vunpack.c.0.s8 %v568
  %v570 = vlaneseq
  %v571 = vshrl.u32 %v570, 7
  %v572 = vsub.s32 %v569, %v571
  %v573 = vrot.slane %v559, %v572
  %v574 = vcombine.low %v566, %v573
  %v576 = vadd.f32 %v461, %v574
  %577 = vst [vmem:[%s4] sm:$0xff] %v576
  %s578 = sadd.s32 0, 0
  %p579 = scmp.lt.s32.totalorder %s578, 0
  %s580 = scalar_select %p579, %s578, 0
  %s581 = smul.addr %s580, 8
  %s582 = smul.addr %s581, 4
  %s583 = scalar_lea.vmem %s2, %s582
  // Predicated region
  $region14: #{generator_forward.9} parent=0 // pred_check
    _
  $region15: #{generator_forward.9} parent=0 // pred_check_branch
    %585 = sbr.rel (0) target = $region17
  $region16: #{generator_forward.9} parent=0 // pred_region
    %s586 = sadd.s32 0, 0
  $region17: #{generator_forward.9} parent=0 // pred_fallthru
    _
  // Predicated region
  $region18: #{generator_forward.9} parent=0 // pred_check
    _
  $region19: #{generator_forward.9} parent=0 // pred_check_branch
    %588 = sbr.rel (0) target = $region21
  $region20: #{generator_forward.9} parent=0 // pred_region
    _
  $region21: #{generator_forward.9} parent=0 // pred_fallthru
    _
  // Predicated region
  $region22: #{generator_forward.9} parent=0 // pred_check
    _
  $region23: #{generator_forward.9} parent=0 // pred_check_branch
    %590 = sbr.rel (0) target = $region25
  $region24: #{generator_forward.9} parent=0 // pred_region
    _
  $region25: #{generator_forward.9} parent=0 // pred_fallthru
    _
  // Predicated region
  $region26: #{generator_forward.9} parent=0 // pred_check
    _
  $region27: #{generator_forward.9} parent=0 // pred_check_branch
    %592 = sbr.rel (0) target = $region29
  $region28: #{generator_forward.9} parent=0 // pred_region
    %s593 = sadd.s32 0, 0
    %p594 = scmp.lt.s32.totalorder %s593, 0
    %s595 = scalar_select %p594, %s593, 0
    %s596 = smul.addr %s595, 8
    %s597 = smul.addr %s596, 4
    %s598 = scalar_lea.vmem %s2, %s597
  $region29: #{generator_forward.9} parent=0 // pred_fallthru
    _
  // Predicated region
  $region30: #{generator_forward.9} parent=0 // pred_check
    _
  $region31: #{generator_forward.9} parent=0 // pred_check_branch
    %600 = sbr.rel (0) target = $region33
  $region32: #{generator_forward.9} parent=0 // pred_region
    _
  $region33: #{generator_forward.9} parent=0 // pred_fallthru
    _
  // Predicated region
  $region34: #{generator_forward.9} parent=0 // pred_check
    _
  $region35: #{generator_forward.9} parent=0 // pred_check_branch
    %602 = sbr.rel (0) target = $region37
  $region36: #{generator_forward.9} parent=0 // pred_region
    _
  $region37: #{generator_forward.9} parent=0 // pred_fallthru
    _

// kernel: tile.43
$region0: #{tile.43}
  #allocation0 [shape = 's32[1]{0}', space=sflag, size = 0x4, scoped, tag = 'scoped memory for tile.43']
  %s0 = inlined_call_operand.vmem [shape: f32[32], index: 0, kind: input, shape index: {}]
  %s1 = inlined_call_operand.vmem [shape: f32[4,32], index: 1, kind: output, shape index: {}]
  // Predicated region
  $region2: #{tile.43} parent=0 // pred_check
    _
  $region3: #{tile.43} parent=0 // pred_check_branch
    %3 = sbr.rel (0) target = $region5
  $region4: #{tile.43} parent=0 // pred_region
    _
  $region5: #{tile.43} parent=0 // pred_fallthru
    _
  %v4 = vld [vmem:[%s0] ss:$0 sm:$0xff]
  %5 = vst [vmem:[%s1] sm:$0xf] %v4

// kernel: generator_forward.11
$region0: #{generator_forward.11}
  #allocation0 [shape = 'u32[]', space=smem, size = 0x4, offset = 0x4, fixed_abs, tag = 'smem constant byte address 0x4 - core index']
  #allocation1 [shape = 'u32[144,128]{1,0:T(1,128)}', space=vmem, size = 0x12000, scoped, tag = 'internal scratch']
  %s0 = inlined_call_operand.vmem [shape: bf16[32,576], index: 0, kind: input, shape index: {}]
  %s1 = inlined_call_operand.vmem [shape: bf16[576,128], index: 1, kind: input, shape index: {}]
  %s2 = inlined_call_operand.vmem [shape: bf16[32,128], index: 2, kind: output, shape index: {0}]
  %s3 = inlined_call_operand.vmem [shape: f32[2,1,128], index: 3, kind: output, shape index: {1}]
  %s4 = inlined_call_operand.vmem [shape: f32[2,1,128], index: 4, kind: output, shape index: {2}]
  %5 = xla_tuple %s2, %s3, %s4
  %s6 = sld [smem:[#allocation0]]
  $region61: #{generator_forward.11} parent=0
    _
  %s8 = ssub.s32 1, %s6
  %s9 = scalar_select 0, %s8, %s6
  loop: start=0, step=1, limit=6
  $region2: #{generator_forward.11} parent=0 // loop_pre_header
    _
  $region3: #{generator_forward.11} parent=0 // loop_header
    %s11 = sphi 0, %s15
    %p12 = scmp.ge.s32.totalorder %s11, 6
    %s18 = sphi 0, %s30
    %s19 = sphi 0, %s26
    %s20 = sphi 0, %s18
    %s21 = sphi 0, %s19
    %s22 = sphi 0, %s20
    %s23 = sphi 0, %s21
    %s37 = sphi 0, %s39
    %s40 = sphi 0, %s37
    %s41 = sphi 0, %s40
    %s57 = sphi 0, %s41
    %s61 = sphi 0, %s61
    %s63 = sphi 0, %s61
    %s64 = sphi 0, %s63
    %s78 = sphi 0, %s64
    %s88 = sphi 0, %s90
    %s91 = sphi 0, %s88
    %s92 = sphi 0, %s91
    %s108 = sphi 0, %s92
    %s114 = sphi 0, %s116
    %s117 = sphi 0, %s114
    %s118 = sphi 0, %s117
    %s134 = sphi 0, %s118
    %s140 = sphi 0, %s142
    %s143 = sphi 0, %s140
    %s144 = sphi 0, %s143
    %s160 = sphi 0, %s144
  $region4: #{generator_forward.11} parent=0 // loop_header_branch
    %14 = sbr.rel (%p12) target = $region8
  $region5: #{generator_forward.11} parent=0 // loop_body
    %s16 = ssub.s32 %s11, 1
    %s17 = ssub.s32 %s11, 2
    %s24 = sadd.s32 1, %s19
    %p25 = scmp.ge.s32.totalorder %s24, 2
    %s26 = scalar_select %p25, 0, %s24
    %s27 = sadd.s32 1, %s18
    %s28 = scalar_select %p25, %s27, %s18
    %p29 = scmp.ge.s32.totalorder %s28, 2
    %s30 = scalar_select %p29, 0, %s28
    %s31 = smul.u32 %s18, 2
    %s32 = sadd.s32 %s31, %s19
    %s33 = smul.u32 %s30, 2
    %s34 = sadd.s32 %s33, %s26
    %s35 = ssub.s32 %s32, %s34
    %p36 = scmp.eq.s32.totalorder %s35, 0
    %s38 = sadd.s32 %s37, 1
    %s39 = scalar_select %p36, %s37, %s38
    %p42 = pneg %p36
    %p43 = scmp.eq.s32.totalorder %s11, 3
    %p44 = por %p42, %p43
    %p45 = scmp.ne.s32.totalorder %s37, %s40
    %p46 = scmp.eq.s32.totalorder %s11, 0
    %p47 = por %p45, %p46
    %p48 = scmp.ne.s32.totalorder %s37, %s40
    %p49 = scmp.eq.s32.totalorder %s16, 3
    %p50 = por %p48, %p49
    %p51 = scmp.ne.s32.totalorder %s40, %s41
    %p52 = scmp.eq.s32.totalorder %s16, 0
    %p53 = por %p51, %p52
    %p54 = scmp.ne.s32.totalorder %s40, %s41
    %p55 = scmp.eq.s32.totalorder %s17, 3
    %p56 = por %p54, %p55
    %p58 = scmp.ne.s32.totalorder %s41, %s57
    %p59 = scmp.eq.s32.totalorder %s17, 0
    %p60 = por %p58, %p59
    %s62 = sadd.s32 %s61, 1
    %p65 = scmp.eq.s32.totalorder %s11, 3
    %p66 = scmp.ne.s32.totalorder %s61, %s63
    %p67 = scmp.eq.s32.totalorder %s11, 0
    %p68 = por %p66, %p67
    %p69 = scmp.ne.s32.totalorder %s61, %s63
    %p70 = scmp.eq.s32.totalorder %s16, 3
    %p71 = por %p69, %p70
    %p72 = scmp.ne.s32.totalorder %s63, %s64
    %p73 = scmp.eq.s32.totalorder %s16, 0
    %p74 = por %p72, %p73
    %p75 = scmp.ne.s32.totalorder %s63, %s64
    %p76 = scmp.eq.s32.totalorder %s17, 3
    %p77 = por %p75, %p76
    %p79 = scmp.ne.s32.totalorder %s64, %s78
    %p80 = scmp.eq.s32.totalorder %s17, 0
    %p81 = por %p79, %p80
    %s82 = smul.u32 %s18, 2
    %s83 = sadd.s32 %s82, %s19
    %s84 = smul.u32 %s30, 2
    %s85 = sadd.s32 %s84, %s26
    %s86 = ssub.s32 %s83, %s85
    %p87 = scmp.eq.s32.totalorder %s86, 0
    %s89 = sadd.s32 %s88, 1
    %s90 = scalar_select %p87, %s88, %s89
    %p93 = pneg %p87
    %p94 = scmp.eq.s32.totalorder %s11, 3
    %p95 = por %p93, %p94
    %p96 = scmp.ne.s32.totalorder %s88, %s91
    %p97 = scmp.eq.s32.totalorder %s11, 0
    %p98 = por %p96, %p97
    %p99 = scmp.ne.s32.totalorder %s88, %s91
    %p100 = scmp.eq.s32.totalorder %s16, 3
    %p101 = por %p99, %p100
    %p102 = scmp.ne.s32.totalorder %s91, %s92
    %p103 = scmp.eq.s32.totalorder %s16, 0
    %p104 = por %p102, %p103
    %p105 = scmp.ne.s32.totalorder %s91, %s92
    %p106 = scmp.eq.s32.totalorder %s17, 3
    %p107 = por %p105, %p106
    %p109 = scmp.ne.s32.totalorder %s92, %s108
    %p110 = scmp.eq.s32.totalorder %s17, 0
    %p111 = por %p109, %p110
    %s112 = ssub.s32 %s18, %s30
    %p113 = scmp.eq.s32.totalorder %s112, 0
    %s115 = sadd.s32 %s114, 1
    %s116 = scalar_select %p113, %s114, %s115
    %p119 = pneg %p113
    %p120 = scmp.eq.s32.totalorder %s11, 3
    %p121 = por %p119, %p120
    %p122 = scmp.ne.s32.totalorder %s114, %s117
    %p123 = scmp.eq.s32.totalorder %s11, 0
    %p124 = por %p122, %p123
    %p125 = scmp.ne.s32.totalorder %s114, %s117
    %p126 = scmp.eq.s32.totalorder %s16, 3
    %p127 = por %p125, %p126
    %p128 = scmp.ne.s32.totalorder %s117, %s118
    %p129 = scmp.eq.s32.totalorder %s16, 0
    %p130 = por %p128, %p129
    %p131 = scmp.ne.s32.totalorder %s117, %s118
    %p132 = scmp.eq.s32.totalorder %s17, 3
    %p133 = por %p131, %p132
    %p135 = scmp.ne.s32.totalorder %s118, %s134
    %p136 = scmp.eq.s32.totalorder %s17, 0
    %p137 = por %p135, %p136
    %s138 = ssub.s32 %s18, %s30
    %p139 = scmp.eq.s32.totalorder %s138, 0
    %s141 = sadd.s32 %s140, 1
    %s142 = scalar_select %p139, %s140, %s141
    %p145 = pneg %p139
    %p146 = scmp.eq.s32.totalorder %s11, 3
    %p147 = por %p145, %p146
    %p148 = scmp.ne.s32.totalorder %s140, %s143
    %p149 = scmp.eq.s32.totalorder %s11, 0
    %p150 = por %p148, %p149
    %p151 = scmp.ne.s32.totalorder %s140, %s143
    %p152 = scmp.eq.s32.totalorder %s16, 3
    %p153 = por %p151, %p152
    %p154 = scmp.ne.s32.totalorder %s143, %s144
    %p155 = scmp.eq.s32.totalorder %s16, 0
    %p156 = por %p154, %p155
    %p157 = scmp.ne.s32.totalorder %s143, %s144
    %p158 = scmp.eq.s32.totalorder %s17, 3
    %p159 = por %p157, %p158
    %p161 = scmp.ne.s32.totalorder %s144, %s160
    %p162 = scmp.eq.s32.totalorder %s17, 0
    %p163 = por %p161, %p162
    %p164 = scmp.le.s32.totalorder 1, %s11
    %p165 = scmp.lt.s32.totalorder %s11, 5
    %p166 = pnand %p164, %p165
    %p167 = pneg %p166
    // Predicated region
    $region9: #{generator_forward.11} parent=5 // pred_check
      _
    $region10: #{generator_forward.11} parent=5 // pred_check_branch
      %169 = sbr.rel (%p166) target = $region12
    $region11: #{generator_forward.11} parent=5 // pred_region
      %s170 = ssub.s32 %s11, 1
      // Predicated region
      $region13: #{generator_forward.11} parent=11 // pred_check
        %p171 = pneg %p74
      $region14: #{generator_forward.11} parent=11 // pred_check_branch
        %173 = sbr.rel (%p171) target = $region16
      $region15: #{generator_forward.11} parent=11 // pred_region
        _
      $region16: #{generator_forward.11} parent=11 // pred_fallthru
        _
    $region12: #{generator_forward.11} parent=5 // pred_fallthru
      _
    %p174 = scmp.lt.s32.totalorder %s11, 4
    // Predicated region
    $region17: #{generator_forward.11} parent=5 // pred_check
      %p175 = pneg %p174
    $region18: #{generator_forward.11} parent=5 // pred_check_branch
      %177 = sbr.rel (%p175) target = $region20
    $region19: #{generator_forward.11} parent=5 // pred_region
      // Predicated region
      $region21: #{generator_forward.11} parent=19 // pred_check
        %p178 = pneg %p47
      $region22: #{generator_forward.11} parent=19 // pred_check_branch
        %180 = sbr.rel (%p178) target = $region24
      $region23: #{generator_forward.11} parent=19 // pred_region
        %s181 = smul.u32 %s18, 2
        %s182 = sadd.s32 %s181, %s19
        %p183 = scmp.lt.s32.totalorder %s182, 3
        %s184 = scalar_select %p183, %s182, 3
        %s185 = smul.addr %s184, 5
        %s186 = smul.addr %s185, 4
        %s187 = scalar_lea.vmem %s0, %s186
        %s188 = smul.u32 %s18, 2
        %s189 = sadd.s32 %s188, %s19
      $region24: #{generator_forward.11} parent=19 // pred_fallthru
        _
    $region20: #{generator_forward.11} parent=5 // pred_fallthru
      _
    %p190 = scmp.le.s32.totalorder 1, %s11
    %p191 = scmp.lt.s32.totalorder %s11, 5
    %p192 = pnand %p190, %p191
    %p193 = pneg %p192
    // Predicated region
    $region25: #{generator_forward.11} parent=5 // pred_check
      _
    $region26: #{generator_forward.11} parent=5 // pred_check_branch
      %195 = sbr.rel (%p192) target = $region28
    $region27: #{generator_forward.11} parent=5 // pred_region
      %s196 = ssub.s32 %s11, 1
      %s197 = smul.u32 %s20, 2
      %s198 = sadd.s32 %s197, %s21
      %p199 = scmp.lt.s32.totalorder %s198, 3
      %s200 = scalar_select %p199, %s198, 3
      %s201 = smul.addr %s200, 5
      %s202 = smul.addr %s201, 4
      %s203 = scalar_lea.vmem %s0, %s202
      %p204 = pneg %p53
      %p205 = pneg %p50
      %p206 = pneg %p74
      %p207 = pneg %p71
      %p208 = pneg %p104
      %p209 = pneg %p101
      %s210 = smul.u32 %s20, 2
      %s211 = sadd.s32 %s210, %s21
      %p212 = scmp.lt.s32.totalorder %s211, 3
      %s213 = scalar_select %p212, %s211, 3
      %s214 = smul.addr %s213, 4
      %s215 = scalar_lea.vmem %s2, %s214
      %p216 = pneg %p130
      %p217 = pneg %p127
      %p218 = scmp.lt.s32.totalorder %s20, 1
      %s219 = scalar_select %p218, %s20, 1
      %s220 = scalar_lea.vmem %s3, %s219
      %p221 = pneg %p156
      %p222 = pneg %p153
      %p223 = scmp.lt.s32.totalorder %s20, 1
      %s224 = scalar_select %p223, %s20, 1
      %s225 = scalar_lea.vmem %s4, %s224
      %s226 = smul.u32 %s20, 2
      %s227 = sadd.s32 %s226, %s21
      %p228 = scmp.lt.s32.totalorder %s227, 3
      %s229 = scalar_select %p228, %s227, 3
      %s230 = smul.addr %s229, 5
      %s231 = smul.addr %s230, 4
      %s232 = scalar_lea.vmem %s0, %s231
      %s233 = smul.u32 %s20, 2
      %s234 = sadd.s32 %s233, %s21
      %s235 = smul.u32 %s20, 2
      %s236 = sadd.s32 %s235, %s21
      %p237 = scmp.lt.s32.totalorder %s236, 3
      %s238 = scalar_select %p237, %s236, 3
      %s239 = smul.addr %s238, 4
      %s240 = scalar_lea.vmem %s2, %s239
      %s241 = smul.u32 %s20, 2
      %s242 = sadd.s32 %s241, %s21
      %p243 = scmp.lt.s32.totalorder %s20, 1
      %s244 = scalar_select %p243, %s20, 1
      %s245 = scalar_lea.vmem %s3, %s244
      %p246 = scmp.lt.s32.totalorder %s20, 1
      %s247 = scalar_select %p246, %s20, 1
      %s248 = scalar_lea.vmem %s4, %s247
      %v250 = vld [vmem:[%s232] sm:$0xff]
      %v251 = vld [vmem:[%s232 + $0x8] sm:$0xff]
      %v252 = vld [vmem:[%s232 + $0x10] sm:$0xf]
      %v253 = vld [vmem:[%s1] sm:$0xf]
      %v254 = vld [vmem:[%s1 + $0x4] sm:$0xf]
      %v255 = vld [vmem:[%s1 + $0x8] sm:$0xf]
      %v256 = vld [vmem:[%s1 + $0xc] sm:$0xf]
      %v257 = vld [vmem:[%s1 + $0x10] sm:$0xf]
      %v258 = vld [vmem:[%s1 + $0x14] sm:$0xf]
      %v259 = vld [vmem:[%s1 + $0x18] sm:$0xf]
      %v260 = vld [vmem:[%s1 + $0x1c] sm:$0xf]
      %v261 = vld [vmem:[%s1 + $0x20] sm:$0xf]
      %v262 = vld [vmem:[%s1 + $0x24] sm:$0xf]
      %v263 = vld [vmem:[%s1 + $0x28] sm:$0xf]
      %v264 = vld [vmem:[%s1 + $0x2c] sm:$0xf]
      %v265 = vld [vmem:[%s1 + $0x30] sm:$0xf]
      %v266 = vld [vmem:[%s1 + $0x34] sm:$0xf]
      %v267 = vld [vmem:[%s1 + $0x38] sm:$0xf]
      %v268 = vld [vmem:[%s1 + $0x3c] sm:$0xf]
      %v269 = vld [vmem:[%s1 + $0x40] sm:$0xf]
      %v270 = vld [vmem:[%s1 + $0x44] sm:$0xf]
      %v271 = vld [vmem:[%s1 + $0x48] sm:$0xf]
      %v272 = vld [vmem:[%s1 + $0x4c] sm:$0xf]
      %v273 = vld [vmem:[%s1 + $0x50] sm:$0xf]
      %v274 = vld [vmem:[%s1 + $0x54] sm:$0xf]
      %v275 = vld [vmem:[%s1 + $0x58] sm:$0xf]
      %v276 = vld [vmem:[%s1 + $0x5c] sm:$0xf]
      %v277 = vld [vmem:[%s1 + $0x60] sm:$0xf]
      %v278 = vld [vmem:[%s1 + $0x64] sm:$0xf]
      %v279 = vld [vmem:[%s1 + $0x68] sm:$0xf]
      %v280 = vld [vmem:[%s1 + $0x6c] sm:$0xf]
      %v281 = vld [vmem:[%s1 + $0x70] sm:$0xf]
      %v282 = vld [vmem:[%s1 + $0x74] sm:$0xf]
      %v283 = vld [vmem:[%s1 + $0x78] sm:$0xf]
      %v284 = vld [vmem:[%s1 + $0x7c] sm:$0xf]
      %v285 = vld [vmem:[%s1 + $0x80] sm:$0xf]
      %v286 = vld [vmem:[%s1 + $0x84] sm:$0xf]
      %v287 = vld [vmem:[%s1 + $0x88] sm:$0xf]
      %v288 = vld [vmem:[%s1 + $0x8c] sm:$0xf]
      %v289 = vld [vmem:[%s1 + $0x90] sm:$0xf]
      %v290 = vld [vmem:[%s1 + $0x94] sm:$0xf]
      %v291 = vld [vmem:[%s1 + $0x98] sm:$0xf]
      %v292 = vld [vmem:[%s1 + $0x9c] sm:$0xf]
      %v293 = vld [vmem:[%s1 + $0xa0] sm:$0xf]
      %v294 = vld [vmem:[%s1 + $0xa4] sm:$0xf]
      %v295 = vld [vmem:[%s1 + $0xa8] sm:$0xf]
      %v296 = vld [vmem:[%s1 + $0xac] sm:$0xf]
      %v297 = vld [vmem:[%s1 + $0xb0] sm:$0xf]
      %v298 = vld [vmem:[%s1 + $0xb4] sm:$0xf]
      %v299 = vld [vmem:[%s1 + $0xb8] sm:$0xf]
      %v300 = vld [vmem:[%s1 + $0xbc] sm:$0xf]
      %v301 = vld [vmem:[%s1 + $0xc0] sm:$0xf]
      %v302 = vld [vmem:[%s1 + $0xc4] sm:$0xf]
      %v303 = vld [vmem:[%s1 + $0xc8] sm:$0xf]
      %v304 = vld [vmem:[%s1 + $0xcc] sm:$0xf]
      %v305 = vld [vmem:[%s1 + $0xd0] sm:$0xf]
      %v306 = vld [vmem:[%s1 + $0xd4] sm:$0xf]
      %v307 = vld [vmem:[%s1 + $0xd8] sm:$0xf]
      %v308 = vld [vmem:[%s1 + $0xdc] sm:$0xf]
      %v309 = vld [vmem:[%s1 + $0xe0] sm:$0xf]
      %v310 = vld [vmem:[%s1 + $0xe4] sm:$0xf]
      %v311 = vld [vmem:[%s1 + $0xe8] sm:$0xf]
      %v312 = vld [vmem:[%s1 + $0xec] sm:$0xf]
      %v313 = vld [vmem:[%s1 + $0xf0] sm:$0xf]
      %v314 = vld [vmem:[%s1 + $0xf4] sm:$0xf]
      %v315 = vld [vmem:[%s1 + $0xf8] sm:$0xf]
      %v316 = vld [vmem:[%s1 + $0xfc] sm:$0xf]
      %v317 = vld [vmem:[%s1 + $0x100] sm:$0xf]
      %v318 = vld [vmem:[%s1 + $0x104] sm:$0xf]
      %v319 = vld [vmem:[%s1 + $0x108] sm:$0xf]
      %v320 = vld [vmem:[%s1 + $0x10c] sm:$0xf]
      %v321 = vld [vmem:[%s1 + $0x110] sm:$0xf]
      %v322 = vld [vmem:[%s1 + $0x114] sm:$0xf]
      %v323 = vld [vmem:[%s1 + $0x118] sm:$0xf]
      %v324 = vld [vmem:[%s1 + $0x11c] sm:$0xf]
      %v328 = vunpack.c.l.b16 %v250
      %v329 = vunpack.c.h.b16 %v250
      %v330 = vunpack.c.l.b16 %v251
      %v331 = vunpack.c.h.b16 %v251
      %v332 = vunpack.c.l.b16 %v252
      %v333 = vpack.c.b16 %v328, %v328
      %v334 = vpack.c.b16 %v329, %v329
      %v335 = vpack.c.b16 %v330, %v330
      %v336 = vpack.c.b16 %v331, %v331
      %v337 = vpack.c.b16 %v332, %v332
      %v414 = vunpack.c.l.b16 %v253
      %v415 = vunpack.c.l.b16 %v254
      %v416 = vunpack.c.l.b16 %v255
      %v417 = vunpack.c.l.b16 %v256
      %v418 = vunpack.c.l.b16 %v257
      %v419 = vunpack.c.l.b16 %v258
      %v420 = vunpack.c.l.b16 %v259
      %v421 = vunpack.c.l.b16 %v260
      %v422 = vunpack.c.l.b16 %v261
      %v423 = vunpack.c.l.b16 %v262
      %v424 = vunpack.c.l.b16 %v263
      %v425 = vunpack.c.l.b16 %v264
      %v426 = vunpack.c.l.b16 %v265
      %v427 = vunpack.c.l.b16 %v266
      %v428 = vunpack.c.l.b16 %v267
      %v429 = vunpack.c.l.b16 %v268
      %v430 = vunpack.c.l.b16 %v269
      %v431 = vunpack.c.l.b16 %v270
      %v432 = vunpack.c.l.b16 %v271
      %v433 = vunpack.c.l.b16 %v272
      %v434 = vunpack.c.l.b16 %v273
      %v435 = vunpack.c.l.b16 %v274
      %v436 = vunpack.c.l.b16 %v275
      %v437 = vunpack.c.l.b16 %v276
      %v438 = vunpack.c.l.b16 %v277
      %v439 = vunpack.c.l.b16 %v278
      %v440 = vunpack.c.l.b16 %v279
      %v441 = vunpack.c.l.b16 %v280
      %v442 = vunpack.c.l.b16 %v281
      %v443 = vunpack.c.l.b16 %v282
      %v444 = vunpack.c.l.b16 %v283
      %v445 = vunpack.c.l.b16 %v284
      %v446 = vunpack.c.l.b16 %v285
      %v447 = vunpack.c.l.b16 %v286
      %v448 = vunpack.c.l.b16 %v287
      %v449 = vunpack.c.l.b16 %v288
      %v450 = vunpack.c.l.b16 %v289
      %v451 = vunpack.c.l.b16 %v290
      %v452 = vunpack.c.l.b16 %v291
      %v453 = vunpack.c.l.b16 %v292
      %v454 = vunpack.c.l.b16 %v293
      %v455 = vunpack.c.l.b16 %v294
      %v456 = vunpack.c.l.b16 %v295
      %v457 = vunpack.c.l.b16 %v296
      %v458 = vunpack.c.l.b16 %v297
      %v459 = vunpack.c.l.b16 %v298
      %v460 = vunpack.c.l.b16 %v299
      %v461 = vunpack.c.l.b16 %v300
      %v462 = vunpack.c.l.b16 %v301
      %v463 = vunpack.c.l.b16 %v302
      %v464 = vunpack.c.l.b16 %v303
      %v465 = vunpack.c.l.b16 %v304
      %v466 = vunpack.c.l.b16 %v305
      %v467 = vunpack.c.l.b16 %v306
      %v468 = vunpack.c.l.b16 %v307
      %v469 = vunpack.c.l.b16 %v308
      %v470 = vunpack.c.l.b16 %v309
      %v471 = vunpack.c.l.b16 %v310
      %v472 = vunpack.c.l.b16 %v311
      %v473 = vunpack.c.l.b16 %v312
      %v474 = vunpack.c.l.b16 %v313
      %v475 = vunpack.c.l.b16 %v314
      %v476 = vunpack.c.l.b16 %v315
      %v477 = vunpack.c.l.b16 %v316
      %v478 = vunpack.c.l.b16 %v317
      %v479 = vunpack.c.l.b16 %v318
      %v480 = vunpack.c.l.b16 %v319
      %v481 = vunpack.c.l.b16 %v320
      %v482 = vunpack.c.l.b16 %v321
      %v483 = vunpack.c.l.b16 %v322
      %v484 = vunpack.c.l.b16 %v323
      %v485 = vunpack.c.l.b16 %v324
      %v486 = vpack.c.b16 %v415, %v414
      %v487 = vpack.c.b16 %v417, %v416
      %v488 = vpack.c.b16 %v419, %v418
      %v489 = vpack.c.b16 %v421, %v420
      %v490 = vpack.c.b16 %v423, %v422
      %v491 = vpack.c.b16 %v425, %v424
      %v492 = vpack.c.b16 %v427, %v426
      %v493 = vpack.c.b16 %v429, %v428
      %v494 = vpack.c.b16 %v431, %v430
      %v495 = vpack.c.b16 %v433, %v432
      %v496 = vpack.c.b16 %v435, %v434
      %v497 = vpack.c.b16 %v437, %v436
      %v498 = vpack.c.b16 %v439, %v438
      %v499 = vpack.c.b16 %v441, %v440
      %v500 = vpack.c.b16 %v443, %v442
      %v501 = vpack.c.b16 %v445, %v444
      %v502 = vpack.c.b16 %v447, %v446
      %v503 = vpack.c.b16 %v449, %v448
      %v504 = vpack.c.b16 %v451, %v450
      %v505 = vpack.c.b16 %v453, %v452
      %v506 = vpack.c.b16 %v455, %v454
      %v507 = vpack.c.b16 %v457, %v456
      %v508 = vpack.c.b16 %v459, %v458
      %v509 = vpack.c.b16 %v461, %v460
      %v510 = vpack.c.b16 %v463, %v462
      %v511 = vpack.c.b16 %v465, %v464
      %v512 = vpack.c.b16 %v467, %v466
      %v513 = vpack.c.b16 %v469, %v468
      %v514 = vpack.c.b16 %v471, %v470
      %v515 = vpack.c.b16 %v473, %v472
      %v516 = vpack.c.b16 %v475, %v474
      %v517 = vpack.c.b16 %v477, %v476
      %v518 = vpack.c.b16 %v479, %v478
      %v519 = vpack.c.b16 %v481, %v480
      %v520 = vpack.c.b16 %v483, %v482
      %v521 = vpack.c.b16 %v485, %v484
      %vm558 = vcmask 523264
      %v560 = vsel %vm558, %v337, 0
      %562 = vmatprep.subr.bf16.mxu0 0
      %563 = vmatpush1.bf16.msra.mxu0 %v493
      %564 = vmatprep.subr.bf16.mxu0 0
      %565 = vmatpush1.bf16.msra.mxu0 %v492
      %566 = vmatprep.subr.bf16.mxu0 0
      %567 = vmatpush1.bf16.msra.mxu0 %v491
      %568 = vmatprep.subr.bf16.mxu0 0
      %569 = vmatpush1.bf16.msra.mxu0 %v490
      %570 = vmatprep.subr.bf16.mxu0 0
      %571 = vmatpush1.bf16.msra.mxu0 %v489
      %572 = vmatprep.subr.bf16.mxu0 0
      %573 = vmatpush1.bf16.msra.mxu0 %v488
      %574 = vmatprep.subr.bf16.mxu0 0
      %575 = vmatpush1.bf16.msra.mxu0 %v487
      %576 = vmatprep.subr.bf16.mxu0 0
      %577 = vmatpush1.bf16.msra.mxu0 %v486
      %578 = vmatprep.subr.bf16.mxu0 0
      %579 = vmatpush2.bf16.msra.mxu0 %v501
      %580 = vmatprep.subr.bf16.mxu0 0
      %581 = vmatpush2.bf16.msra.mxu0 %v500
      %582 = vmatprep.subr.bf16.mxu0 0
      %583 = vmatpush2.bf16.msra.mxu0 %v499
      %584 = vmatprep.subr.bf16.mxu0 0
      %585 = vmatpush2.bf16.msra.mxu0 %v498
      %586 = vmatprep.subr.bf16.mxu0 0
      %587 = vmatpush2.bf16.msra.mxu0 %v497
      %588 = vmatprep.subr.bf16.mxu0 0
      %589 = vmatpush2.bf16.msra.mxu0 %v496
      %590 = vmatprep.subr.bf16.mxu0 0
      %591 = vmatpush2.bf16.msra.mxu0 %v495
      %592 = vmatprep.subr.bf16.mxu0 0
      %593 = vmatpush2.bf16.msra.mxu0 %v494
      %594 = vmatprep.mubr.bf16.mxu0 %v334
      %595 = vmatmul.mubr.bf16.gmra.mxu0 %v333
      %v596 = vpop.f32.mrf.mxu0
      %v597 = vadd.f32 0.0, %v596
      %v598 = vpop.f32.mrf.mxu0
      %v599 = vpop.f32.mrf.mxu0
      %v600 = vpop.f32.mrf.mxu0
      %601 = vdwg.mxu0
      %602 = vmatprep.subr.bf16.mxu0 0
      %603 = vmatpush1.bf16.msra.mxu0 %v509
      %604 = vmatprep.subr.bf16.mxu0 0
      %605 = vmatpush1.bf16.msra.mxu0 %v508
      %606 = vmatprep.subr.bf16.mxu0 0
      %607 = vmatpush1.bf16.msra.mxu0 %v507
      %608 = vmatprep.subr.bf16.mxu0 0
      %609 = vmatpush1.bf16.msra.mxu0 %v506
      %610 = vmatprep.subr.bf16.mxu0 0
      %611 = vmatpush1.bf16.msra.mxu0 %v505
      %612 = vmatprep.subr.bf16.mxu0 0
      %613 = vmatpush1.bf16.msra.mxu0 %v504
      %614 = vmatprep.subr.bf16.mxu0 0
      %615 = vmatpush1.bf16.msra.mxu0 %v503
      %616 = vmatprep.subr.bf16.mxu0 0
      %617 = vmatpush1.bf16.msra.mxu0 %v502
      %618 = vmatprep.subr.bf16.mxu0 0
      %619 = vmatpush2.bf16.msra.mxu0 %v517
      %620 = vmatprep.subr.bf16.mxu0 0
      %621 = vmatpush2.bf16.msra.mxu0 %v516
      %622 = vmatprep.subr.bf16.mxu0 0
      %623 = vmatpush2.bf16.msra.mxu0 %v515
      %624 = vmatprep.subr.bf16.mxu0 0
      %625 = vmatpush2.bf16.msra.mxu0 %v514
      %626 = vmatprep.subr.bf16.mxu0 0
      %627 = vmatpush2.bf16.msra.mxu0 %v513
      %628 = vmatprep.subr.bf16.mxu0 0
      %629 = vmatpush2.bf16.msra.mxu0 %v512
      %630 = vmatprep.subr.bf16.mxu0 0
      %631 = vmatpush2.bf16.msra.mxu0 %v511
      %632 = vmatprep.subr.bf16.mxu0 0
      %633 = vmatpush2.bf16.msra.mxu0 %v510
      %634 = vmatprep.mubr.bf16.mxu0 %v336
      %635 = vmatmul.mubr.bf16.gmra.mxu0 %v335
      %v636 = vpop.f32.mrf.mxu0
      %v637 = vadd.f32 %v597, %v636
      %v638 = vpop.f32.mrf.mxu0
      %v639 = vpop.f32.mrf.mxu0
      %v640 = vpop.f32.mrf.mxu0
      %641 = vdwg.mxu0
      %642 = vmatprep.subr.bf16.mxu0 0
      %643 = vmatpush1.bf16.msra.mxu0 0
      %644 = vmatprep.subr.bf16.mxu0 0
      %645 = vmatpush1.bf16.msra.mxu0 0
      %646 = vmatprep.subr.bf16.mxu0 0
      %647 = vmatpush1.bf16.msra.mxu0 0
      %648 = vmatprep.subr.bf16.mxu0 0
      %649 = vmatpush1.bf16.msra.mxu0 0
      %650 = vmatprep.subr.bf16.mxu0 0
      %651 = vmatpush1.bf16.msra.mxu0 %v521
      %652 = vmatprep.subr.bf16.mxu0 0
      %653 = vmatpush1.bf16.msra.mxu0 %v520
      %654 = vmatprep.subr.bf16.mxu0 0
      %655 = vmatpush1.bf16.msra.mxu0 %v519
      %656 = vmatprep.subr.bf16.mxu0 0
      %657 = vmatpush1.bf16.msra.mxu0 %v518
      %658 = vmatprep.subr.bf16.mxu0 0
      %659 = vmatpush2.bf16.msra.mxu0 0
      %660 = vmatprep.subr.bf16.mxu0 0
      %661 = vmatpush2.bf16.msra.mxu0 0
      %662 = vmatprep.subr.bf16.mxu0 0
      %663 = vmatpush2.bf16.msra.mxu0 0
      %664 = vmatprep.subr.bf16.mxu0 0
      %665 = vmatpush2.bf16.msra.mxu0 0
      %666 = vmatprep.subr.bf16.mxu0 0
      %667 = vmatpush2.bf16.msra.mxu0 0
      %668 = vmatprep.subr.bf16.mxu0 0
      %669 = vmatpush2.bf16.msra.mxu0 0
      %670 = vmatprep.subr.bf16.mxu0 0
      %671 = vmatpush2.bf16.msra.mxu0 0
      %672 = vmatprep.subr.bf16.mxu0 0
      %673 = vmatpush2.bf16.msra.mxu0 0
      %674 = vmatprep.mubr.bf16.mxu0 0
      %675 = vmatmul.mubr.bf16.gmra.mxu0 %v560
      %v676 = vpop.f32.mrf.mxu0
      %v677 = vadd.f32 %v637, %v676
      %v678 = vpop.f32.mrf.mxu0
      %v679 = vpop.f32.mrf.mxu0
      %v680 = vpop.f32.mrf.mxu0
      %681 = vdwg.mxu0
      %v682 = vpack.c.bf16 %v677, %v677
      %683 = vst [vmem:[%s240] sm:$0xf] %v682
      %p684 = scmp.eq.s32.totalorder %s21, 0
      // Predicated region
      $region29: #{generator_forward.11} parent=27 // pred_check
        %p685 = pneg %p684
      $region30: #{generator_forward.11} parent=27 // pred_check_branch
        %687 = sbr.rel (%p685) target = $region32
      $region31: #{generator_forward.11} parent=27 // pred_region
        %688 = vst [vmem:[%s245] sm:$0x1] 0.0
        %689 = vst [vmem:[%s248] sm:$0x1] 0.0
      $region32: #{generator_forward.11} parent=27 // pred_fallthru
        _
      %v690 = vld [vmem:[%s245] sm:$0x1]
      %v691 = vrot.slane %v677, 4
      %v692 = vadd.f32 %v677, %v691
      %v693 = vrot.slane %v692, 2
      %v694 = vadd.f32 %v692, %v693
      %v695 = vrot.slane %v694, 1
      %v696 = vadd.f32 %v694, %v695
      %v697 = vadd.f32 %v690, %v696
      %698 = vst [vmem:[%s245] sm:$0x1] %v697
      %v699 = vld [vmem:[%s248] sm:$0x1]
      %v700 = vmul.f32 %v677, %v677
      %v701 = vrot.slane %v700, 4
      %v702 = vadd.f32 %v700, %v701
      %v703 = vrot.slane %v702, 2
      %v704 = vadd.f32 %v702, %v703
      %v705 = vrot.slane %v704, 1
      %v706 = vadd.f32 %v704, %v705
      %v707 = vadd.f32 %v699, %v706
      %708 = vst [vmem:[%s248] sm:$0x1] %v707
      %s709 = smul.u32 %s20, 2
      %s710 = sadd.s32 %s709, %s21
      %p711 = scmp.lt.s32.totalorder %s710, 3
      %s712 = scalar_select %p711, %s710, 3
      %s713 = smul.addr %s712, 4
      %s714 = scalar_lea.vmem %s2, %s713
      %p715 = scmp.lt.s32.totalorder %s20, 1
      %s716 = scalar_select %p715, %s20, 1
      %s717 = scalar_lea.vmem %s3, %s716
      %p718 = scmp.lt.s32.totalorder %s20, 1
      %s719 = scalar_select %p718, %s20, 1
      %s720 = scalar_lea.vmem %s4, %s719
      // Predicated region
      $region33: #{generator_forward.11} parent=27 // pred_check
        %p721 = pneg %p101
      $region34: #{generator_forward.11} parent=27 // pred_check_branch
        %723 = sbr.rel (%p721) target = $region36
      $region35: #{generator_forward.11} parent=27 // pred_region
        %s724 = smul.u32 %s20, 2
        %s725 = sadd.s32 %s724, %s21
      $region36: #{generator_forward.11} parent=27 // pred_fallthru
        _
      // Predicated region
      $region37: #{generator_forward.11} parent=27 // pred_check
        %p726 = pneg %p127
      $region38: #{generator_forward.11} parent=27 // pred_check_branch
        %728 = sbr.rel (%p726) target = $region40
      $region39: #{generator_forward.11} parent=27 // pred_region
        _
      $region40: #{generator_forward.11} parent=27 // pred_fallthru
        _
      // Predicated region
      $region41: #{generator_forward.11} parent=27 // pred_check
        %p729 = pneg %p153
      $region42: #{generator_forward.11} parent=27 // pred_check_branch
        %731 = sbr.rel (%p729) target = $region44
      $region43: #{generator_forward.11} parent=27 // pred_region
        _
      $region44: #{generator_forward.11} parent=27 // pred_fallthru
        _
    $region28: #{generator_forward.11} parent=5 // pred_fallthru
      _
    %p732 = scmp.le.s32.totalorder 2, %s11
    // Predicated region
    $region45: #{generator_forward.11} parent=5 // pred_check
      %p733 = pneg %p732
    $region46: #{generator_forward.11} parent=5 // pred_check_branch
      %735 = sbr.rel (%p733) target = $region48
    $region47: #{generator_forward.11} parent=5 // pred_region
      %s736 = ssub.s32 %s11, 2
      // Predicated region
      $region49: #{generator_forward.11} parent=47 // pred_check
        %p737 = pneg %p107
      $region50: #{generator_forward.11} parent=47 // pred_check_branch
        %739 = sbr.rel (%p737) target = $region52
      $region51: #{generator_forward.11} parent=47 // pred_region
        %s740 = smul.u32 %s22, 2
        %s741 = sadd.s32 %s740, %s23
        %p742 = scmp.lt.s32.totalorder %s741, 3
        %s743 = scalar_select %p742, %s741, 3
        %s744 = smul.addr %s743, 4
        %s745 = scalar_lea.vmem %s2, %s744
      $region52: #{generator_forward.11} parent=47 // pred_fallthru
        _
      // Predicated region
      $region53: #{generator_forward.11} parent=47 // pred_check
        %p746 = pneg %p133
      $region54: #{generator_forward.11} parent=47 // pred_check_branch
        %748 = sbr.rel (%p746) target = $region56
      $region55: #{generator_forward.11} parent=47 // pred_region
        %p749 = scmp.lt.s32.totalorder %s22, 1
        %s750 = scalar_select %p749, %s22, 1
        %s751 = scalar_lea.vmem %s3, %s750
      $region56: #{generator_forward.11} parent=47 // pred_fallthru
        _
      // Predicated region
      $region57: #{generator_forward.11} parent=47 // pred_check
        %p752 = pneg %p159
      $region58: #{generator_forward.11} parent=47 // pred_check_branch
        %754 = sbr.rel (%p752) target = $region60
      $region59: #{generator_forward.11} parent=47 // pred_region
        %p755 = scmp.lt.s32.totalorder %s22, 1
        %s756 = scalar_select %p755, %s22, 1
        %s757 = scalar_lea.vmem %s4, %s756
      $region60: #{generator_forward.11} parent=47 // pred_fallthru
        _
    $region48: #{generator_forward.11} parent=5 // pred_fallthru
      _
  $region6: #{generator_forward.11} parent=0 // loop_footer
    %s15 = sadd.s32 1, %s11
  $region7: #{generator_forward.11} parent=0 // loop_footer_branch
    %10 = sbr.rel target = $region3
  $region8: #{generator_forward.11} parent=0 // loop_exit
    _

// kernel: generator_forward.12
$region0: #{generator_forward.12}
  #allocation0 [shape = 'u32[]', space=smem, size = 0x4, offset = 0x4, fixed_abs, tag = 'smem constant byte address 0x4 - core index']
  #allocation1 [shape = 'u32[144,128]{1,0:T(1,128)}', space=vmem, size = 0x12000, scoped, tag = 'internal scratch']
  %s0 = inlined_call_operand.vmem [shape: bf16[32,128], index: 0, kind: input, shape index: {}]
  %s1 = inlined_call_operand.vmem [shape: f32[1,128], index: 1, kind: input, shape index: {}]
  %s2 = inlined_call_operand.vmem [shape: f32[1,128], index: 2, kind: input, shape index: {}]
  %s3 = inlined_call_operand.vmem [shape: bf16[32,128], index: 3, kind: output, shape index: {}]
  %s4 = sld [smem:[#allocation0]]
  $region45: #{generator_forward.12} parent=0
    _
  %s6 = ssub.s32 1, %s4
  %s7 = scalar_select 0, %s6, %s4
  loop: start=0, step=1, limit=6
  $region2: #{generator_forward.12} parent=0 // loop_pre_header
    _
  $region3: #{generator_forward.12} parent=0 // loop_header
    %s9 = sphi 0, %s13
    %p10 = scmp.ge.s32.totalorder %s9, 6
    %s19 = sphi 0, %s21
    %s22 = sphi 0, %s19
    %s23 = sphi 0, %s22
    %s39 = sphi 0, %s23
    %s43 = sphi 0, %s43
    %s45 = sphi 0, %s43
    %s46 = sphi 0, %s45
    %s60 = sphi 0, %s46
    %s64 = sphi 0, %s64
    %s66 = sphi 0, %s64
    %s67 = sphi 0, %s66
    %s81 = sphi 0, %s67
    %s87 = sphi 0, %s89
    %s90 = sphi 0, %s87
    %s91 = sphi 0, %s90
    %s107 = sphi 0, %s91
  $region4: #{generator_forward.12} parent=0 // loop_header_branch
    %12 = sbr.rel (%p10) target = $region8
  $region5: #{generator_forward.12} parent=0 // loop_body
    %s14 = ssub.s32 %s9, 1
    %s15 = ssub.s32 %s9, 2
    %s16 = sadd.s32 %s9, 1
    %s17 = ssub.s32 %s9, %s16
    %p18 = scmp.eq.s32.totalorder %s17, 0
    %s20 = sadd.s32 %s19, 1
    %s21 = scalar_select %p18, %s19, %s20
    %p24 = pneg %p18
    %p25 = scmp.eq.s32.totalorder %s9, 3
    %p26 = por %p24, %p25
    %p27 = scmp.ne.s32.totalorder %s19, %s22
    %p28 = scmp.eq.s32.totalorder %s9, 0
    %p29 = por %p27, %p28
    %p30 = scmp.ne.s32.totalorder %s19, %s22
    %p31 = scmp.eq.s32.totalorder %s14, 3
    %p32 = por %p30, %p31
    %p33 = scmp.ne.s32.totalorder %s22, %s23
    %p34 = scmp.eq.s32.totalorder %s14, 0
    %p35 = por %p33, %p34
    %p36 = scmp.ne.s32.totalorder %s22, %s23
    %p37 = scmp.eq.s32.totalorder %s15, 3
    %p38 = por %p36, %p37
    %p40 = scmp.ne.s32.totalorder %s23, %s39
    %p41 = scmp.eq.s32.totalorder %s15, 0
    %p42 = por %p40, %p41
    %s44 = sadd.s32 %s43, 1
    %p47 = scmp.eq.s32.totalorder %s9, 3
    %p48 = scmp.ne.s32.totalorder %s43, %s45
    %p49 = scmp.eq.s32.totalorder %s9, 0
    %p50 = por %p48, %p49
    %p51 = scmp.ne.s32.totalorder %s43, %s45
    %p52 = scmp.eq.s32.totalorder %s14, 3
    %p53 = por %p51, %p52
    %p54 = scmp.ne.s32.totalorder %s45, %s46
    %p55 = scmp.eq.s32.totalorder %s14, 0
    %p56 = por %p54, %p55
    %p57 = scmp.ne.s32.totalorder %s45, %s46
    %p58 = scmp.eq.s32.totalorder %s15, 3
    %p59 = por %p57, %p58
    %p61 = scmp.ne.s32.totalorder %s46, %s60
    %p62 = scmp.eq.s32.totalorder %s15, 0
    %p63 = por %p61, %p62
    %s65 = sadd.s32 %s64, 1
    %p68 = scmp.eq.s32.totalorder %s9, 3
    %p69 = scmp.ne.s32.totalorder %s64, %s66
    %p70 = scmp.eq.s32.totalorder %s9, 0
    %p71 = por %p69, %p70
    %p72 = scmp.ne.s32.totalorder %s64, %s66
    %p73 = scmp.eq.s32.totalorder %s14, 3
    %p74 = por %p72, %p73
    %p75 = scmp.ne.s32.totalorder %s66, %s67
    %p76 = scmp.eq.s32.totalorder %s14, 0
    %p77 = por %p75, %p76
    %p78 = scmp.ne.s32.totalorder %s66, %s67
    %p79 = scmp.eq.s32.totalorder %s15, 3
    %p80 = por %p78, %p79
    %p82 = scmp.ne.s32.totalorder %s67, %s81
    %p83 = scmp.eq.s32.totalorder %s15, 0
    %p84 = por %p82, %p83
    %s85 = ssub.s32 %s9, %s16
    %p86 = scmp.eq.s32.totalorder %s85, 0
    %s88 = sadd.s32 %s87, 1
    %s89 = scalar_select %p86, %s87, %s88
    %p92 = pneg %p86
    %p93 = scmp.eq.s32.totalorder %s9, 3
    %p94 = por %p92, %p93
    %p95 = scmp.ne.s32.totalorder %s87, %s90
    %p96 = scmp.eq.s32.totalorder %s9, 0
    %p97 = por %p95, %p96
    %p98 = scmp.ne.s32.totalorder %s87, %s90
    %p99 = scmp.eq.s32.totalorder %s14, 3
    %p100 = por %p98, %p99
    %p101 = scmp.ne.s32.totalorder %s90, %s91
    %p102 = scmp.eq.s32.totalorder %s14, 0
    %p103 = por %p101, %p102
    %p104 = scmp.ne.s32.totalorder %s90, %s91
    %p105 = scmp.eq.s32.totalorder %s15, 3
    %p106 = por %p104, %p105
    %p108 = scmp.ne.s32.totalorder %s91, %s107
    %p109 = scmp.eq.s32.totalorder %s15, 0
    %p110 = por %p108, %p109
    %p111 = scmp.le.s32.totalorder 1, %s9
    %p112 = scmp.lt.s32.totalorder %s9, 5
    %p113 = pnand %p111, %p112
    %p114 = pneg %p113
    // Predicated region
    $region9: #{generator_forward.12} parent=5 // pred_check
      _
    $region10: #{generator_forward.12} parent=5 // pred_check_branch
      %116 = sbr.rel (%p113) target = $region12
    $region11: #{generator_forward.12} parent=5 // pred_region
      %s117 = ssub.s32 %s9, 1
      // Predicated region
      $region13: #{generator_forward.12} parent=11 // pred_check
        %p118 = pneg %p56
      $region14: #{generator_forward.12} parent=11 // pred_check_branch
        %120 = sbr.rel (%p118) target = $region16
      $region15: #{generator_forward.12} parent=11 // pred_region
        _
      $region16: #{generator_forward.12} parent=11 // pred_fallthru
        _
      // Predicated region
      $region17: #{generator_forward.12} parent=11 // pred_check
        %p121 = pneg %p77
      $region18: #{generator_forward.12} parent=11 // pred_check_branch
        %123 = sbr.rel (%p121) target = $region20
      $region19: #{generator_forward.12} parent=11 // pred_region
        _
      $region20: #{generator_forward.12} parent=11 // pred_fallthru
        _
    $region12: #{generator_forward.12} parent=5 // pred_fallthru
      _
    %p124 = scmp.lt.s32.totalorder %s9, 4
    // Predicated region
    $region21: #{generator_forward.12} parent=5 // pred_check
      %p125 = pneg %p124
    $region22: #{generator_forward.12} parent=5 // pred_check_branch
      %127 = sbr.rel (%p125) target = $region24
    $region23: #{generator_forward.12} parent=5 // pred_region
      // Predicated region
      $region25: #{generator_forward.12} parent=23 // pred_check
        %p128 = pneg %p29
      $region26: #{generator_forward.12} parent=23 // pred_check_branch
        %130 = sbr.rel (%p128) target = $region28
      $region27: #{generator_forward.12} parent=23 // pred_region
        %p131 = scmp.lt.s32.totalorder %s9, 3
        %s132 = scalar_select %p131, %s9, 3
        %s133 = smul.addr %s132, 4
        %s134 = scalar_lea.vmem %s0, %s133
      $region28: #{generator_forward.12} parent=23 // pred_fallthru
        _
    $region24: #{generator_forward.12} parent=5 // pred_fallthru
      _
    %p135 = scmp.le.s32.totalorder 1, %s9
    %p136 = scmp.lt.s32.totalorder %s9, 5
    %p137 = pnand %p135, %p136
    %p138 = pneg %p137
    // Predicated region
    $region29: #{generator_forward.12} parent=5 // pred_check
      _
    $region30: #{generator_forward.12} parent=5 // pred_check_branch
      %140 = sbr.rel (%p137) target = $region32
    $region31: #{generator_forward.12} parent=5 // pred_region
      %s141 = ssub.s32 %s9, 1
      %p142 = scmp.lt.s32.totalorder %s14, 3
      %s143 = scalar_select %p142, %s14, 3
      %s144 = smul.addr %s143, 4
      %s145 = scalar_lea.vmem %s0, %s144
      %p146 = pneg %p35
      %p147 = pneg %p32
      %p148 = pneg %p56
      %p149 = pneg %p53
      %p150 = pneg %p77
      %p151 = pneg %p74
      %p152 = pneg %p103
      %p153 = pneg %p100
      %p154 = scmp.lt.s32.totalorder %s14, 3
      %s155 = scalar_select %p154, %s14, 3
      %s156 = smul.addr %s155, 4
      %s157 = scalar_lea.vmem %s3, %s156
      %p158 = scmp.lt.s32.totalorder %s14, 3
      %s159 = scalar_select %p158, %s14, 3
      %s160 = smul.addr %s159, 4
      %s161 = scalar_lea.vmem %s0, %s160
      %p162 = scmp.lt.s32.totalorder %s14, 3
      %s163 = scalar_select %p162, %s14, 3
      %s164 = smul.addr %s163, 4
      %s165 = scalar_lea.vmem %s3, %s164
      %v166 = vld [vmem:[%s161] sm:$0xf]
      %v167 = vunpack.c.l.bf16 %v166
      %v168 = vld [vmem:[%s1] sm:$0x1]
      %v170 = vlaneseq
      %v171 = vshrl.u32 %v170, 7
      %v172 = vsub.s32 0, %v171
      %v173 = vrot.slane %v168, %v172
      %v175 = vmul.f32 %v167, %v173
      %v176 = vld [vmem:[%s2] sm:$0x1]
      %v178 = vlaneseq
      %v179 = vshrl.u32 %v178, 7
      %v180 = vsub.s32 0, %v179
      %v181 = vrot.slane %v176, %v180
      %v183 = vadd.f32 %v175, %v181
      %v184 = vmax.f32 %v183, 0.0
      %v185 = vpack.c.bf16 %v184, %v184
      %186 = vst [vmem:[%s165] sm:$0xf] %v185
      %p187 = scmp.lt.s32.totalorder %s14, 3
      %s188 = scalar_select %p187, %s14, 3
      %s189 = smul.addr %s188, 4
      %s190 = scalar_lea.vmem %s3, %s189
      // Predicated region
      $region33: #{generator_forward.12} parent=31 // pred_check
        %p191 = pneg %p100
      $region34: #{generator_forward.12} parent=31 // pred_check_branch
        %193 = sbr.rel (%p191) target = $region36
      $region35: #{generator_forward.12} parent=31 // pred_region
        _
      $region36: #{generator_forward.12} parent=31 // pred_fallthru
        _
    $region32: #{generator_forward.12} parent=5 // pred_fallthru
      _
    %p194 = scmp.le.s32.totalorder 2, %s9
    // Predicated region
    $region37: #{generator_forward.12} parent=5 // pred_check
      %p195 = pneg %p194
    $region38: #{generator_forward.12} parent=5 // pred_check_branch
      %197 = sbr.rel (%p195) target = $region40
    $region39: #{generator_forward.12} parent=5 // pred_region
      %s198 = ssub.s32 %s9, 2
      // Predicated region
      $region41: #{generator_forward.12} parent=39 // pred_check
        %p199 = pneg %p106
      $region42: #{generator_forward.12} parent=39 // pred_check_branch
        %201 = sbr.rel (%p199) target = $region44
      $region43: #{generator_forward.12} parent=39 // pred_region
        %p202 = scmp.lt.s32.totalorder %s15, 3
        %s203 = scalar_select %p202, %s15, 3
        %s204 = smul.addr %s203, 4
        %s205 = scalar_lea.vmem %s3, %s204
      $region44: #{generator_forward.12} parent=39 // pred_fallthru
        _
    $region40: #{generator_forward.12} parent=5 // pred_fallthru
      _
  $region6: #{generator_forward.12} parent=0 // loop_footer
    %s13 = sadd.s32 1, %s9
  $region7: #{generator_forward.12} parent=0 // loop_footer_branch
    %8 = sbr.rel target = $region3
  $region8: #{generator_forward.12} parent=0 // loop_exit
    _

// kernel: generator_forward.13
$region0: #{generator_forward.13}
  #allocation0 [shape = 'u32[]', space=smem, size = 0x4, offset = 0x4, fixed_abs, tag = 'smem constant byte address 0x4 - core index']
  #allocation1 [shape = 'u32[144,128]{1,0:T(1,128)}', space=vmem, size = 0x12000, scoped, tag = 'internal scratch']
  %s0 = inlined_call_operand.vmem [shape: bf16[128,288], index: 0, kind: input, shape index: {}]
  %s1 = inlined_call_operand.vmem [shape: bf16[288,128], index: 1, kind: input, shape index: {}]
  %s2 = inlined_call_operand.vmem [shape: bf16[128,128], index: 2, kind: output, shape index: {0}]
  %s3 = inlined_call_operand.vmem [shape: f32[2,1,128], index: 3, kind: output, shape index: {1}]
  %s4 = inlined_call_operand.vmem [shape: f32[2,1,128], index: 4, kind: output, shape index: {2}]
  %5 = xla_tuple %s2, %s3, %s4
  %s6 = sld [smem:[#allocation0]]
  $region61: #{generator_forward.13} parent=0
    _
  %s8 = ssub.s32 1, %s6
  %s9 = scalar_select 0, %s8, %s6
  loop: start=0, step=1, limit=10
  $region2: #{generator_forward.13} parent=0 // loop_pre_header
    _
  $region3: #{generator_forward.13} parent=0 // loop_header
    %s11 = sphi 0, %s15
    %p12 = scmp.ge.s32.totalorder %s11, 10
    %s18 = sphi 0, %s30
    %s19 = sphi 0, %s26
    %s20 = sphi 0, %s18
    %s21 = sphi 0, %s19
    %s22 = sphi 0, %s20
    %s23 = sphi 0, %s21
    %s37 = sphi 0, %s39
    %s40 = sphi 0, %s37
    %s41 = sphi 0, %s40
    %s57 = sphi 0, %s41
    %s61 = sphi 0, %s61
    %s63 = sphi 0, %s61
    %s64 = sphi 0, %s63
    %s78 = sphi 0, %s64
    %s88 = sphi 0, %s90
    %s91 = sphi 0, %s88
    %s92 = sphi 0, %s91
    %s108 = sphi 0, %s92
    %s114 = sphi 0, %s116
    %s117 = sphi 0, %s114
    %s118 = sphi 0, %s117
    %s134 = sphi 0, %s118
    %s140 = sphi 0, %s142
    %s143 = sphi 0, %s140
    %s144 = sphi 0, %s143
    %s160 = sphi 0, %s144
  $region4: #{generator_forward.13} parent=0 // loop_header_branch
    %14 = sbr.rel (%p12) target = $region8
  $region5: #{generator_forward.13} parent=0 // loop_body
    %s16 = ssub.s32 %s11, 1
    %s17 = ssub.s32 %s11, 2
    %s24 = sadd.s32 1, %s19
    %p25 = scmp.ge.s32.totalorder %s24, 4
    %s26 = scalar_select %p25, 0, %s24
    %s27 = sadd.s32 1, %s18
    %s28 = scalar_select %p25, %s27, %s18
    %p29 = scmp.ge.s32.totalorder %s28, 2
    %s30 = scalar_select %p29, 0, %s28
    %s31 = smul.u32 %s18, 4
    %s32 = sadd.s32 %s31, %s19
    %s33 = smul.u32 %s30, 4
    %s34 = sadd.s32 %s33, %s26
    %s35 = ssub.s32 %s32, %s34
    %p36 = scmp.eq.s32.totalorder %s35, 0
    %s38 = sadd.s32 %s37, 1
    %s39 = scalar_select %p36, %s37, %s38
    %p42 = pneg %p36
    %p43 = scmp.eq.s32.totalorder %s11, 7
    %p44 = por %p42, %p43
    %p45 = scmp.ne.s32.totalorder %s37, %s40
    %p46 = scmp.eq.s32.totalorder %s11, 0
    %p47 = por %p45, %p46
    %p48 = scmp.ne.s32.totalorder %s37, %s40
    %p49 = scmp.eq.s32.totalorder %s16, 7
    %p50 = por %p48, %p49
    %p51 = scmp.ne.s32.totalorder %s40, %s41
    %p52 = scmp.eq.s32.totalorder %s16, 0
    %p53 = por %p51, %p52
    %p54 = scmp.ne.s32.totalorder %s40, %s41
    %p55 = scmp.eq.s32.totalorder %s17, 7
    %p56 = por %p54, %p55
    %p58 = scmp.ne.s32.totalorder %s41, %s57
    %p59 = scmp.eq.s32.totalorder %s17, 0
    %p60 = por %p58, %p59
    %s62 = sadd.s32 %s61, 1
    %p65 = scmp.eq.s32.totalorder %s11, 7
    %p66 = scmp.ne.s32.totalorder %s61, %s63
    %p67 = scmp.eq.s32.totalorder %s11, 0
    %p68 = por %p66, %p67
    %p69 = scmp.ne.s32.totalorder %s61, %s63
    %p70 = scmp.eq.s32.totalorder %s16, 7
    %p71 = por %p69, %p70
    %p72 = scmp.ne.s32.totalorder %s63, %s64
    %p73 = scmp.eq.s32.totalorder %s16, 0
    %p74 = por %p72, %p73
    %p75 = scmp.ne.s32.totalorder %s63, %s64
    %p76 = scmp.eq.s32.totalorder %s17, 7
    %p77 = por %p75, %p76
    %p79 = scmp.ne.s32.totalorder %s64, %s78
    %p80 = scmp.eq.s32.totalorder %s17, 0
    %p81 = por %p79, %p80
    %s82 = smul.u32 %s18, 4
    %s83 = sadd.s32 %s82, %s19
    %s84 = smul.u32 %s30, 4
    %s85 = sadd.s32 %s84, %s26
    %s86 = ssub.s32 %s83, %s85
    %p87 = scmp.eq.s32.totalorder %s86, 0
    %s89 = sadd.s32 %s88, 1
    %s90 = scalar_select %p87, %s88, %s89
    %p93 = pneg %p87
    %p94 = scmp.eq.s32.totalorder %s11, 7
    %p95 = por %p93, %p94
    %p96 = scmp.ne.s32.totalorder %s88, %s91
    %p97 = scmp.eq.s32.totalorder %s11, 0
    %p98 = por %p96, %p97
    %p99 = scmp.ne.s32.totalorder %s88, %s91
    %p100 = scmp.eq.s32.totalorder %s16, 7
    %p101 = por %p99, %p100
    %p102 = scmp.ne.s32.totalorder %s91, %s92
    %p103 = scmp.eq.s32.totalorder %s16, 0
    %p104 = por %p102, %p103
    %p105 = scmp.ne.s32.totalorder %s91, %s92
    %p106 = scmp.eq.s32.totalorder %s17, 7
    %p107 = por %p105, %p106
    %p109 = scmp.ne.s32.totalorder %s92, %s108
    %p110 = scmp.eq.s32.totalorder %s17, 0
    %p111 = por %p109, %p110
    %s112 = ssub.s32 %s18, %s30
    %p113 = scmp.eq.s32.totalorder %s112, 0
    %s115 = sadd.s32 %s114, 1
    %s116 = scalar_select %p113, %s114, %s115
    %p119 = pneg %p113
    %p120 = scmp.eq.s32.totalorder %s11, 7
    %p121 = por %p119, %p120
    %p122 = scmp.ne.s32.totalorder %s114, %s117
    %p123 = scmp.eq.s32.totalorder %s11, 0
    %p124 = por %p122, %p123
    %p125 = scmp.ne.s32.totalorder %s114, %s117
    %p126 = scmp.eq.s32.totalorder %s16, 7
    %p127 = por %p125, %p126
    %p128 = scmp.ne.s32.totalorder %s117, %s118
    %p129 = scmp.eq.s32.totalorder %s16, 0
    %p130 = por %p128, %p129
    %p131 = scmp.ne.s32.totalorder %s117, %s118
    %p132 = scmp.eq.s32.totalorder %s17, 7
    %p133 = por %p131, %p132
    %p135 = scmp.ne.s32.totalorder %s118, %s134
    %p136 = scmp.eq.s32.totalorder %s17, 0
    %p137 = por %p135, %p136
    %s138 = ssub.s32 %s18, %s30
    %p139 = scmp.eq.s32.totalorder %s138, 0
    %s141 = sadd.s32 %s140, 1
    %s142 = scalar_select %p139, %s140, %s141
    %p145 = pneg %p139
    %p146 = scmp.eq.s32.totalorder %s11, 7
    %p147 = por %p145, %p146
    %p148 = scmp.ne.s32.totalorder %s140, %s143
    %p149 = scmp.eq.s32.totalorder %s11, 0
    %p150 = por %p148, %p149
    %p151 = scmp.ne.s32.totalorder %s140, %s143
    %p152 = scmp.eq.s32.totalorder %s16, 7
    %p153 = por %p151, %p152
    %p154 = scmp.ne.s32.totalorder %s143, %s144
    %p155 = scmp.eq.s32.totalorder %s16, 0
    %p156 = por %p154, %p155
    %p157 = scmp.ne.s32.totalorder %s143, %s144
    %p158 = scmp.eq.s32.totalorder %s17, 7
    %p159 = por %p157, %p158
    %p161 = scmp.ne.s32.totalorder %s144, %s160
    %p162 = scmp.eq.s32.totalorder %s17, 0
    %p163 = por %p161, %p162
    %p164 = scmp.le.s32.totalorder 1, %s11
    %p165 = scmp.lt.s32.totalorder %s11, 9
    %p166 = pnand %p164, %p165
    %p167 = pneg %p166
    // Predicated region
    $region9: #{generator_forward.13} parent=5 // pred_check
      _
    $region10: #{generator_forward.13} parent=5 // pred_check_branch
      %169 = sbr.rel (%p166) target = $region12
    $region11: #{generator_forward.13} parent=5 // pred_region
      %s170 = ssub.s32 %s11, 1
      // Predicated region
      $region13: #{generator_forward.13} parent=11 // pred_check
        %p171 = pneg %p74
      $region14: #{generator_forward.13} parent=11 // pred_check_branch
        %173 = sbr.rel (%p171) target = $region16
      $region15: #{generator_forward.13} parent=11 // pred_region
        _
      $region16: #{generator_forward.13} parent=11 // pred_fallthru
        _
    $region12: #{generator_forward.13} parent=5 // pred_fallthru
      _
    %p174 = scmp.lt.s32.totalorder %s11, 8
    // Predicated region
    $region17: #{generator_forward.13} parent=5 // pred_check
      %p175 = pneg %p174
    $region18: #{generator_forward.13} parent=5 // pred_check_branch
      %177 = sbr.rel (%p175) target = $region20
    $region19: #{generator_forward.13} parent=5 // pred_region
      // Predicated region
      $region21: #{generator_forward.13} parent=19 // pred_check
        %p178 = pneg %p47
      $region22: #{generator_forward.13} parent=19 // pred_check_branch
        %180 = sbr.rel (%p178) target = $region24
      $region23: #{generator_forward.13} parent=19 // pred_region
        %s181 = smul.u32 %s18, 4
        %s182 = sadd.s32 %s181, %s19
        %s183 = smul.u32 2, %s182
        %p184 = scmp.lt.s32.totalorder %s183, 15
        %s185 = scalar_select %p184, %s183, 15
        %s186 = smul.addr %s185, 3
        %s187 = smul.addr %s186, 4
        %s188 = scalar_lea.vmem %s0, %s187
        %s189 = smul.u32 %s18, 4
        %s190 = sadd.s32 %s189, %s19
        %s191 = smul.u32 2, %s190
      $region24: #{generator_forward.13} parent=19 // pred_fallthru
        _
    $region20: #{generator_forward.13} parent=5 // pred_fallthru
      _
    %p192 = scmp.le.s32.totalorder 1, %s11
    %p193 = scmp.lt.s32.totalorder %s11, 9
    %p194 = pnand %p192, %p193
    %p195 = pneg %p194
    // Predicated region
    $region25: #{generator_forward.13} parent=5 // pred_check
      _
    $region26: #{generator_forward.13} parent=5 // pred_check_branch
      %197 = sbr.rel (%p194) target = $region28
    $region27: #{generator_forward.13} parent=5 // pred_region
      %s198 = ssub.s32 %s11, 1
      %s199 = smul.u32 %s20, 4
      %s200 = sadd.s32 %s199, %s21
      %s201 = smul.u32 2, %s200
      %p202 = scmp.lt.s32.totalorder %s201, 15
      %s203 = scalar_select %p202, %s201, 15
      %s204 = smul.addr %s203, 3
      %s205 = smul.addr %s204, 4
      %s206 = scalar_lea.vmem %s0, %s205
      %p207 = pneg %p53
      %p208 = pneg %p50
      %p209 = pneg %p74
      %p210 = pneg %p71
      %p211 = pneg %p104
      %p212 = pneg %p101
      %s213 = smul.u32 %s20, 4
      %s214 = sadd.s32 %s213, %s21
      %s215 = smul.u32 2, %s214
      %p216 = scmp.lt.s32.totalorder %s215, 15
      %s217 = scalar_select %p216, %s215, 15
      %s218 = smul.addr %s217, 4
      %s219 = scalar_lea.vmem %s2, %s218
      %p220 = pneg %p130
      %p221 = pneg %p127
      %p222 = scmp.lt.s32.totalorder %s20, 1
      %s223 = scalar_select %p222, %s20, 1
      %s224 = scalar_lea.vmem %s3, %s223
      %p225 = pneg %p156
      %p226 = pneg %p153
      %p227 = scmp.lt.s32.totalorder %s20, 1
      %s228 = scalar_select %p227, %s20, 1
      %s229 = scalar_lea.vmem %s4, %s228
      %s230 = smul.u32 %s20, 4
      %s231 = sadd.s32 %s230, %s21
      %s232 = smul.u32 2, %s231
      %p233 = scmp.lt.s32.totalorder %s232, 15
      %s234 = scalar_select %p233, %s232, 15
      %s235 = smul.addr %s234, 3
      %s236 = smul.addr %s235, 4
      %s237 = scalar_lea.vmem %s0, %s236
      %s238 = smul.u32 %s20, 4
      %s239 = sadd.s32 %s238, %s21
      %s240 = smul.u32 2, %s239
      %s241 = smul.u32 %s20, 4
      %s242 = sadd.s32 %s241, %s21
      %s243 = smul.u32 2, %s242
      %p244 = scmp.lt.s32.totalorder %s243, 15
      %s245 = scalar_select %p244, %s243, 15
      %s246 = smul.addr %s245, 4
      %s247 = scalar_lea.vmem %s2, %s246
      %s248 = smul.u32 %s20, 4
      %s249 = sadd.s32 %s248, %s21
      %s250 = smul.u32 2, %s249
      %p251 = scmp.lt.s32.totalorder %s20, 1
      %s252 = scalar_select %p251, %s20, 1
      %s253 = scalar_lea.vmem %s3, %s252
      %p254 = scmp.lt.s32.totalorder %s20, 1
      %s255 = scalar_select %p254, %s20, 1
      %s256 = scalar_lea.vmem %s4, %s255
      %v258 = vld [vmem:[%s237] sm:$0xff]
      %v259 = vld [vmem:[%s237 + $0x8] sm:$0xf]
      %v260 = vld [vmem:[%s237 + $0xc] sm:$0xff]
      %v261 = vld [vmem:[%s237 + $0x14] sm:$0xf]
      %v262 = vld [vmem:[%s1] sm:$0xf]
      %v263 = vld [vmem:[%s1 + $0x4] sm:$0xf]
      %v264 = vld [vmem:[%s1 + $0x8] sm:$0xf]
      %v265 = vld [vmem:[%s1 + $0xc] sm:$0xf]
      %v266 = vld [vmem:[%s1 + $0x10] sm:$0xf]
      %v267 = vld [vmem:[%s1 + $0x14] sm:$0xf]
      %v268 = vld [vmem:[%s1 + $0x18] sm:$0xf]
      %v269 = vld [vmem:[%s1 + $0x1c] sm:$0xf]
      %v270 = vld [vmem:[%s1 + $0x20] sm:$0xf]
      %v271 = vld [vmem:[%s1 + $0x24] sm:$0xf]
      %v272 = vld [vmem:[%s1 + $0x28] sm:$0xf]
      %v273 = vld [vmem:[%s1 + $0x2c] sm:$0xf]
      %v274 = vld [vmem:[%s1 + $0x30] sm:$0xf]
      %v275 = vld [vmem:[%s1 + $0x34] sm:$0xf]
      %v276 = vld [vmem:[%s1 + $0x38] sm:$0xf]
      %v277 = vld [vmem:[%s1 + $0x3c] sm:$0xf]
      %v278 = vld [vmem:[%s1 + $0x40] sm:$0xf]
      %v279 = vld [vmem:[%s1 + $0x44] sm:$0xf]
      %v280 = vld [vmem:[%s1 + $0x48] sm:$0xf]
      %v281 = vld [vmem:[%s1 + $0x4c] sm:$0xf]
      %v282 = vld [vmem:[%s1 + $0x50] sm:$0xf]
      %v283 = vld [vmem:[%s1 + $0x54] sm:$0xf]
      %v284 = vld [vmem:[%s1 + $0x58] sm:$0xf]
      %v285 = vld [vmem:[%s1 + $0x5c] sm:$0xf]
      %v286 = vld [vmem:[%s1 + $0x60] sm:$0xf]
      %v287 = vld [vmem:[%s1 + $0x64] sm:$0xf]
      %v288 = vld [vmem:[%s1 + $0x68] sm:$0xf]
      %v289 = vld [vmem:[%s1 + $0x6c] sm:$0xf]
      %v290 = vld [vmem:[%s1 + $0x70] sm:$0xf]
      %v291 = vld [vmem:[%s1 + $0x74] sm:$0xf]
      %v292 = vld [vmem:[%s1 + $0x78] sm:$0xf]
      %v293 = vld [vmem:[%s1 + $0x7c] sm:$0xf]
      %v294 = vld [vmem:[%s1 + $0x80] sm:$0xf]
      %v295 = vld [vmem:[%s1 + $0x84] sm:$0xf]
      %v296 = vld [vmem:[%s1 + $0x88] sm:$0xf]
      %v297 = vld [vmem:[%s1 + $0x8c] sm:$0xf]
      %v302 = vunpack.c.l.b16 %v258
      %v303 = vunpack.c.h.b16 %v258
      %v304 = vunpack.c.l.b16 %v259
      %v305 = vunpack.c.l.b16 %v260
      %v306 = vunpack.c.h.b16 %v260
      %v307 = vunpack.c.l.b16 %v261
      %v308 = vpack.c.b16 %v305, %v302
      %v309 = vpack.c.b16 %v306, %v303
      %v310 = vpack.c.b16 %v307, %v304
      %v349 = vunpack.c.l.b16 %v262
      %v350 = vunpack.c.l.b16 %v263
      %v351 = vunpack.c.l.b16 %v264
      %v352 = vunpack.c.l.b16 %v265
      %v353 = vunpack.c.l.b16 %v266
      %v354 = vunpack.c.l.b16 %v267
      %v355 = vunpack.c.l.b16 %v268
      %v356 = vunpack.c.l.b16 %v269
      %v357 = vunpack.c.l.b16 %v270
      %v358 = vunpack.c.l.b16 %v271
      %v359 = vunpack.c.l.b16 %v272
      %v360 = vunpack.c.l.b16 %v273
      %v361 = vunpack.c.l.b16 %v274
      %v362 = vunpack.c.l.b16 %v275
      %v363 = vunpack.c.l.b16 %v276
      %v364 = vunpack.c.l.b16 %v277
      %v365 = vunpack.c.l.b16 %v278
      %v366 = vunpack.c.l.b16 %v279
      %v367 = vunpack.c.l.b16 %v280
      %v368 = vunpack.c.l.b16 %v281
      %v369 = vunpack.c.l.b16 %v282
      %v370 = vunpack.c.l.b16 %v283
      %v371 = vunpack.c.l.b16 %v284
      %v372 = vunpack.c.l.b16 %v285
      %v373 = vunpack.c.l.b16 %v286
      %v374 = vunpack.c.l.b16 %v287
      %v375 = vunpack.c.l.b16 %v288
      %v376 = vunpack.c.l.b16 %v289
      %v377 = vunpack.c.l.b16 %v290
      %v378 = vunpack.c.l.b16 %v291
      %v379 = vunpack.c.l.b16 %v292
      %v380 = vunpack.c.l.b16 %v293
      %v381 = vunpack.c.l.b16 %v294
      %v382 = vunpack.c.l.b16 %v295
      %v383 = vunpack.c.l.b16 %v296
      %v384 = vunpack.c.l.b16 %v297
      %v385 = vpack.c.b16 %v350, %v349
      %v386 = vpack.c.b16 %v352, %v351
      %v387 = vpack.c.b16 %v354, %v353
      %v388 = vpack.c.b16 %v356, %v355
      %v389 = vpack.c.b16 %v358, %v357
      %v390 = vpack.c.b16 %v360, %v359
      %v391 = vpack.c.b16 %v362, %v361
      %v392 = vpack.c.b16 %v364, %v363
      %v393 = vpack.c.b16 %v366, %v365
      %v394 = vpack.c.b16 %v368, %v367
      %v395 = vpack.c.b16 %v370, %v369
      %v396 = vpack.c.b16 %v372, %v371
      %v397 = vpack.c.b16 %v374, %v373
      %v398 = vpack.c.b16 %v376, %v375
      %v399 = vpack.c.b16 %v378, %v377
      %v400 = vpack.c.b16 %v380, %v379
      %v401 = vpack.c.b16 %v382, %v381
      %v402 = vpack.c.b16 %v384, %v383
      %vm421 = vcmask 261120
      %v423 = vsel %vm421, %v310, 0
      %425 = vmatprep.subr.bf16.mxu0 0
      %426 = vmatpush1.bf16.msra.mxu0 %v392
      %427 = vmatprep.subr.bf16.mxu0 0
      %428 = vmatpush1.bf16.msra.mxu0 %v391
      %429 = vmatprep.subr.bf16.mxu0 0
      %430 = vmatpush1.bf16.msra.mxu0 %v390
      %431 = vmatprep.subr.bf16.mxu0 0
      %432 = vmatpush1.bf16.msra.mxu0 %v389
      %433 = vmatprep.subr.bf16.mxu0 0
      %434 = vmatpush1.bf16.msra.mxu0 %v388
      %435 = vmatprep.subr.bf16.mxu0 0
      %436 = vmatpush1.bf16.msra.mxu0 %v387
      %437 = vmatprep.subr.bf16.mxu0 0
      %438 = vmatpush1.bf16.msra.mxu0 %v386
      %439 = vmatprep.subr.bf16.mxu0 0
      %440 = vmatpush1.bf16.msra.mxu0 %v385
      %441 = vmatprep.subr.bf16.mxu0 0
      %442 = vmatpush2.bf16.msra.mxu0 %v400
      %443 = vmatprep.subr.bf16.mxu0 0
      %444 = vmatpush2.bf16.msra.mxu0 %v399
      %445 = vmatprep.subr.bf16.mxu0 0
      %446 = vmatpush2.bf16.msra.mxu0 %v398
      %447 = vmatprep.subr.bf16.mxu0 0
      %448 = vmatpush2.bf16.msra.mxu0 %v397
      %449 = vmatprep.subr.bf16.mxu0 0
      %450 = vmatpush2.bf16.msra.mxu0 %v396
      %451 = vmatprep.subr.bf16.mxu0 0
      %452 = vmatpush2.bf16.msra.mxu0 %v395
      %453 = vmatprep.subr.bf16.mxu0 0
      %454 = vmatpush2.bf16.msra.mxu0 %v394
      %455 = vmatprep.subr.bf16.mxu0 0
      %456 = vmatpush2.bf16.msra.mxu0 %v393
      %457 = vmatprep.mubr.bf16.mxu0 %v309
      %458 = vmatmul.mubr.bf16.gmra.mxu0 %v308
      %v459 = vpop.f32.mrf.mxu0
      %v460 = vadd.f32 0.0, %v459
      %v461 = vpop.f32.mrf.mxu0
      %v462 = vpop.f32.mrf.mxu0
      %v463 = vadd.f32 0.0, %v462
      %v464 = vpop.f32.mrf.mxu0
      %465 = vdwg.mxu0
      %466 = vmatprep.subr.bf16.mxu0 0
      %467 = vmatpush1.bf16.msra.mxu0 0
      %468 = vmatprep.subr.bf16.mxu0 0
      %469 = vmatpush1.bf16.msra.mxu0 0
      %470 = vmatprep.subr.bf16.mxu0 0
      %471 = vmatpush1.bf16.msra.mxu0 0
      %472 = vmatprep.subr.bf16.mxu0 0
      %473 = vmatpush1.bf16.msra.mxu0 0
      %474 = vmatprep.subr.bf16.mxu0 0
      %475 = vmatpush1.bf16.msra.mxu0 0
      %476 = vmatprep.subr.bf16.mxu0 0
      %477 = vmatpush1.bf16.msra.mxu0 0
      %478 = vmatprep.subr.bf16.mxu0 0
      %479 = vmatpush1.bf16.msra.mxu0 %v402
      %480 = vmatprep.subr.bf16.mxu0 0
      %481 = vmatpush1.bf16.msra.mxu0 %v401
      %482 = vmatprep.subr.bf16.mxu0 0
      %483 = vmatpush2.bf16.msra.mxu0 0
      %484 = vmatprep.subr.bf16.mxu0 0
      %485 = vmatpush2.bf16.msra.mxu0 0
      %486 = vmatprep.subr.bf16.mxu0 0
      %487 = vmatpush2.bf16.msra.mxu0 0
      %488 = vmatprep.subr.bf16.mxu0 0
      %489 = vmatpush2.bf16.msra.mxu0 0
      %490 = vmatprep.subr.bf16.mxu0 0
      %491 = vmatpush2.bf16.msra.mxu0 0
      %492 = vmatprep.subr.bf16.mxu0 0
      %493 = vmatpush2.bf16.msra.mxu0 0
      %494 = vmatprep.subr.bf16.mxu0 0
      %495 = vmatpush2.bf16.msra.mxu0 0
      %496 = vmatprep.subr.bf16.mxu0 0
      %497 = vmatpush2.bf16.msra.mxu0 0
      %498 = vmatprep.mubr.bf16.mxu0 0
      %499 = vmatmul.mubr.bf16.gmra.mxu0 %v423
      %v500 = vpop.f32.mrf.mxu0
      %v501 = vadd.f32 %v460, %v500
      %v502 = vpop.f32.mrf.mxu0
      %v503 = vpop.f32.mrf.mxu0
      %v504 = vadd.f32 %v463, %v503
      %v505 = vpop.f32.mrf.mxu0
      %506 = vdwg.mxu0
      %v507 = vpack.c.bf16 %v504, %v501
      %v509 = vunpack.c.l.b16 %v507
      %v510 = vunpack.c.h.b16 %v507
      %v511 = vpack.c.b16 %v509, %v509
      %v512 = vpack.c.b16 %v510, %v510
      %515 = vst [vmem:[%s247] sm:$0xf] %v511
      %516 = vst [vmem:[%s247 + $0x4] sm:$0xf] %v512
      %p517 = scmp.eq.s32.totalorder %s21, 0
      // Predicated region
      $region29: #{generator_forward.13} parent=27 // pred_check
        %p518 = pneg %p517
      $region30: #{generator_forward.13} parent=27 // pred_check_branch
        %520 = sbr.rel (%p518) target = $region32
      $region31: #{generator_forward.13} parent=27 // pred_region
        %521 = vst [vmem:[%s253] sm:$0x1] 0.0
        %522 = vst [vmem:[%s256] sm:$0x1] 0.0
      $region32: #{generator_forward.13} parent=27 // pred_fallthru
        _
      %v523 = vld [vmem:[%s253] sm:$0x1]
      %v524 = vadd.f32 %v501, %v504
      %v525 = vrot.slane %v524, 4
      %v526 = vadd.f32 %v524, %v525
      %v527 = vrot.slane %v526, 2
      %v528 = vadd.f32 %v526, %v527
      %v529 = vrot.slane %v528, 1
      %v530 = vadd.f32 %v528, %v529
      %v531 = vadd.f32 %v523, %v530
      %532 = vst [vmem:[%s253] sm:$0x1] %v531
      %v533 = vld [vmem:[%s256] sm:$0x1]
      %v534 = vmul.f32 %v501, %v501
      %v535 = vmul.f32 %v504, %v504
      %v536 = vadd.f32 %v534, %v535
      %v537 = vrot.slane %v536, 4
      %v538 = vadd.f32 %v536, %v537
      %v539 = vrot.slane %v538, 2
      %v540 = vadd.f32 %v538, %v539
      %v541 = vrot.slane %v540, 1
      %v542 = vadd.f32 %v540, %v541
      %v543 = vadd.f32 %v533, %v542
      %544 = vst [vmem:[%s256] sm:$0x1] %v543
      %s545 = smul.u32 %s20, 4
      %s546 = sadd.s32 %s545, %s21
      %s547 = smul.u32 2, %s546
      %p548 = scmp.lt.s32.totalorder %s547, 15
      %s549 = scalar_select %p548, %s547, 15
      %s550 = smul.addr %s549, 4
      %s551 = scalar_lea.vmem %s2, %s550
      %p552 = scmp.lt.s32.totalorder %s20, 1
      %s553 = scalar_select %p552, %s20, 1
      %s554 = scalar_lea.vmem %s3, %s553
      %p555 = scmp.lt.s32.totalorder %s20, 1
      %s556 = scalar_select %p555, %s20, 1
      %s557 = scalar_lea.vmem %s4, %s556
      // Predicated region
      $region33: #{generator_forward.13} parent=27 // pred_check
        %p558 = pneg %p101
      $region34: #{generator_forward.13} parent=27 // pred_check_branch
        %560 = sbr.rel (%p558) target = $region36
      $region35: #{generator_forward.13} parent=27 // pred_region
        %s561 = smul.u32 %s20, 4
        %s562 = sadd.s32 %s561, %s21
        %s563 = smul.u32 2, %s562
      $region36: #{generator_forward.13} parent=27 // pred_fallthru
        _
      // Predicated region
      $region37: #{generator_forward.13} parent=27 // pred_check
        %p564 = pneg %p127
      $region38: #{generator_forward.13} parent=27 // pred_check_branch
        %566 = sbr.rel (%p564) target = $region40
      $region39: #{generator_forward.13} parent=27 // pred_region
        _
      $region40: #{generator_forward.13} parent=27 // pred_fallthru
        _
      // Predicated region
      $region41: #{generator_forward.13} parent=27 // pred_check
        %p567 = pneg %p153
      $region42: #{generator_forward.13} parent=27 // pred_check_branch
        %569 = sbr.rel (%p567) target = $region44
      $region43: #{generator_forward.13} parent=27 // pred_region
        _
      $region44: #{generator_forward.13} parent=27 // pred_fallthru
        _
    $region28: #{generator_forward.13} parent=5 // pred_fallthru
      _
    %p570 = scmp.le.s32.totalorder 2, %s11
    // Predicated region
    $region45: #{generator_forward.13} parent=5 // pred_check
      %p571 = pneg %p570
    $region46: #{generator_forward.13} parent=5 // pred_check_branch
      %573 = sbr.rel (%p571) target = $region48
    $region47: #{generator_forward.13} parent=5 // pred_region
      %s574 = ssub.s32 %s11, 2
      // Predicated region
      $region49: #{generator_forward.13} parent=47 // pred_check
        %p575 = pneg %p107
      $region50: #{generator_forward.13} parent=47 // pred_check_branch
        %577 = sbr.rel (%p575) target = $region52
      $region51: #{generator_forward.13} parent=47 // pred_region
        %s578 = smul.u32 %s22, 4
        %s579 = sadd.s32 %s578, %s23
        %s580 = smul.u32 2, %s579
        %p581 = scmp.lt.s32.totalorder %s580, 15
        %s582 = scalar_select %p581, %s580, 15
        %s583 = smul.addr %s582, 4
        %s584 = scalar_lea.vmem %s2, %s583
      $region52: #{generator_forward.13} parent=47 // pred_fallthru
        _
      // Predicated region
      $region53: #{generator_forward.13} parent=47 // pred_check
        %p585 = pneg %p133
      $region54: #{generator_forward.13} parent=47 // pred_check_branch
        %587 = sbr.rel (%p585) target = $region56
      $region55: #{generator_forward.13} parent=47 // pred_region
        %p588 = scmp.lt.s32.totalorder %s22, 1
        %s589 = scalar_select %p588, %s22, 1
        %s590 = scalar_lea.vmem %s3, %s589
      $region56: #{generator_forward.13} parent=47 // pred_fallthru
        _
      // Predicated region
      $region57: #{generator_forward.13} parent=47 // pred_check
        %p591 = pneg %p159
      $region58: #{generator_forward.13} parent=47 // pred_check_branch
        %593 = sbr.rel (%p591) target = $region60
      $region59: #{generator_forward.13} parent=47 // pred_region
        %p594 = scmp.lt.s32.totalorder %s22, 1
        %s595 = scalar_select %p594, %s22, 1
        %s596 = scalar_lea.vmem %s4, %s595
      $region60: #{generator_forward.13} parent=47 // pred_fallthru
        _
    $region48: #{generator_forward.13} parent=5 // pred_fallthru
      _
  $region6: #{generator_forward.13} parent=0 // loop_footer
    %s15 = sadd.s32 1, %s11
  $region7: #{generator_forward.13} parent=0 // loop_footer_branch
    %10 = sbr.rel target = $region3
  $region8: #{generator_forward.13} parent=0 // loop_exit
    _

// kernel: tile.53
$region0: #{tile.53}
  #allocation0 [shape = 's32[1]{0}', space=sflag, size = 0x4, scoped, tag = 'scoped memory for tile.53']
  %s0 = inlined_call_operand.vmem [shape: f32[16], index: 0, kind: input, shape index: {}]
  %s1 = inlined_call_operand.vmem [shape: f32[4,16], index: 1, kind: output, shape index: {}]
  // Predicated region
  $region2: #{tile.53} parent=0 // pred_check
    _
  $region3: #{tile.53} parent=0 // pred_check_branch
    %3 = sbr.rel (0) target = $region5
  $region4: #{tile.53} parent=0 // pred_region
    _
  $region5: #{tile.53} parent=0 // pred_fallthru
    _
  %v4 = vld [vmem:[%s0] ss:$0 sm:$0xff]
  %5 = vst [vmem:[%s1] sm:$0xf] %v4

// kernel: tile.54
$region0: #{tile.54}
  %s0 = inlined_call_operand.vmem [shape: f32[4,16], index: 0, kind: input, shape index: {}]
  %s1 = inlined_call_operand.vmem [shape: f32[64], index: 1, kind: output, shape index: {}]
  $region1: #{tile.54} parent=0
    #allocation0 [shape = 'u8[4096]{0}', space=vmem, size = 0x1000, scoped, tag = 'scoped mem for output reshape']
    #allocation1 [shape = 'u8[4096]{0}', space=vmem, size = 0x1000, scoped, tag = 'scoped mem for input reshape']
    %s3 = sshll.u32 1, 4
    %s4 = ssub.s32 %s3, 1
    %v5 = vld [vmem:[%s0] sm:%s4]
    %6 = vst [vmem:[#allocation1] sm:%s4] %v5
    %v7 = vld [vmem:[#allocation1] sm:$0x1]
    %vm8 = vcmask 130048
    %9 = vst.msk [vmem:[#allocation0] sm:$0x1] %vm8, %v7
    %s10 = scalar_lea.vmem [#allocation1], 3
    %v11 = vld [vmem:[%s10] sm:$0x1]
    %12 = vrot.lane.b32.xlu0 %v11, 48
    %v13 = vpop.permute.xlu0 %12
    %vm14 = vcmask 523648
    %15 = vst.msk [vmem:[#allocation0] sm:$0x1] %vm14, %v13
    %s16 = scalar_lea.vmem [#allocation1], 2
    %v17 = vld [vmem:[%s16] sm:$0x1]
    %18 = vrot.lane.b32.xlu0 %v17, 32
    %v19 = vpop.permute.xlu0 %18
    %vm20 = vcmask 392448
    %21 = vst.msk [vmem:[#allocation0] sm:$0x1] %vm20, %v19
    %s22 = scalar_lea.vmem [#allocation1], 1
    %v23 = vld [vmem:[%s22] sm:$0x1]
    %24 = vrot.lane.b32.xlu0 %v23, 16
    %v25 = vpop.permute.xlu0 %24
    %vm26 = vcmask 261248
    %27 = vst.msk [vmem:[#allocation0] sm:$0x1] %vm26, %v25
    %s29 = sshll.u32 1, 1
    %s30 = ssub.s32 %s29, 1
    %v32 = vld [vmem:[#allocation0] sm:%s30]
    %s33 = sshll.u32 1, 1
    %s34 = ssub.s32 %s33, 1
    %35 = vst [vmem:[%s1] sm:%s34] %v32

// kernel: generator_forward.14
$region0: #{generator_forward.14}
  #allocation0 [shape = 'u32[]', space=smem, size = 0x4, offset = 0x4, fixed_abs, tag = 'smem constant byte address 0x4 - core index']
  #allocation1 [shape = 'u32[144,128]{1,0:T(1,128)}', space=vmem, size = 0x12000, scoped, tag = 'internal scratch']
  %s0 = inlined_call_operand.vmem [shape: bf16[128,128], index: 0, kind: input, shape index: {}]
  %s1 = inlined_call_operand.vmem [shape: f32[1,128], index: 1, kind: input, shape index: {}]
  %s2 = inlined_call_operand.vmem [shape: f32[1,128], index: 2, kind: input, shape index: {}]
  %s3 = inlined_call_operand.vmem [shape: bf16[128,128], index: 3, kind: output, shape index: {}]
  %s4 = sld [smem:[#allocation0]]
  $region45: #{generator_forward.14} parent=0
    _
  %s6 = ssub.s32 1, %s4
  %s7 = scalar_select 0, %s6, %s4
  loop: start=0, step=1, limit=10
  $region2: #{generator_forward.14} parent=0 // loop_pre_header
    _
  $region3: #{generator_forward.14} parent=0 // loop_header
    %s9 = sphi 0, %s13
    %p10 = scmp.ge.s32.totalorder %s9, 10
    %s19 = sphi 0, %s21
    %s22 = sphi 0, %s19
    %s23 = sphi 0, %s22
    %s39 = sphi 0, %s23
    %s43 = sphi 0, %s43
    %s45 = sphi 0, %s43
    %s46 = sphi 0, %s45
    %s60 = sphi 0, %s46
    %s64 = sphi 0, %s64
    %s66 = sphi 0, %s64
    %s67 = sphi 0, %s66
    %s81 = sphi 0, %s67
    %s87 = sphi 0, %s89
    %s90 = sphi 0, %s87
    %s91 = sphi 0, %s90
    %s107 = sphi 0, %s91
  $region4: #{generator_forward.14} parent=0 // loop_header_branch
    %12 = sbr.rel (%p10) target = $region8
  $region5: #{generator_forward.14} parent=0 // loop_body
    %s14 = ssub.s32 %s9, 1
    %s15 = ssub.s32 %s9, 2
    %s16 = sadd.s32 %s9, 1
    %s17 = ssub.s32 %s9, %s16
    %p18 = scmp.eq.s32.totalorder %s17, 0
    %s20 = sadd.s32 %s19, 1
    %s21 = scalar_select %p18, %s19, %s20
    %p24 = pneg %p18
    %p25 = scmp.eq.s32.totalorder %s9, 7
    %p26 = por %p24, %p25
    %p27 = scmp.ne.s32.totalorder %s19, %s22
    %p28 = scmp.eq.s32.totalorder %s9, 0
    %p29 = por %p27, %p28
    %p30 = scmp.ne.s32.totalorder %s19, %s22
    %p31 = scmp.eq.s32.totalorder %s14, 7
    %p32 = por %p30, %p31
    %p33 = scmp.ne.s32.totalorder %s22, %s23
    %p34 = scmp.eq.s32.totalorder %s14, 0
    %p35 = por %p33, %p34
    %p36 = scmp.ne.s32.totalorder %s22, %s23
    %p37 = scmp.eq.s32.totalorder %s15, 7
    %p38 = por %p36, %p37
    %p40 = scmp.ne.s32.totalorder %s23, %s39
    %p41 = scmp.eq.s32.totalorder %s15, 0
    %p42 = por %p40, %p41
    %s44 = sadd.s32 %s43, 1
    %p47 = scmp.eq.s32.totalorder %s9, 7
    %p48 = scmp.ne.s32.totalorder %s43, %s45
    %p49 = scmp.eq.s32.totalorder %s9, 0
    %p50 = por %p48, %p49
    %p51 = scmp.ne.s32.totalorder %s43, %s45
    %p52 = scmp.eq.s32.totalorder %s14, 7
    %p53 = por %p51, %p52
    %p54 = scmp.ne.s32.totalorder %s45, %s46
    %p55 = scmp.eq.s32.totalorder %s14, 0
    %p56 = por %p54, %p55
    %p57 = scmp.ne.s32.totalorder %s45, %s46
    %p58 = scmp.eq.s32.totalorder %s15, 7
    %p59 = por %p57, %p58
    %p61 = scmp.ne.s32.totalorder %s46, %s60
    %p62 = scmp.eq.s32.totalorder %s15, 0
    %p63 = por %p61, %p62
    %s65 = sadd.s32 %s64, 1
    %p68 = scmp.eq.s32.totalorder %s9, 7
    %p69 = scmp.ne.s32.totalorder %s64, %s66
    %p70 = scmp.eq.s32.totalorder %s9, 0
    %p71 = por %p69, %p70
    %p72 = scmp.ne.s32.totalorder %s64, %s66
    %p73 = scmp.eq.s32.totalorder %s14, 7
    %p74 = por %p72, %p73
    %p75 = scmp.ne.s32.totalorder %s66, %s67
    %p76 = scmp.eq.s32.totalorder %s14, 0
    %p77 = por %p75, %p76
    %p78 = scmp.ne.s32.totalorder %s66, %s67
    %p79 = scmp.eq.s32.totalorder %s15, 7
    %p80 = por %p78, %p79
    %p82 = scmp.ne.s32.totalorder %s67, %s81
    %p83 = scmp.eq.s32.totalorder %s15, 0
    %p84 = por %p82, %p83
    %s85 = ssub.s32 %s9, %s16
    %p86 = scmp.eq.s32.totalorder %s85, 0
    %s88 = sadd.s32 %s87, 1
    %s89 = scalar_select %p86, %s87, %s88
    %p92 = pneg %p86
    %p93 = scmp.eq.s32.totalorder %s9, 7
    %p94 = por %p92, %p93
    %p95 = scmp.ne.s32.totalorder %s87, %s90
    %p96 = scmp.eq.s32.totalorder %s9, 0
    %p97 = por %p95, %p96
    %p98 = scmp.ne.s32.totalorder %s87, %s90
    %p99 = scmp.eq.s32.totalorder %s14, 7
    %p100 = por %p98, %p99
    %p101 = scmp.ne.s32.totalorder %s90, %s91
    %p102 = scmp.eq.s32.totalorder %s14, 0
    %p103 = por %p101, %p102
    %p104 = scmp.ne.s32.totalorder %s90, %s91
    %p105 = scmp.eq.s32.totalorder %s15, 7
    %p106 = por %p104, %p105
    %p108 = scmp.ne.s32.totalorder %s91, %s107
    %p109 = scmp.eq.s32.totalorder %s15, 0
    %p110 = por %p108, %p109
    %p111 = scmp.le.s32.totalorder 1, %s9
    %p112 = scmp.lt.s32.totalorder %s9, 9
    %p113 = pnand %p111, %p112
    %p114 = pneg %p113
    // Predicated region
    $region9: #{generator_forward.14} parent=5 // pred_check
      _
    $region10: #{generator_forward.14} parent=5 // pred_check_branch
      %116 = sbr.rel (%p113) target = $region12
    $region11: #{generator_forward.14} parent=5 // pred_region
      %s117 = ssub.s32 %s9, 1
      // Predicated region
      $region13: #{generator_forward.14} parent=11 // pred_check
        %p118 = pneg %p56
      $region14: #{generator_forward.14} parent=11 // pred_check_branch
        %120 = sbr.rel (%p118) target = $region16
      $region15: #{generator_forward.14} parent=11 // pred_region
        _
      $region16: #{generator_forward.14} parent=11 // pred_fallthru
        _
      // Predicated region
      $region17: #{generator_forward.14} parent=11 // pred_check
        %p121 = pneg %p77
      $region18: #{generator_forward.14} parent=11 // pred_check_branch
        %123 = sbr.rel (%p121) target = $region20
      $region19: #{generator_forward.14} parent=11 // pred_region
        _
      $region20: #{generator_forward.14} parent=11 // pred_fallthru
        _
    $region12: #{generator_forward.14} parent=5 // pred_fallthru
      _
    %p124 = scmp.lt.s32.totalorder %s9, 8
    // Predicated region
    $region21: #{generator_forward.14} parent=5 // pred_check
      %p125 = pneg %p124
    $region22: #{generator_forward.14} parent=5 // pred_check_branch
      %127 = sbr.rel (%p125) target = $region24
    $region23: #{generator_forward.14} parent=5 // pred_region
      // Predicated region
      $region25: #{generator_forward.14} parent=23 // pred_check
        %p128 = pneg %p29
      $region26: #{generator_forward.14} parent=23 // pred_check_branch
        %130 = sbr.rel (%p128) target = $region28
      $region27: #{generator_forward.14} parent=23 // pred_region
        %s131 = smul.u32 2, %s9
        %p132 = scmp.lt.s32.totalorder %s131, 15
        %s133 = scalar_select %p132, %s131, 15
        %s134 = smul.addr %s133, 4
        %s135 = scalar_lea.vmem %s0, %s134
        %s136 = smul.u32 2, %s9
      $region28: #{generator_forward.14} parent=23 // pred_fallthru
        _
    $region24: #{generator_forward.14} parent=5 // pred_fallthru
      _
    %p137 = scmp.le.s32.totalorder 1, %s9
    %p138 = scmp.lt.s32.totalorder %s9, 9
    %p139 = pnand %p137, %p138
    %p140 = pneg %p139
    // Predicated region
    $region29: #{generator_forward.14} parent=5 // pred_check
      _
    $region30: #{generator_forward.14} parent=5 // pred_check_branch
      %142 = sbr.rel (%p139) target = $region32
    $region31: #{generator_forward.14} parent=5 // pred_region
      %s143 = ssub.s32 %s9, 1
      %s144 = smul.u32 2, %s14
      %p145 = scmp.lt.s32.totalorder %s144, 15
      %s146 = scalar_select %p145, %s144, 15
      %s147 = smul.addr %s146, 4
      %s148 = scalar_lea.vmem %s0, %s147
      %p149 = pneg %p35
      %p150 = pneg %p32
      %p151 = pneg %p56
      %p152 = pneg %p53
      %p153 = pneg %p77
      %p154 = pneg %p74
      %p155 = pneg %p103
      %p156 = pneg %p100
      %s157 = smul.u32 2, %s14
      %p158 = scmp.lt.s32.totalorder %s157, 15
      %s159 = scalar_select %p158, %s157, 15
      %s160 = smul.addr %s159, 4
      %s161 = scalar_lea.vmem %s3, %s160
      %s162 = smul.u32 2, %s14
      %p163 = scmp.lt.s32.totalorder %s162, 15
      %s164 = scalar_select %p163, %s162, 15
      %s165 = smul.addr %s164, 4
      %s166 = scalar_lea.vmem %s0, %s165
      %s167 = smul.u32 2, %s14
      %s168 = smul.u32 2, %s14
      %p169 = scmp.lt.s32.totalorder %s168, 15
      %s170 = scalar_select %p169, %s168, 15
      %s171 = smul.addr %s170, 4
      %s172 = scalar_lea.vmem %s3, %s171
      %s173 = smul.u32 2, %s14
      %v174 = vld [vmem:[%s166] sm:$0xf]
      %v175 = vld [vmem:[%s166 + $0x4] sm:$0xf]
      %v176 = vunpack.c.l.bf16 %v174
      %v177 = vunpack.c.l.bf16 %v175
      %v178 = vld [vmem:[%s1] sm:$0x1]
      %v180 = vlaneseq
      %v181 = vshrl.u32 %v180, 7
      %v182 = vsub.s32 0, %v181
      %v183 = vrot.slane %v178, %v182
      %v185 = vmul.f32 %v176, %v183
      %v186 = vmul.f32 %v177, %v183
      %v187 = vld [vmem:[%s2] sm:$0x1]
      %v189 = vlaneseq
      %v190 = vshrl.u32 %v189, 7
      %v191 = vsub.s32 0, %v190
      %v192 = vrot.slane %v187, %v191
      %v194 = vadd.f32 %v185, %v192
      %v195 = vadd.f32 %v186, %v192
      %v196 = vmax.f32 %v194, 0.0
      %v197 = vmax.f32 %v195, 0.0
      %v198 = vpack.c.bf16 %v197, %v196
      %v200 = vunpack.c.l.b16 %v198
      %v201 = vunpack.c.h.b16 %v198
      %v202 = vpack.c.b16 %v200, %v200
      %v203 = vpack.c.b16 %v201, %v201
      %206 = vst [vmem:[%s172] sm:$0xf] %v202
      %207 = vst [vmem:[%s172 + $0x4] sm:$0xf] %v203
      %s208 = smul.u32 2, %s14
      %p209 = scmp.lt.s32.totalorder %s208, 15
      %s210 = scalar_select %p209, %s208, 15
      %s211 = smul.addr %s210, 4
      %s212 = scalar_lea.vmem %s3, %s211
      // Predicated region
      $region33: #{generator_forward.14} parent=31 // pred_check
        %p213 = pneg %p100
      $region34: #{generator_forward.14} parent=31 // pred_check_branch
        %215 = sbr.rel (%p213) target = $region36
      $region35: #{generator_forward.14} parent=31 // pred_region
        %s216 = smul.u32 2, %s14
      $region36: #{generator_forward.14} parent=31 // pred_fallthru
        _
    $region32: #{generator_forward.14} parent=5 // pred_fallthru
      _
    %p217 = scmp.le.s32.totalorder 2, %s9
    // Predicated region
    $region37: #{generator_forward.14} parent=5 // pred_check
      %p218 = pneg %p217
    $region38: #{generator_forward.14} parent=5 // pred_check_branch
      %220 = sbr.rel (%p218) target = $region40
    $region39: #{generator_forward.14} parent=5 // pred_region
      %s221 = ssub.s32 %s9, 2
      // Predicated region
      $region41: #{generator_forward.14} parent=39 // pred_check
        %p222 = pneg %p106
      $region42: #{generator_forward.14} parent=39 // pred_check_branch
        %224 = sbr.rel (%p222) target = $region44
      $region43: #{generator_forward.14} parent=39 // pred_region
        %s225 = smul.u32 2, %s15
        %p226 = scmp.lt.s32.totalorder %s225, 15
        %s227 = scalar_select %p226, %s225, 15
        %s228 = smul.addr %s227, 4
        %s229 = scalar_lea.vmem %s3, %s228
      $region44: #{generator_forward.14} parent=39 // pred_fallthru
        _
    $region40: #{generator_forward.14} parent=5 // pred_fallthru
      _
  $region6: #{generator_forward.14} parent=0 // loop_footer
    %s13 = sadd.s32 1, %s9
  $region7: #{generator_forward.14} parent=0 // loop_footer_branch
    %8 = sbr.rel target = $region3
  $region8: #{generator_forward.14} parent=0 // loop_exit
    _

// kernel: generator_forward.15
$region0: #{generator_forward.15}
  #allocation0 [shape = 'u32[]', space=smem, size = 0x4, offset = 0x4, fixed_abs, tag = 'smem constant byte address 0x4 - core index']
  #allocation1 [shape = 'u32[144,128]{1,0:T(1,128)}', space=vmem, size = 0x12000, scoped, tag = 'internal scratch']
  %s0 = inlined_call_operand.vmem [shape: bf16[512,144], index: 0, kind: input, shape index: {}]
  %s1 = inlined_call_operand.vmem [shape: bf16[144,128], index: 1, kind: input, shape index: {}]
  %s2 = inlined_call_operand.vmem [shape: bf16[512,128], index: 2, kind: output, shape index: {0}]
  %s3 = inlined_call_operand.vmem [shape: f32[2,1,128], index: 3, kind: output, shape index: {1}]
  %s4 = inlined_call_operand.vmem [shape: f32[2,1,128], index: 4, kind: output, shape index: {2}]
  %5 = xla_tuple %s2, %s3, %s4
  %s6 = sld [smem:[#allocation0]]
  $region61: #{generator_forward.15} parent=0
    _
  %s8 = ssub.s32 1, %s6
  %s9 = scalar_select 0, %s8, %s6
  loop: start=0, step=1, limit=10
  $region2: #{generator_forward.15} parent=0 // loop_pre_header
    _
  $region3: #{generator_forward.15} parent=0 // loop_header
    %s11 = sphi 0, %s15
    %p12 = scmp.ge.s32.totalorder %s11, 10
    %s18 = sphi 0, %s30
    %s19 = sphi 0, %s26
    %s20 = sphi 0, %s18
    %s21 = sphi 0, %s19
    %s22 = sphi 0, %s20
    %s23 = sphi 0, %s21
    %s37 = sphi 0, %s39
    %s40 = sphi 0, %s37
    %s41 = sphi 0, %s40
    %s57 = sphi 0, %s41
    %s61 = sphi 0, %s61
    %s63 = sphi 0, %s61
    %s64 = sphi 0, %s63
    %s78 = sphi 0, %s64
    %s88 = sphi 0, %s90
    %s91 = sphi 0, %s88
    %s92 = sphi 0, %s91
    %s108 = sphi 0, %s92
    %s114 = sphi 0, %s116
    %s117 = sphi 0, %s114
    %s118 = sphi 0, %s117
    %s134 = sphi 0, %s118
    %s140 = sphi 0, %s142
    %s143 = sphi 0, %s140
    %s144 = sphi 0, %s143
    %s160 = sphi 0, %s144
  $region4: #{generator_forward.15} parent=0 // loop_header_branch
    %14 = sbr.rel (%p12) target = $region8
  $region5: #{generator_forward.15} parent=0 // loop_body
    %s16 = ssub.s32 %s11, 1
    %s17 = ssub.s32 %s11, 2
    %s24 = sadd.s32 1, %s19
    %p25 = scmp.ge.s32.totalorder %s24, 4
    %s26 = scalar_select %p25, 0, %s24
    %s27 = sadd.s32 1, %s18
    %s28 = scalar_select %p25, %s27, %s18
    %p29 = scmp.ge.s32.totalorder %s28, 2
    %s30 = scalar_select %p29, 0, %s28
    %s31 = smul.u32 %s18, 4
    %s32 = sadd.s32 %s31, %s19
    %s33 = smul.u32 %s30, 4
    %s34 = sadd.s32 %s33, %s26
    %s35 = ssub.s32 %s32, %s34
    %p36 = scmp.eq.s32.totalorder %s35, 0
    %s38 = sadd.s32 %s37, 1
    %s39 = scalar_select %p36, %s37, %s38
    %p42 = pneg %p36
    %p43 = scmp.eq.s32.totalorder %s11, 7
    %p44 = por %p42, %p43
    %p45 = scmp.ne.s32.totalorder %s37, %s40
    %p46 = scmp.eq.s32.totalorder %s11, 0
    %p47 = por %p45, %p46
    %p48 = scmp.ne.s32.totalorder %s37, %s40
    %p49 = scmp.eq.s32.totalorder %s16, 7
    %p50 = por %p48, %p49
    %p51 = scmp.ne.s32.totalorder %s40, %s41
    %p52 = scmp.eq.s32.totalorder %s16, 0
    %p53 = por %p51, %p52
    %p54 = scmp.ne.s32.totalorder %s40, %s41
    %p55 = scmp.eq.s32.totalorder %s17, 7
    %p56 = por %p54, %p55
    %p58 = scmp.ne.s32.totalorder %s41, %s57
    %p59 = scmp.eq.s32.totalorder %s17, 0
    %p60 = por %p58, %p59
    %s62 = sadd.s32 %s61, 1
    %p65 = scmp.eq.s32.totalorder %s11, 7
    %p66 = scmp.ne.s32.totalorder %s61, %s63
    %p67 = scmp.eq.s32.totalorder %s11, 0
    %p68 = por %p66, %p67
    %p69 = scmp.ne.s32.totalorder %s61, %s63
    %p70 = scmp.eq.s32.totalorder %s16, 7
    %p71 = por %p69, %p70
    %p72 = scmp.ne.s32.totalorder %s63, %s64
    %p73 = scmp.eq.s32.totalorder %s16, 0
    %p74 = por %p72, %p73
    %p75 = scmp.ne.s32.totalorder %s63, %s64
    %p76 = scmp.eq.s32.totalorder %s17, 7
    %p77 = por %p75, %p76
    %p79 = scmp.ne.s32.totalorder %s64, %s78
    %p80 = scmp.eq.s32.totalorder %s17, 0
    %p81 = por %p79, %p80
    %s82 = smul.u32 %s18, 4
    %s83 = sadd.s32 %s82, %s19
    %s84 = smul.u32 %s30, 4
    %s85 = sadd.s32 %s84, %s26
    %s86 = ssub.s32 %s83, %s85
    %p87 = scmp.eq.s32.totalorder %s86, 0
    %s89 = sadd.s32 %s88, 1
    %s90 = scalar_select %p87, %s88, %s89
    %p93 = pneg %p87
    %p94 = scmp.eq.s32.totalorder %s11, 7
    %p95 = por %p93, %p94
    %p96 = scmp.ne.s32.totalorder %s88, %s91
    %p97 = scmp.eq.s32.totalorder %s11, 0
    %p98 = por %p96, %p97
    %p99 = scmp.ne.s32.totalorder %s88, %s91
    %p100 = scmp.eq.s32.totalorder %s16, 7
    %p101 = por %p99, %p100
    %p102 = scmp.ne.s32.totalorder %s91, %s92
    %p103 = scmp.eq.s32.totalorder %s16, 0
    %p104 = por %p102, %p103
    %p105 = scmp.ne.s32.totalorder %s91, %s92
    %p106 = scmp.eq.s32.totalorder %s17, 7
    %p107 = por %p105, %p106
    %p109 = scmp.ne.s32.totalorder %s92, %s108
    %p110 = scmp.eq.s32.totalorder %s17, 0
    %p111 = por %p109, %p110
    %s112 = ssub.s32 %s18, %s30
    %p113 = scmp.eq.s32.totalorder %s112, 0
    %s115 = sadd.s32 %s114, 1
    %s116 = scalar_select %p113, %s114, %s115
    %p119 = pneg %p113
    %p120 = scmp.eq.s32.totalorder %s11, 7
    %p121 = por %p119, %p120
    %p122 = scmp.ne.s32.totalorder %s114, %s117
    %p123 = scmp.eq.s32.totalorder %s11, 0
    %p124 = por %p122, %p123
    %p125 = scmp.ne.s32.totalorder %s114, %s117
    %p126 = scmp.eq.s32.totalorder %s16, 7
    %p127 = por %p125, %p126
    %p128 = scmp.ne.s32.totalorder %s117, %s118
    %p129 = scmp.eq.s32.totalorder %s16, 0
    %p130 = por %p128, %p129
    %p131 = scmp.ne.s32.totalorder %s117, %s118
    %p132 = scmp.eq.s32.totalorder %s17, 7
    %p133 = por %p131, %p132
    %p135 = scmp.ne.s32.totalorder %s118, %s134
    %p136 = scmp.eq.s32.totalorder %s17, 0
    %p137 = por %p135, %p136
    %s138 = ssub.s32 %s18, %s30
    %p139 = scmp.eq.s32.totalorder %s138, 0
    %s141 = sadd.s32 %s140, 1
    %s142 = scalar_select %p139, %s140, %s141
    %p145 = pneg %p139
    %p146 = scmp.eq.s32.totalorder %s11, 7
    %p147 = por %p145, %p146
    %p148 = scmp.ne.s32.totalorder %s140, %s143
    %p149 = scmp.eq.s32.totalorder %s11, 0
    %p150 = por %p148, %p149
    %p151 = scmp.ne.s32.totalorder %s140, %s143
    %p152 = scmp.eq.s32.totalorder %s16, 7
    %p153 = por %p151, %p152
    %p154 = scmp.ne.s32.totalorder %s143, %s144
    %p155 = scmp.eq.s32.totalorder %s16, 0
    %p156 = por %p154, %p155
    %p157 = scmp.ne.s32.totalorder %s143, %s144
    %p158 = scmp.eq.s32.totalorder %s17, 7
    %p159 = por %p157, %p158
    %p161 = scmp.ne.s32.totalorder %s144, %s160
    %p162 = scmp.eq.s32.totalorder %s17, 0
    %p163 = por %p161, %p162
    %p164 = scmp.le.s32.totalorder 1, %s11
    %p165 = scmp.lt.s32.totalorder %s11, 9
    %p166 = pnand %p164, %p165
    %p167 = pneg %p166
    // Predicated region
    $region9: #{generator_forward.15} parent=5 // pred_check
      _
    $region10: #{generator_forward.15} parent=5 // pred_check_branch
      %169 = sbr.rel (%p166) target = $region12
    $region11: #{generator_forward.15} parent=5 // pred_region
      %s170 = ssub.s32 %s11, 1
      // Predicated region
      $region13: #{generator_forward.15} parent=11 // pred_check
        %p171 = pneg %p74
      $region14: #{generator_forward.15} parent=11 // pred_check_branch
        %173 = sbr.rel (%p171) target = $region16
      $region15: #{generator_forward.15} parent=11 // pred_region
        _
      $region16: #{generator_forward.15} parent=11 // pred_fallthru
        _
    $region12: #{generator_forward.15} parent=5 // pred_fallthru
      _
    %p174 = scmp.lt.s32.totalorder %s11, 8
    // Predicated region
    $region17: #{generator_forward.15} parent=5 // pred_check
      %p175 = pneg %p174
    $region18: #{generator_forward.15} parent=5 // pred_check_branch
      %177 = sbr.rel (%p175) target = $region20
    $region19: #{generator_forward.15} parent=5 // pred_region
      // Predicated region
      $region21: #{generator_forward.15} parent=19 // pred_check
        %p178 = pneg %p47
      $region22: #{generator_forward.15} parent=19 // pred_check_branch
        %180 = sbr.rel (%p178) target = $region24
      $region23: #{generator_forward.15} parent=19 // pred_region
        %s181 = smul.u32 %s18, 4
        %s182 = sadd.s32 %s181, %s19
        %s183 = smul.u32 8, %s182
        %p184 = scmp.lt.s32.totalorder %s183, 63
        %s185 = scalar_select %p184, %s183, 63
        %s186 = smul.addr %s185, 2
        %s187 = smul.addr %s186, 4
        %s188 = scalar_lea.vmem %s0, %s187
        %s189 = smul.u32 %s18, 4
        %s190 = sadd.s32 %s189, %s19
        %s191 = smul.u32 8, %s190
      $region24: #{generator_forward.15} parent=19 // pred_fallthru
        _
    $region20: #{generator_forward.15} parent=5 // pred_fallthru
      _
    %p192 = scmp.le.s32.totalorder 1, %s11
    %p193 = scmp.lt.s32.totalorder %s11, 9
    %p194 = pnand %p192, %p193
    %p195 = pneg %p194
    // Predicated region
    $region25: #{generator_forward.15} parent=5 // pred_check
      _
    $region26: #{generator_forward.15} parent=5 // pred_check_branch
      %197 = sbr.rel (%p194) target = $region28
    $region27: #{generator_forward.15} parent=5 // pred_region
      %s198 = ssub.s32 %s11, 1
      %s199 = smul.u32 %s20, 4
      %s200 = sadd.s32 %s199, %s21
      %s201 = smul.u32 8, %s200
      %p202 = scmp.lt.s32.totalorder %s201, 63
      %s203 = scalar_select %p202, %s201, 63
      %s204 = smul.addr %s203, 2
      %s205 = smul.addr %s204, 4
      %s206 = scalar_lea.vmem %s0, %s205
      %p207 = pneg %p53
      %p208 = pneg %p50
      %p209 = pneg %p74
      %p210 = pneg %p71
      %p211 = pneg %p104
      %p212 = pneg %p101
      %s213 = smul.u32 %s20, 4
      %s214 = sadd.s32 %s213, %s21
      %s215 = smul.u32 8, %s214
      %p216 = scmp.lt.s32.totalorder %s215, 63
      %s217 = scalar_select %p216, %s215, 63
      %s218 = smul.addr %s217, 4
      %s219 = scalar_lea.vmem %s2, %s218
      %p220 = pneg %p130
      %p221 = pneg %p127
      %p222 = scmp.lt.s32.totalorder %s20, 1
      %s223 = scalar_select %p222, %s20, 1
      %s224 = scalar_lea.vmem %s3, %s223
      %p225 = pneg %p156
      %p226 = pneg %p153
      %p227 = scmp.lt.s32.totalorder %s20, 1
      %s228 = scalar_select %p227, %s20, 1
      %s229 = scalar_lea.vmem %s4, %s228
      %s230 = smul.u32 %s20, 4
      %s231 = sadd.s32 %s230, %s21
      %s232 = smul.u32 8, %s231
      %p233 = scmp.lt.s32.totalorder %s232, 63
      %s234 = scalar_select %p233, %s232, 63
      %s235 = smul.addr %s234, 2
      %s236 = smul.addr %s235, 4
      %s237 = scalar_lea.vmem %s0, %s236
      %s238 = smul.u32 %s20, 4
      %s239 = sadd.s32 %s238, %s21
      %s240 = smul.u32 8, %s239
      %s241 = smul.u32 %s20, 4
      %s242 = sadd.s32 %s241, %s21
      %s243 = smul.u32 8, %s242
      %p244 = scmp.lt.s32.totalorder %s243, 63
      %s245 = scalar_select %p244, %s243, 63
      %s246 = smul.addr %s245, 4
      %s247 = scalar_lea.vmem %s2, %s246
      %s248 = smul.u32 %s20, 4
      %s249 = sadd.s32 %s248, %s21
      %s250 = smul.u32 8, %s249
      %p251 = scmp.lt.s32.totalorder %s20, 1
      %s252 = scalar_select %p251, %s20, 1
      %s253 = scalar_lea.vmem %s3, %s252
      %p254 = scmp.lt.s32.totalorder %s20, 1
      %s255 = scalar_select %p254, %s20, 1
      %s256 = scalar_lea.vmem %s4, %s255
      %v258 = vld [vmem:[%s237] sm:$0xff]
      %v259 = vld [vmem:[%s237 + $0x8] sm:$0xff]
      %v260 = vld [vmem:[%s237 + $0x10] sm:$0xff]
      %v261 = vld [vmem:[%s237 + $0x18] sm:$0xff]
      %v262 = vld [vmem:[%s237 + $0x20] sm:$0xff]
      %v263 = vld [vmem:[%s237 + $0x28] sm:$0xff]
      %v264 = vld [vmem:[%s237 + $0x30] sm:$0xff]
      %v265 = vld [vmem:[%s237 + $0x38] sm:$0xff]
      %v266 = vld [vmem:[%s1] sm:$0xf]
      %v267 = vld [vmem:[%s1 + $0x4] sm:$0xf]
      %v268 = vld [vmem:[%s1 + $0x8] sm:$0xf]
      %v269 = vld [vmem:[%s1 + $0xc] sm:$0xf]
      %v270 = vld [vmem:[%s1 + $0x10] sm:$0xf]
      %v271 = vld [vmem:[%s1 + $0x14] sm:$0xf]
      %v272 = vld [vmem:[%s1 + $0x18] sm:$0xf]
      %v273 = vld [vmem:[%s1 + $0x1c] sm:$0xf]
      %v274 = vld [vmem:[%s1 + $0x20] sm:$0xf]
      %v275 = vld [vmem:[%s1 + $0x24] sm:$0xf]
      %v276 = vld [vmem:[%s1 + $0x28] sm:$0xf]
      %v277 = vld [vmem:[%s1 + $0x2c] sm:$0xf]
      %v278 = vld [vmem:[%s1 + $0x30] sm:$0xf]
      %v279 = vld [vmem:[%s1 + $0x34] sm:$0xf]
      %v280 = vld [vmem:[%s1 + $0x38] sm:$0xf]
      %v281 = vld [vmem:[%s1 + $0x3c] sm:$0xf]
      %v282 = vld [vmem:[%s1 + $0x40] sm:$0xf]
      %v283 = vld [vmem:[%s1 + $0x44] sm:$0xf]
      %v292 = vunpack.c.l.b16 %v258
      %v293 = vunpack.c.h.b16 %v258
      %v294 = vunpack.c.l.b16 %v259
      %v295 = vunpack.c.h.b16 %v259
      %v296 = vunpack.c.l.b16 %v260
      %v297 = vunpack.c.h.b16 %v260
      %v298 = vunpack.c.l.b16 %v261
      %v299 = vunpack.c.h.b16 %v261
      %v300 = vunpack.c.l.b16 %v262
      %v301 = vunpack.c.h.b16 %v262
      %v302 = vunpack.c.l.b16 %v263
      %v303 = vunpack.c.h.b16 %v263
      %v304 = vunpack.c.l.b16 %v264
      %v305 = vunpack.c.h.b16 %v264
      %v306 = vunpack.c.l.b16 %v265
      %v307 = vunpack.c.h.b16 %v265
      %v308 = vpack.c.b16 %v294, %v292
      %v309 = vpack.c.b16 %v295, %v293
      %v310 = vpack.c.b16 %v298, %v296
      %v311 = vpack.c.b16 %v299, %v297
      %v312 = vpack.c.b16 %v302, %v300
      %v313 = vpack.c.b16 %v303, %v301
      %v314 = vpack.c.b16 %v306, %v304
      %v315 = vpack.c.b16 %v307, %v305
      %v338 = vunpack.c.l.b16 %v266
      %v339 = vunpack.c.l.b16 %v267
      %v340 = vunpack.c.l.b16 %v268
      %v341 = vunpack.c.l.b16 %v269
      %v342 = vunpack.c.l.b16 %v270
      %v343 = vunpack.c.l.b16 %v271
      %v344 = vunpack.c.l.b16 %v272
      %v345 = vunpack.c.l.b16 %v273
      %v346 = vunpack.c.l.b16 %v274
      %v347 = vunpack.c.l.b16 %v275
      %v348 = vunpack.c.l.b16 %v276
      %v349 = vunpack.c.l.b16 %v277
      %v350 = vunpack.c.l.b16 %v278
      %v351 = vunpack.c.l.b16 %v279
      %v352 = vunpack.c.l.b16 %v280
      %v353 = vunpack.c.l.b16 %v281
      %v354 = vunpack.c.l.b16 %v282
      %v355 = vunpack.c.l.b16 %v283
      %v356 = vpack.c.b16 %v339, %v338
      %v357 = vpack.c.b16 %v341, %v340
      %v358 = vpack.c.b16 %v343, %v342
      %v359 = vpack.c.b16 %v345, %v344
      %v360 = vpack.c.b16 %v347, %v346
      %v361 = vpack.c.b16 %v349, %v348
      %v362 = vpack.c.b16 %v351, %v350
      %v363 = vpack.c.b16 %v353, %v352
      %v364 = vpack.c.b16 %v355, %v354
      %vm374 = vcmask 130048
      %v376 = vsel %vm374, %v309, 0
      %v379 = vsel %vm374, %v311, 0
      %v382 = vsel %vm374, %v313, 0
      %v385 = vsel %vm374, %v315, 0
      %387 = vmatprep.subr.bf16.mxu0 0
      %388 = vmatpush1.bf16.msra.mxu0 %v363
      %389 = vmatprep.subr.bf16.mxu0 0
      %390 = vmatpush1.bf16.msra.mxu0 %v362
      %391 = vmatprep.subr.bf16.mxu0 0
      %392 = vmatpush1.bf16.msra.mxu0 %v361
      %393 = vmatprep.subr.bf16.mxu0 0
      %394 = vmatpush1.bf16.msra.mxu0 %v360
      %395 = vmatprep.subr.bf16.mxu0 0
      %396 = vmatpush1.bf16.msra.mxu0 %v359
      %397 = vmatprep.subr.bf16.mxu0 0
      %398 = vmatpush1.bf16.msra.mxu0 %v358
      %399 = vmatprep.subr.bf16.mxu0 0
      %400 = vmatpush1.bf16.msra.mxu0 %v357
      %401 = vmatprep.subr.bf16.mxu0 0
      %402 = vmatpush1.bf16.msra.mxu0 %v356
      %403 = vmatprep.subr.bf16.mxu0 0
      %404 = vmatpush2.bf16.msra.mxu0 0
      %405 = vmatprep.subr.bf16.mxu0 0
      %406 = vmatpush2.bf16.msra.mxu0 0
      %407 = vmatprep.subr.bf16.mxu0 0
      %408 = vmatpush2.bf16.msra.mxu0 0
      %409 = vmatprep.subr.bf16.mxu0 0
      %410 = vmatpush2.bf16.msra.mxu0 0
      %411 = vmatprep.subr.bf16.mxu0 0
      %412 = vmatpush2.bf16.msra.mxu0 0
      %413 = vmatprep.subr.bf16.mxu0 0
      %414 = vmatpush2.bf16.msra.mxu0 0
      %415 = vmatprep.subr.bf16.mxu0 0
      %416 = vmatpush2.bf16.msra.mxu0 0
      %417 = vmatprep.subr.bf16.mxu0 0
      %418 = vmatpush2.bf16.msra.mxu0 %v364
      %419 = vmatprep.mubr.bf16.mxu0 %v376
      %420 = vmatmul.mubr.bf16.gmra.mxu0 %v308
      %v421 = vpop.f32.mrf.mxu0
      %v422 = vadd.f32 0.0, %v421
      %v423 = vpop.f32.mrf.mxu0
      %v424 = vpop.f32.mrf.mxu0
      %v425 = vadd.f32 0.0, %v424
      %v426 = vpop.f32.mrf.mxu0
      %427 = vmatprep.mubr.bf16.mxu0 %v379
      %428 = vmatmul.mubr.bf16.gmra.mxu0 %v310
      %v429 = vpop.f32.mrf.mxu0
      %v430 = vadd.f32 0.0, %v429
      %v431 = vpop.f32.mrf.mxu0
      %v432 = vpop.f32.mrf.mxu0
      %v433 = vadd.f32 0.0, %v432
      %v434 = vpop.f32.mrf.mxu0
      %435 = vmatprep.mubr.bf16.mxu0 %v382
      %436 = vmatmul.mubr.bf16.gmra.mxu0 %v312
      %v437 = vpop.f32.mrf.mxu0
      %v438 = vadd.f32 0.0, %v437
      %v439 = vpop.f32.mrf.mxu0
      %v440 = vpop.f32.mrf.mxu0
      %v441 = vadd.f32 0.0, %v440
      %v442 = vpop.f32.mrf.mxu0
      %443 = vmatprep.mubr.bf16.mxu0 %v385
      %444 = vmatmul.mubr.bf16.gmra.mxu0 %v314
      %v445 = vpop.f32.mrf.mxu0
      %v446 = vadd.f32 0.0, %v445
      %v447 = vpop.f32.mrf.mxu0
      %v448 = vpop.f32.mrf.mxu0
      %v449 = vadd.f32 0.0, %v448
      %v450 = vpop.f32.mrf.mxu0
      %451 = vdwg.mxu0
      %v452 = vpack.c.bf16 %v425, %v422
      %v453 = vpack.c.bf16 %v433, %v430
      %v454 = vpack.c.bf16 %v441, %v438
      %v455 = vpack.c.bf16 %v449, %v446
      %v460 = vunpack.c.l.b16 %v452
      %v461 = vunpack.c.h.b16 %v452
      %v462 = vunpack.c.l.b16 %v453
      %v463 = vunpack.c.h.b16 %v453
      %v464 = vunpack.c.l.b16 %v454
      %v465 = vunpack.c.h.b16 %v454
      %v466 = vunpack.c.l.b16 %v455
      %v467 = vunpack.c.h.b16 %v455
      %v468 = vpack.c.b16 %v460, %v460
      %v469 = vpack.c.b16 %v461, %v461
      %v470 = vpack.c.b16 %v462, %v462
      %v471 = vpack.c.b16 %v463, %v463
      %v472 = vpack.c.b16 %v464, %v464
      %v473 = vpack.c.b16 %v465, %v465
      %v474 = vpack.c.b16 %v466, %v466
      %v475 = vpack.c.b16 %v467, %v467
      %484 = vst [vmem:[%s247] sm:$0xf] %v468
      %485 = vst [vmem:[%s247 + $0x4] sm:$0xf] %v469
      %486 = vst [vmem:[%s247 + $0x8] sm:$0xf] %v470
      %487 = vst [vmem:[%s247 + $0xc] sm:$0xf] %v471
      %488 = vst [vmem:[%s247 + $0x10] sm:$0xf] %v472
      %489 = vst [vmem:[%s247 + $0x14] sm:$0xf] %v473
      %490 = vst [vmem:[%s247 + $0x18] sm:$0xf] %v474
      %491 = vst [vmem:[%s247 + $0x1c] sm:$0xf] %v475
      %p492 = scmp.eq.s32.totalorder %s21, 0
      // Predicated region
      $region29: #{generator_forward.15} parent=27 // pred_check
        %p493 = pneg %p492
      $region30: #{generator_forward.15} parent=27 // pred_check_branch
        %495 = sbr.rel (%p493) target = $region32
      $region31: #{generator_forward.15} parent=27 // pred_region
        %496 = vst [vmem:[%s253] sm:$0x1] 0.0
        %497 = vst [vmem:[%s256] sm:$0x1] 0.0
      $region32: #{generator_forward.15} parent=27 // pred_fallthru
        _
      %v498 = vld [vmem:[%s253] sm:$0x1]
      %v499 = vadd.f32 %v422, %v425
      %v500 = vadd.f32 %v499, %v430
      %v501 = vadd.f32 %v500, %v433
      %v502 = vadd.f32 %v501, %v438
      %v503 = vadd.f32 %v502, %v441
      %v504 = vadd.f32 %v503, %v446
      %v505 = vadd.f32 %v504, %v449
      %v506 = vrot.slane %v505, 4
      %v507 = vadd.f32 %v505, %v506
      %v508 = vrot.slane %v507, 2
      %v509 = vadd.f32 %v507, %v508
      %v510 = vrot.slane %v509, 1
      %v511 = vadd.f32 %v509, %v510
      %v512 = vadd.f32 %v498, %v511
      %513 = vst [vmem:[%s253] sm:$0x1] %v512
      %v514 = vld [vmem:[%s256] sm:$0x1]
      %v515 = vmul.f32 %v422, %v422
      %v516 = vmul.f32 %v425, %v425
      %v517 = vmul.f32 %v430, %v430
      %v518 = vmul.f32 %v433, %v433
      %v519 = vmul.f32 %v438, %v438
      %v520 = vmul.f32 %v441, %v441
      %v521 = vmul.f32 %v446, %v446
      %v522 = vmul.f32 %v449, %v449
      %v523 = vadd.f32 %v515, %v516
      %v524 = vadd.f32 %v523, %v517
      %v525 = vadd.f32 %v524, %v518
      %v526 = vadd.f32 %v525, %v519
      %v527 = vadd.f32 %v526, %v520
      %v528 = vadd.f32 %v527, %v521
      %v529 = vadd.f32 %v528, %v522
      %v530 = vrot.slane %v529, 4
      %v531 = vadd.f32 %v529, %v530
      %v532 = vrot.slane %v531, 2
      %v533 = vadd.f32 %v531, %v532
      %v534 = vrot.slane %v533, 1
      %v535 = vadd.f32 %v533, %v534
      %v536 = vadd.f32 %v514, %v535
      %537 = vst [vmem:[%s256] sm:$0x1] %v536
      %s538 = smul.u32 %s20, 4
      %s539 = sadd.s32 %s538, %s21
      %s540 = smul.u32 8, %s539
      %p541 = scmp.lt.s32.totalorder %s540, 63
      %s542 = scalar_select %p541, %s540, 63
      %s543 = smul.addr %s542, 4
      %s544 = scalar_lea.vmem %s2, %s543
      %p545 = scmp.lt.s32.totalorder %s20, 1
      %s546 = scalar_select %p545, %s20, 1
      %s547 = scalar_lea.vmem %s3, %s546
      %p548 = scmp.lt.s32.totalorder %s20, 1
      %s549 = scalar_select %p548, %s20, 1
      %s550 = scalar_lea.vmem %s4, %s549
      // Predicated region
      $region33: #{generator_forward.15} parent=27 // pred_check
        %p551 = pneg %p101
      $region34: #{generator_forward.15} parent=27 // pred_check_branch
        %553 = sbr.rel (%p551) target = $region36
      $region35: #{generator_forward.15} parent=27 // pred_region
        %s554 = smul.u32 %s20, 4
        %s555 = sadd.s32 %s554, %s21
        %s556 = smul.u32 8, %s555
      $region36: #{generator_forward.15} parent=27 // pred_fallthru
        _
      // Predicated region
      $region37: #{generator_forward.15} parent=27 // pred_check
        %p557 = pneg %p127
      $region38: #{generator_forward.15} parent=27 // pred_check_branch
        %559 = sbr.rel (%p557) target = $region40
      $region39: #{generator_forward.15} parent=27 // pred_region
        _
      $region40: #{generator_forward.15} parent=27 // pred_fallthru
        _
      // Predicated region
      $region41: #{generator_forward.15} parent=27 // pred_check
        %p560 = pneg %p153
      $region42: #{generator_forward.15} parent=27 // pred_check_branch
        %562 = sbr.rel (%p560) target = $region44
      $region43: #{generator_forward.15} parent=27 // pred_region
        _
      $region44: #{generator_forward.15} parent=27 // pred_fallthru
        _
    $region28: #{generator_forward.15} parent=5 // pred_fallthru
      _
    %p563 = scmp.le.s32.totalorder 2, %s11
    // Predicated region
    $region45: #{generator_forward.15} parent=5 // pred_check
      %p564 = pneg %p563
    $region46: #{generator_forward.15} parent=5 // pred_check_branch
      %566 = sbr.rel (%p564) target = $region48
    $region47: #{generator_forward.15} parent=5 // pred_region
      %s567 = ssub.s32 %s11, 2
      // Predicated region
      $region49: #{generator_forward.15} parent=47 // pred_check
        %p568 = pneg %p107
      $region50: #{generator_forward.15} parent=47 // pred_check_branch
        %570 = sbr.rel (%p568) target = $region52
      $region51: #{generator_forward.15} parent=47 // pred_region
        %s571 = smul.u32 %s22, 4
        %s572 = sadd.s32 %s571, %s23
        %s573 = smul.u32 8, %s572
        %p574 = scmp.lt.s32.totalorder %s573, 63
        %s575 = scalar_select %p574, %s573, 63
        %s576 = smul.addr %s575, 4
        %s577 = scalar_lea.vmem %s2, %s576
      $region52: #{generator_forward.15} parent=47 // pred_fallthru
        _
      // Predicated region
      $region53: #{generator_forward.15} parent=47 // pred_check
        %p578 = pneg %p133
      $region54: #{generator_forward.15} parent=47 // pred_check_branch
        %580 = sbr.rel (%p578) target = $region56
      $region55: #{generator_forward.15} parent=47 // pred_region
        %p581 = scmp.lt.s32.totalorder %s22, 1
        %s582 = scalar_select %p581, %s22, 1
        %s583 = scalar_lea.vmem %s3, %s582
      $region56: #{generator_forward.15} parent=47 // pred_fallthru
        _
      // Predicated region
      $region57: #{generator_forward.15} parent=47 // pred_check
        %p584 = pneg %p159
      $region58: #{generator_forward.15} parent=47 // pred_check_branch
        %586 = sbr.rel (%p584) target = $region60
      $region59: #{generator_forward.15} parent=47 // pred_region
        %p587 = scmp.lt.s32.totalorder %s22, 1
        %s588 = scalar_select %p587, %s22, 1
        %s589 = scalar_lea.vmem %s4, %s588
      $region60: #{generator_forward.15} parent=47 // pred_fallthru
        _
    $region48: #{generator_forward.15} parent=5 // pred_fallthru
      _
  $region6: #{generator_forward.15} parent=0 // loop_footer
    %s15 = sadd.s32 1, %s11
  $region7: #{generator_forward.15} parent=0 // loop_footer_branch
    %10 = sbr.rel target = $region3
  $region8: #{generator_forward.15} parent=0 // loop_exit
    _

// kernel: tile.63
$region0: #{tile.63}
  #allocation0 [shape = 's32[1]{0}', space=sflag, size = 0x4, scoped, tag = 'scoped memory for tile.63']
  %s0 = inlined_call_operand.vmem [shape: f32[8], index: 0, kind: input, shape index: {}]
  %s1 = inlined_call_operand.vmem [shape: f32[4,8], index: 1, kind: output, shape index: {}]
  // Predicated region
  $region2: #{tile.63} parent=0 // pred_check
    _
  $region3: #{tile.63} parent=0 // pred_check_branch
    %3 = sbr.rel (0) target = $region5
  $region4: #{tile.63} parent=0 // pred_region
    _
  $region5: #{tile.63} parent=0 // pred_fallthru
    _
  %v4 = vld [vmem:[%s0] ss:$0 sm:$0xff]
  %5 = vst [vmem:[%s1] sm:$0xf] %v4

// kernel: tile.64
$region0: #{tile.64}
  %s0 = inlined_call_operand.vmem [shape: f32[4,8], index: 0, kind: input, shape index: {}]
  %s1 = inlined_call_operand.vmem [shape: f32[32], index: 1, kind: output, shape index: {}]
  $region1: #{tile.64} parent=0
    #allocation0 [shape = 'u8[4096]{0}', space=vmem, size = 0x1000, scoped, tag = 'scoped mem for output reshape']
    #allocation1 [shape = 'u8[4096]{0}', space=vmem, size = 0x1000, scoped, tag = 'scoped mem for input reshape']
    %s3 = sshll.u32 1, 4
    %s4 = ssub.s32 %s3, 1
    %v5 = vld [vmem:[%s0] sm:%s4]
    %6 = vst [vmem:[#allocation1] sm:%s4] %v5
    %v7 = vld [vmem:[#allocation1] sm:$0x1]
    %vm8 = vcmask 64512
    %9 = vst.msk [vmem:[#allocation0] sm:$0x1] %vm8, %v7
    %s10 = scalar_lea.vmem [#allocation1], 3
    %v11 = vld [vmem:[%s10] sm:$0x1]
    %12 = vrot.lane.b32.xlu0 %v11, 24
    %v13 = vpop.permute.xlu0 %12
    %vm14 = vcmask 261312
    %15 = vst.msk [vmem:[#allocation0] sm:$0x1] %vm14, %v13
    %s16 = scalar_lea.vmem [#allocation1], 2
    %v17 = vld [vmem:[%s16] sm:$0x1]
    %18 = vrot.lane.b32.xlu0 %v17, 16
    %v19 = vpop.permute.xlu0 %18
    %vm20 = vcmask 195712
    %21 = vst.msk [vmem:[#allocation0] sm:$0x1] %vm20, %v19
    %s22 = scalar_lea.vmem [#allocation1], 1
    %v23 = vld [vmem:[%s22] sm:$0x1]
    %24 = vrot.lane.b32.xlu0 %v23, 8
    %v25 = vpop.permute.xlu0 %24
    %vm26 = vcmask 130112
    %27 = vst.msk [vmem:[#allocation0] sm:$0x1] %vm26, %v25
    %s29 = sshll.u32 1, 1
    %s30 = ssub.s32 %s29, 1
    %v32 = vld [vmem:[#allocation0] sm:%s30]
    %s33 = sshll.u32 1, 1
    %s34 = ssub.s32 %s33, 1
    %35 = vst [vmem:[%s1] sm:%s34] %v32

// kernel: generator_forward.16
$region0: #{generator_forward.16}
  #allocation0 [shape = 'u32[]', space=smem, size = 0x4, offset = 0x4, fixed_abs, tag = 'smem constant byte address 0x4 - core index']
  #allocation1 [shape = 'u32[144,128]{1,0:T(1,128)}', space=vmem, size = 0x12000, scoped, tag = 'internal scratch']
  %s0 = inlined_call_operand.vmem [shape: bf16[512,128], index: 0, kind: input, shape index: {}]
  %s1 = inlined_call_operand.vmem [shape: f32[1,128], index: 1, kind: input, shape index: {}]
  %s2 = inlined_call_operand.vmem [shape: f32[1,128], index: 2, kind: input, shape index: {}]
  %s3 = inlined_call_operand.vmem [shape: bf16[512,128], index: 3, kind: output, shape index: {}]
  %s4 = sld [smem:[#allocation0]]
  $region45: #{generator_forward.16} parent=0
    _
  %s6 = ssub.s32 1, %s4
  %s7 = scalar_select 0, %s6, %s4
  loop: start=0, step=1, limit=10
  $region2: #{generator_forward.16} parent=0 // loop_pre_header
    _
  $region3: #{generator_forward.16} parent=0 // loop_header
    %s9 = sphi 0, %s13
    %p10 = scmp.ge.s32.totalorder %s9, 10
    %s19 = sphi 0, %s21
    %s22 = sphi 0, %s19
    %s23 = sphi 0, %s22
    %s39 = sphi 0, %s23
    %s43 = sphi 0, %s43
    %s45 = sphi 0, %s43
    %s46 = sphi 0, %s45
    %s60 = sphi 0, %s46
    %s64 = sphi 0, %s64
    %s66 = sphi 0, %s64
    %s67 = sphi 0, %s66
    %s81 = sphi 0, %s67
    %s87 = sphi 0, %s89
    %s90 = sphi 0, %s87
    %s91 = sphi 0, %s90
    %s107 = sphi 0, %s91
  $region4: #{generator_forward.16} parent=0 // loop_header_branch
    %12 = sbr.rel (%p10) target = $region8
  $region5: #{generator_forward.16} parent=0 // loop_body
    %s14 = ssub.s32 %s9, 1
    %s15 = ssub.s32 %s9, 2
    %s16 = sadd.s32 %s9, 1
    %s17 = ssub.s32 %s9, %s16
    %p18 = scmp.eq.s32.totalorder %s17, 0
    %s20 = sadd.s32 %s19, 1
    %s21 = scalar_select %p18, %s19, %s20
    %p24 = pneg %p18
    %p25 = scmp.eq.s32.totalorder %s9, 7
    %p26 = por %p24, %p25
    %p27 = scmp.ne.s32.totalorder %s19, %s22
    %p28 = scmp.eq.s32.totalorder %s9, 0
    %p29 = por %p27, %p28
    %p30 = scmp.ne.s32.totalorder %s19, %s22
    %p31 = scmp.eq.s32.totalorder %s14, 7
    %p32 = por %p30, %p31
    %p33 = scmp.ne.s32.totalorder %s22, %s23
    %p34 = scmp.eq.s32.totalorder %s14, 0
    %p35 = por %p33, %p34
    %p36 = scmp.ne.s32.totalorder %s22, %s23
    %p37 = scmp.eq.s32.totalorder %s15, 7
    %p38 = por %p36, %p37
    %p40 = scmp.ne.s32.totalorder %s23, %s39
    %p41 = scmp.eq.s32.totalorder %s15, 0
    %p42 = por %p40, %p41
    %s44 = sadd.s32 %s43, 1
    %p47 = scmp.eq.s32.totalorder %s9, 7
    %p48 = scmp.ne.s32.totalorder %s43, %s45
    %p49 = scmp.eq.s32.totalorder %s9, 0
    %p50 = por %p48, %p49
    %p51 = scmp.ne.s32.totalorder %s43, %s45
    %p52 = scmp.eq.s32.totalorder %s14, 7
    %p53 = por %p51, %p52
    %p54 = scmp.ne.s32.totalorder %s45, %s46
    %p55 = scmp.eq.s32.totalorder %s14, 0
    %p56 = por %p54, %p55
    %p57 = scmp.ne.s32.totalorder %s45, %s46
    %p58 = scmp.eq.s32.totalorder %s15, 7
    %p59 = por %p57, %p58
    %p61 = scmp.ne.s32.totalorder %s46, %s60
    %p62 = scmp.eq.s32.totalorder %s15, 0
    %p63 = por %p61, %p62
    %s65 = sadd.s32 %s64, 1
    %p68 = scmp.eq.s32.totalorder %s9, 7
    %p69 = scmp.ne.s32.totalorder %s64, %s66
    %p70 = scmp.eq.s32.totalorder %s9, 0
    %p71 = por %p69, %p70
    %p72 = scmp.ne.s32.totalorder %s64, %s66
    %p73 = scmp.eq.s32.totalorder %s14, 7
    %p74 = por %p72, %p73
    %p75 = scmp.ne.s32.totalorder %s66, %s67
    %p76 = scmp.eq.s32.totalorder %s14, 0
    %p77 = por %p75, %p76
    %p78 = scmp.ne.s32.totalorder %s66, %s67
    %p79 = scmp.eq.s32.totalorder %s15, 7
    %p80 = por %p78, %p79
    %p82 = scmp.ne.s32.totalorder %s67, %s81
    %p83 = scmp.eq.s32.totalorder %s15, 0
    %p84 = por %p82, %p83
    %s85 = ssub.s32 %s9, %s16
    %p86 = scmp.eq.s32.totalorder %s85, 0
    %s88 = sadd.s32 %s87, 1
    %s89 = scalar_select %p86, %s87, %s88
    %p92 = pneg %p86
    %p93 = scmp.eq.s32.totalorder %s9, 7
    %p94 = por %p92, %p93
    %p95 = scmp.ne.s32.totalorder %s87, %s90
    %p96 = scmp.eq.s32.totalorder %s9, 0
    %p97 = por %p95, %p96
    %p98 = scmp.ne.s32.totalorder %s87, %s90
    %p99 = scmp.eq.s32.totalorder %s14, 7
    %p100 = por %p98, %p99
    %p101 = scmp.ne.s32.totalorder %s90, %s91
    %p102 = scmp.eq.s32.totalorder %s14, 0
    %p103 = por %p101, %p102
    %p104 = scmp.ne.s32.totalorder %s90, %s91
    %p105 = scmp.eq.s32.totalorder %s15, 7
    %p106 = por %p104, %p105
    %p108 = scmp.ne.s32.totalorder %s91, %s107
    %p109 = scmp.eq.s32.totalorder %s15, 0
    %p110 = por %p108, %p109
    %p111 = scmp.le.s32.totalorder 1, %s9
    %p112 = scmp.lt.s32.totalorder %s9, 9
    %p113 = pnand %p111, %p112
    %p114 = pneg %p113
    // Predicated region
    $region9: #{generator_forward.16} parent=5 // pred_check
      _
    $region10: #{generator_forward.16} parent=5 // pred_check_branch
      %116 = sbr.rel (%p113) target = $region12
    $region11: #{generator_forward.16} parent=5 // pred_region
      %s117 = ssub.s32 %s9, 1
      // Predicated region
      $region13: #{generator_forward.16} parent=11 // pred_check
        %p118 = pneg %p56
      $region14: #{generator_forward.16} parent=11 // pred_check_branch
        %120 = sbr.rel (%p118) target = $region16
      $region15: #{generator_forward.16} parent=11 // pred_region
        _
      $region16: #{generator_forward.16} parent=11 // pred_fallthru
        _
      // Predicated region
      $region17: #{generator_forward.16} parent=11 // pred_check
        %p121 = pneg %p77
      $region18: #{generator_forward.16} parent=11 // pred_check_branch
        %123 = sbr.rel (%p121) target = $region20
      $region19: #{generator_forward.16} parent=11 // pred_region
        _
      $region20: #{generator_forward.16} parent=11 // pred_fallthru
        _
    $region12: #{generator_forward.16} parent=5 // pred_fallthru
      _
    %p124 = scmp.lt.s32.totalorder %s9, 8
    // Predicated region
    $region21: #{generator_forward.16} parent=5 // pred_check
      %p125 = pneg %p124
    $region22: #{generator_forward.16} parent=5 // pred_check_branch
      %127 = sbr.rel (%p125) target = $region24
    $region23: #{generator_forward.16} parent=5 // pred_region
      // Predicated region
      $region25: #{generator_forward.16} parent=23 // pred_check
        %p128 = pneg %p29
      $region26: #{generator_forward.16} parent=23 // pred_check_branch
        %130 = sbr.rel (%p128) target = $region28
      $region27: #{generator_forward.16} parent=23 // pred_region
        %s131 = smul.u32 8, %s9
        %p132 = scmp.lt.s32.totalorder %s131, 63
        %s133 = scalar_select %p132, %s131, 63
        %s134 = smul.addr %s133, 4
        %s135 = scalar_lea.vmem %s0, %s134
        %s136 = smul.u32 8, %s9
      $region28: #{generator_forward.16} parent=23 // pred_fallthru
        _
    $region24: #{generator_forward.16} parent=5 // pred_fallthru
      _
    %p137 = scmp.le.s32.totalorder 1, %s9
    %p138 = scmp.lt.s32.totalorder %s9, 9
    %p139 = pnand %p137, %p138
    %p140 = pneg %p139
    // Predicated region
    $region29: #{generator_forward.16} parent=5 // pred_check
      _
    $region30: #{generator_forward.16} parent=5 // pred_check_branch
      %142 = sbr.rel (%p139) target = $region32
    $region31: #{generator_forward.16} parent=5 // pred_region
      %s143 = ssub.s32 %s9, 1
      %s144 = smul.u32 8, %s14
      %p145 = scmp.lt.s32.totalorder %s144, 63
      %s146 = scalar_select %p145, %s144, 63
      %s147 = smul.addr %s146, 4
      %s148 = scalar_lea.vmem %s0, %s147
      %p149 = pneg %p35
      %p150 = pneg %p32
      %p151 = pneg %p56
      %p152 = pneg %p53
      %p153 = pneg %p77
      %p154 = pneg %p74
      %p155 = pneg %p103
      %p156 = pneg %p100
      %s157 = smul.u32 8, %s14
      %p158 = scmp.lt.s32.totalorder %s157, 63
      %s159 = scalar_select %p158, %s157, 63
      %s160 = smul.addr %s159, 4
      %s161 = scalar_lea.vmem %s3, %s160
      %s162 = smul.u32 8, %s14
      %p163 = scmp.lt.s32.totalorder %s162, 63
      %s164 = scalar_select %p163, %s162, 63
      %s165 = smul.addr %s164, 4
      %s166 = scalar_lea.vmem %s0, %s165
      %s167 = smul.u32 8, %s14
      %s168 = smul.u32 8, %s14
      %p169 = scmp.lt.s32.totalorder %s168, 63
      %s170 = scalar_select %p169, %s168, 63
      %s171 = smul.addr %s170, 4
      %s172 = scalar_lea.vmem %s3, %s171
      %s173 = smul.u32 8, %s14
      %v174 = vld [vmem:[%s166] sm:$0xf]
      %v175 = vld [vmem:[%s166 + $0x4] sm:$0xf]
      %v176 = vld [vmem:[%s166 + $0x8] sm:$0xf]
      %v177 = vld [vmem:[%s166 + $0xc] sm:$0xf]
      %v178 = vld [vmem:[%s166 + $0x10] sm:$0xf]
      %v179 = vld [vmem:[%s166 + $0x14] sm:$0xf]
      %v180 = vld [vmem:[%s166 + $0x18] sm:$0xf]
      %v181 = vld [vmem:[%s166 + $0x1c] sm:$0xf]
      %v182 = vunpack.c.l.bf16 %v174
      %v183 = vunpack.c.l.bf16 %v175
      %v184 = vunpack.c.l.bf16 %v176
      %v185 = vunpack.c.l.bf16 %v177
      %v186 = vunpack.c.l.bf16 %v178
      %v187 = vunpack.c.l.bf16 %v179
      %v188 = vunpack.c.l.bf16 %v180
      %v189 = vunpack.c.l.bf16 %v181
      %v190 = vld [vmem:[%s1] sm:$0x1]
      %v192 = vlaneseq
      %v193 = vshrl.u32 %v192, 7
      %v194 = vsub.s32 0, %v193
      %v195 = vrot.slane %v190, %v194
      %v197 = vmul.f32 %v182, %v195
      %v198 = vmul.f32 %v183, %v195
      %v199 = vmul.f32 %v184, %v195
      %v200 = vmul.f32 %v185, %v195
      %v201 = vmul.f32 %v186, %v195
      %v202 = vmul.f32 %v187, %v195
      %v203 = vmul.f32 %v188, %v195
      %v204 = vmul.f32 %v189, %v195
      %v205 = vld [vmem:[%s2] sm:$0x1]
      %v207 = vlaneseq
      %v208 = vshrl.u32 %v207, 7
      %v209 = vsub.s32 0, %v208
      %v210 = vrot.slane %v205, %v209
      %v212 = vadd.f32 %v197, %v210
      %v213 = vadd.f32 %v198, %v210
      %v214 = vadd.f32 %v199, %v210
      %v215 = vadd.f32 %v200, %v210
      %v216 = vadd.f32 %v201, %v210
      %v217 = vadd.f32 %v202, %v210
      %v218 = vadd.f32 %v203, %v210
      %v219 = vadd.f32 %v204, %v210
      %v220 = vmax.f32 %v212, 0.0
      %v221 = vmax.f32 %v213, 0.0
      %v222 = vmax.f32 %v214, 0.0
      %v223 = vmax.f32 %v215, 0.0
      %v224 = vmax.f32 %v216, 0.0
      %v225 = vmax.f32 %v217, 0.0
      %v226 = vmax.f32 %v218, 0.0
      %v227 = vmax.f32 %v219, 0.0
      %v228 = vpack.c.bf16 %v221, %v220
      %v229 = vpack.c.bf16 %v223, %v222
      %v230 = vpack.c.bf16 %v225, %v224
      %v231 = vpack.c.bf16 %v227, %v226
      %v236 = vunpack.c.l.b16 %v228
      %v237 = vunpack.c.h.b16 %v228
      %v238 = vunpack.c.l.b16 %v229
      %v239 = vunpack.c.h.b16 %v229
      %v240 = vunpack.c.l.b16 %v230
      %v241 = vunpack.c.h.b16 %v230
      %v242 = vunpack.c.l.b16 %v231
      %v243 = vunpack.c.h.b16 %v231
      %v244 = vpack.c.b16 %v236, %v236
      %v245 = vpack.c.b16 %v237, %v237
      %v246 = vpack.c.b16 %v238, %v238
      %v247 = vpack.c.b16 %v239, %v239
      %v248 = vpack.c.b16 %v240, %v240
      %v249 = vpack.c.b16 %v241, %v241
      %v250 = vpack.c.b16 %v242, %v242
      %v251 = vpack.c.b16 %v243, %v243
      %260 = vst [vmem:[%s172] sm:$0xf] %v244
      %261 = vst [vmem:[%s172 + $0x4] sm:$0xf] %v245
      %262 = vst [vmem:[%s172 + $0x8] sm:$0xf] %v246
      %263 = vst [vmem:[%s172 + $0xc] sm:$0xf] %v247
      %264 = vst [vmem:[%s172 + $0x10] sm:$0xf] %v248
      %265 = vst [vmem:[%s172 + $0x14] sm:$0xf] %v249
      %266 = vst [vmem:[%s172 + $0x18] sm:$0xf] %v250
      %267 = vst [vmem:[%s172 + $0x1c] sm:$0xf] %v251
      %s268 = smul.u32 8, %s14
      %p269 = scmp.lt.s32.totalorder %s268, 63
      %s270 = scalar_select %p269, %s268, 63
      %s271 = smul.addr %s270, 4
      %s272 = scalar_lea.vmem %s3, %s271
      // Predicated region
      $region33: #{generator_forward.16} parent=31 // pred_check
        %p273 = pneg %p100
      $region34: #{generator_forward.16} parent=31 // pred_check_branch
        %275 = sbr.rel (%p273) target = $region36
      $region35: #{generator_forward.16} parent=31 // pred_region
        %s276 = smul.u32 8, %s14
      $region36: #{generator_forward.16} parent=31 // pred_fallthru
        _
    $region32: #{generator_forward.16} parent=5 // pred_fallthru
      _
    %p277 = scmp.le.s32.totalorder 2, %s9
    // Predicated region
    $region37: #{generator_forward.16} parent=5 // pred_check
      %p278 = pneg %p277
    $region38: #{generator_forward.16} parent=5 // pred_check_branch
      %280 = sbr.rel (%p278) target = $region40
    $region39: #{generator_forward.16} parent=5 // pred_region
      %s281 = ssub.s32 %s9, 2
      // Predicated region
      $region41: #{generator_forward.16} parent=39 // pred_check
        %p282 = pneg %p106
      $region42: #{generator_forward.16} parent=39 // pred_check_branch
        %284 = sbr.rel (%p282) target = $region44
      $region43: #{generator_forward.16} parent=39 // pred_region
        %s285 = smul.u32 8, %s15
        %p286 = scmp.lt.s32.totalorder %s285, 63
        %s287 = scalar_select %p286, %s285, 63
        %s288 = smul.addr %s287, 4
        %s289 = scalar_lea.vmem %s3, %s288
      $region44: #{generator_forward.16} parent=39 // pred_fallthru
        _
    $region40: #{generator_forward.16} parent=5 // pred_fallthru
      _
  $region6: #{generator_forward.16} parent=0 // loop_footer
    %s13 = sadd.s32 1, %s9
  $region7: #{generator_forward.16} parent=0 // loop_footer_branch
    %8 = sbr.rel target = $region3
  $region8: #{generator_forward.16} parent=0 // loop_exit
    _

// kernel: generator_forward.17
$region0: #{generator_forward.17}
  #allocation0 [shape = 'u32[]', space=smem, size = 0x4, offset = 0x4, fixed_abs, tag = 'smem constant byte address 0x4 - core index']
  #allocation1 [shape = 'u32[144,128]{1,0:T(1,128)}', space=vmem, size = 0x12000, scoped, tag = 'internal scratch']
  %s0 = inlined_call_operand.vmem [shape: bf16[2048,72], index: 0, kind: input, shape index: {}]
  %s1 = inlined_call_operand.vmem [shape: bf16[72,128], index: 1, kind: input, shape index: {}]
  %s2 = inlined_call_operand.vmem [shape: f32[1,128], index: 2, kind: input, shape index: {}]
  %s3 = inlined_call_operand.vmem [shape: bf16[2048,128], index: 3, kind: output, shape index: {}]
  %s4 = sld [smem:[#allocation0]]
  $region45: #{generator_forward.17} parent=0
    _
  %s6 = ssub.s32 1, %s4
  %s7 = scalar_select 0, %s6, %s4
  loop: start=0, step=1, limit=10
  $region2: #{generator_forward.17} parent=0 // loop_pre_header
    _
  $region3: #{generator_forward.17} parent=0 // loop_header
    %s9 = sphi 0, %s13
    %p10 = scmp.ge.s32.totalorder %s9, 10
    %s19 = sphi 0, %s21
    %s22 = sphi 0, %s19
    %s23 = sphi 0, %s22
    %s39 = sphi 0, %s23
    %s43 = sphi 0, %s43
    %s45 = sphi 0, %s43
    %s46 = sphi 0, %s45
    %s60 = sphi 0, %s46
    %s64 = sphi 0, %s64
    %s66 = sphi 0, %s64
    %s67 = sphi 0, %s66
    %s81 = sphi 0, %s67
    %s87 = sphi 0, %s89
    %s90 = sphi 0, %s87
    %s91 = sphi 0, %s90
    %s107 = sphi 0, %s91
  $region4: #{generator_forward.17} parent=0 // loop_header_branch
    %12 = sbr.rel (%p10) target = $region8
  $region5: #{generator_forward.17} parent=0 // loop_body
    %s14 = ssub.s32 %s9, 1
    %s15 = ssub.s32 %s9, 2
    %s16 = sadd.s32 %s9, 1
    %s17 = ssub.s32 %s9, %s16
    %p18 = scmp.eq.s32.totalorder %s17, 0
    %s20 = sadd.s32 %s19, 1
    %s21 = scalar_select %p18, %s19, %s20
    %p24 = pneg %p18
    %p25 = scmp.eq.s32.totalorder %s9, 7
    %p26 = por %p24, %p25
    %p27 = scmp.ne.s32.totalorder %s19, %s22
    %p28 = scmp.eq.s32.totalorder %s9, 0
    %p29 = por %p27, %p28
    %p30 = scmp.ne.s32.totalorder %s19, %s22
    %p31 = scmp.eq.s32.totalorder %s14, 7
    %p32 = por %p30, %p31
    %p33 = scmp.ne.s32.totalorder %s22, %s23
    %p34 = scmp.eq.s32.totalorder %s14, 0
    %p35 = por %p33, %p34
    %p36 = scmp.ne.s32.totalorder %s22, %s23
    %p37 = scmp.eq.s32.totalorder %s15, 7
    %p38 = por %p36, %p37
    %p40 = scmp.ne.s32.totalorder %s23, %s39
    %p41 = scmp.eq.s32.totalorder %s15, 0
    %p42 = por %p40, %p41
    %s44 = sadd.s32 %s43, 1
    %p47 = scmp.eq.s32.totalorder %s9, 7
    %p48 = scmp.ne.s32.totalorder %s43, %s45
    %p49 = scmp.eq.s32.totalorder %s9, 0
    %p50 = por %p48, %p49
    %p51 = scmp.ne.s32.totalorder %s43, %s45
    %p52 = scmp.eq.s32.totalorder %s14, 7
    %p53 = por %p51, %p52
    %p54 = scmp.ne.s32.totalorder %s45, %s46
    %p55 = scmp.eq.s32.totalorder %s14, 0
    %p56 = por %p54, %p55
    %p57 = scmp.ne.s32.totalorder %s45, %s46
    %p58 = scmp.eq.s32.totalorder %s15, 7
    %p59 = por %p57, %p58
    %p61 = scmp.ne.s32.totalorder %s46, %s60
    %p62 = scmp.eq.s32.totalorder %s15, 0
    %p63 = por %p61, %p62
    %s65 = sadd.s32 %s64, 1
    %p68 = scmp.eq.s32.totalorder %s9, 7
    %p69 = scmp.ne.s32.totalorder %s64, %s66
    %p70 = scmp.eq.s32.totalorder %s9, 0
    %p71 = por %p69, %p70
    %p72 = scmp.ne.s32.totalorder %s64, %s66
    %p73 = scmp.eq.s32.totalorder %s14, 7
    %p74 = por %p72, %p73
    %p75 = scmp.ne.s32.totalorder %s66, %s67
    %p76 = scmp.eq.s32.totalorder %s14, 0
    %p77 = por %p75, %p76
    %p78 = scmp.ne.s32.totalorder %s66, %s67
    %p79 = scmp.eq.s32.totalorder %s15, 7
    %p80 = por %p78, %p79
    %p82 = scmp.ne.s32.totalorder %s67, %s81
    %p83 = scmp.eq.s32.totalorder %s15, 0
    %p84 = por %p82, %p83
    %s85 = ssub.s32 %s9, %s16
    %p86 = scmp.eq.s32.totalorder %s85, 0
    %s88 = sadd.s32 %s87, 1
    %s89 = scalar_select %p86, %s87, %s88
    %p92 = pneg %p86
    %p93 = scmp.eq.s32.totalorder %s9, 7
    %p94 = por %p92, %p93
    %p95 = scmp.ne.s32.totalorder %s87, %s90
    %p96 = scmp.eq.s32.totalorder %s9, 0
    %p97 = por %p95, %p96
    %p98 = scmp.ne.s32.totalorder %s87, %s90
    %p99 = scmp.eq.s32.totalorder %s14, 7
    %p100 = por %p98, %p99
    %p101 = scmp.ne.s32.totalorder %s90, %s91
    %p102 = scmp.eq.s32.totalorder %s14, 0
    %p103 = por %p101, %p102
    %p104 = scmp.ne.s32.totalorder %s90, %s91
    %p105 = scmp.eq.s32.totalorder %s15, 7
    %p106 = por %p104, %p105
    %p108 = scmp.ne.s32.totalorder %s91, %s107
    %p109 = scmp.eq.s32.totalorder %s15, 0
    %p110 = por %p108, %p109
    %p111 = scmp.le.s32.totalorder 1, %s9
    %p112 = scmp.lt.s32.totalorder %s9, 9
    %p113 = pnand %p111, %p112
    %p114 = pneg %p113
    // Predicated region
    $region9: #{generator_forward.17} parent=5 // pred_check
      _
    $region10: #{generator_forward.17} parent=5 // pred_check_branch
      %116 = sbr.rel (%p113) target = $region12
    $region11: #{generator_forward.17} parent=5 // pred_region
      %s117 = ssub.s32 %s9, 1
      // Predicated region
      $region13: #{generator_forward.17} parent=11 // pred_check
        %p118 = pneg %p56
      $region14: #{generator_forward.17} parent=11 // pred_check_branch
        %120 = sbr.rel (%p118) target = $region16
      $region15: #{generator_forward.17} parent=11 // pred_region
        _
      $region16: #{generator_forward.17} parent=11 // pred_fallthru
        _
      // Predicated region
      $region17: #{generator_forward.17} parent=11 // pred_check
        %p121 = pneg %p77
      $region18: #{generator_forward.17} parent=11 // pred_check_branch
        %123 = sbr.rel (%p121) target = $region20
      $region19: #{generator_forward.17} parent=11 // pred_region
        _
      $region20: #{generator_forward.17} parent=11 // pred_fallthru
        _
    $region12: #{generator_forward.17} parent=5 // pred_fallthru
      _
    %p124 = scmp.lt.s32.totalorder %s9, 8
    // Predicated region
    $region21: #{generator_forward.17} parent=5 // pred_check
      %p125 = pneg %p124
    $region22: #{generator_forward.17} parent=5 // pred_check_branch
      %127 = sbr.rel (%p125) target = $region24
    $region23: #{generator_forward.17} parent=5 // pred_region
      // Predicated region
      $region25: #{generator_forward.17} parent=23 // pred_check
        %p128 = pneg %p29
      $region26: #{generator_forward.17} parent=23 // pred_check_branch
        %130 = sbr.rel (%p128) target = $region28
      $region27: #{generator_forward.17} parent=23 // pred_region
        %s131 = smul.u32 32, %s9
        %p132 = scmp.lt.s32.totalorder %s131, 255
        %s133 = scalar_select %p132, %s131, 255
        %s134 = smul.addr %s133, 4
        %s135 = scalar_lea.vmem %s0, %s134
        %s136 = smul.u32 32, %s9
      $region28: #{generator_forward.17} parent=23 // pred_fallthru
        _
    $region24: #{generator_forward.17} parent=5 // pred_fallthru
      _
    %p137 = scmp.le.s32.totalorder 1, %s9
    %p138 = scmp.lt.s32.totalorder %s9, 9
    %p139 = pnand %p137, %p138
    %p140 = pneg %p139
    // Predicated region
    $region29: #{generator_forward.17} parent=5 // pred_check
      _
    $region30: #{generator_forward.17} parent=5 // pred_check_branch
      %142 = sbr.rel (%p139) target = $region32
    $region31: #{generator_forward.17} parent=5 // pred_region
      %s143 = ssub.s32 %s9, 1
      %s144 = smul.u32 32, %s14
      %p145 = scmp.lt.s32.totalorder %s144, 255
      %s146 = scalar_select %p145, %s144, 255
      %s147 = smul.addr %s146, 4
      %s148 = scalar_lea.vmem %s0, %s147
      %p149 = pneg %p35
      %p150 = pneg %p32
      %p151 = pneg %p56
      %p152 = pneg %p53
      %p153 = pneg %p77
      %p154 = pneg %p74
      %p155 = pneg %p103
      %p156 = pneg %p100
      %s157 = smul.u32 32, %s14
      %p158 = scmp.lt.s32.totalorder %s157, 255
      %s159 = scalar_select %p158, %s157, 255
      %s160 = smul.addr %s159, 4
      %s161 = scalar_lea.vmem %s3, %s160
      %s162 = smul.u32 32, %s14
      %p163 = scmp.lt.s32.totalorder %s162, 255
      %s164 = scalar_select %p163, %s162, 255
      %s165 = smul.addr %s164, 4
      %s166 = scalar_lea.vmem %s0, %s165
      %s167 = smul.u32 32, %s14
      %s168 = smul.u32 32, %s14
      %p169 = scmp.lt.s32.totalorder %s168, 255
      %s170 = scalar_select %p169, %s168, 255
      %s171 = smul.addr %s170, 4
      %s172 = scalar_lea.vmem %s3, %s171
      %s173 = smul.u32 32, %s14
      %v175 = vld [vmem:[%s166] sm:$0xf]
      %v176 = vld [vmem:[%s166 + $0x4] sm:$0xf]
      %v177 = vld [vmem:[%s166 + $0x8] sm:$0xf]
      %v178 = vld [vmem:[%s166 + $0xc] sm:$0xf]
      %v179 = vld [vmem:[%s166 + $0x10] sm:$0xf]
      %v180 = vld [vmem:[%s166 + $0x14] sm:$0xf]
      %v181 = vld [vmem:[%s166 + $0x18] sm:$0xf]
      %v182 = vld [vmem:[%s166 + $0x1c] sm:$0xf]
      %v183 = vld [vmem:[%s166 + $0x20] sm:$0xf]
      %v184 = vld [vmem:[%s166 + $0x24] sm:$0xf]
      %v185 = vld [vmem:[%s166 + $0x28] sm:$0xf]
      %v186 = vld [vmem:[%s166 + $0x2c] sm:$0xf]
      %v187 = vld [vmem:[%s166 + $0x30] sm:$0xf]
      %v188 = vld [vmem:[%s166 + $0x34] sm:$0xf]
      %v189 = vld [vmem:[%s166 + $0x38] sm:$0xf]
      %v190 = vld [vmem:[%s166 + $0x3c] sm:$0xf]
      %v191 = vld [vmem:[%s166 + $0x40] sm:$0xf]
      %v192 = vld [vmem:[%s166 + $0x44] sm:$0xf]
      %v193 = vld [vmem:[%s166 + $0x48] sm:$0xf]
      %v194 = vld [vmem:[%s166 + $0x4c] sm:$0xf]
      %v195 = vld [vmem:[%s166 + $0x50] sm:$0xf]
      %v196 = vld [vmem:[%s166 + $0x54] sm:$0xf]
      %v197 = vld [vmem:[%s166 + $0x58] sm:$0xf]
      %v198 = vld [vmem:[%s166 + $0x5c] sm:$0xf]
      %v199 = vld [vmem:[%s166 + $0x60] sm:$0xf]
      %v200 = vld [vmem:[%s166 + $0x64] sm:$0xf]
      %v201 = vld [vmem:[%s166 + $0x68] sm:$0xf]
      %v202 = vld [vmem:[%s166 + $0x6c] sm:$0xf]
      %v203 = vld [vmem:[%s166 + $0x70] sm:$0xf]
      %v204 = vld [vmem:[%s166 + $0x74] sm:$0xf]
      %v205 = vld [vmem:[%s166 + $0x78] sm:$0xf]
      %v206 = vld [vmem:[%s166 + $0x7c] sm:$0xf]
      %v207 = vld [vmem:[%s1] sm:$0xf]
      %v208 = vld [vmem:[%s1 + $0x4] sm:$0xf]
      %v209 = vld [vmem:[%s1 + $0x8] sm:$0xf]
      %v210 = vld [vmem:[%s1 + $0xc] sm:$0xf]
      %v211 = vld [vmem:[%s1 + $0x10] sm:$0xf]
      %v212 = vld [vmem:[%s1 + $0x14] sm:$0xf]
      %v213 = vld [vmem:[%s1 + $0x18] sm:$0xf]
      %v214 = vld [vmem:[%s1 + $0x1c] sm:$0xf]
      %v215 = vld [vmem:[%s1 + $0x20] sm:$0xf]
      %v216 = vld [vmem:[%s2] sm:$0x1]
      %v218 = vlaneseq
      %v219 = vshrl.u32 %v218, 7
      %v220 = vsub.s32 0, %v219
      %v221 = vrot.slane %v216, %v220
      %v255 = vunpack.c.l.b16 %v175
      %v256 = vunpack.c.l.b16 %v176
      %v257 = vunpack.c.l.b16 %v177
      %v258 = vunpack.c.l.b16 %v178
      %v259 = vunpack.c.l.b16 %v179
      %v260 = vunpack.c.l.b16 %v180
      %v261 = vunpack.c.l.b16 %v181
      %v262 = vunpack.c.l.b16 %v182
      %v263 = vunpack.c.l.b16 %v183
      %v264 = vunpack.c.l.b16 %v184
      %v265 = vunpack.c.l.b16 %v185
      %v266 = vunpack.c.l.b16 %v186
      %v267 = vunpack.c.l.b16 %v187
      %v268 = vunpack.c.l.b16 %v188
      %v269 = vunpack.c.l.b16 %v189
      %v270 = vunpack.c.l.b16 %v190
      %v271 = vunpack.c.l.b16 %v191
      %v272 = vunpack.c.l.b16 %v192
      %v273 = vunpack.c.l.b16 %v193
      %v274 = vunpack.c.l.b16 %v194
      %v275 = vunpack.c.l.b16 %v195
      %v276 = vunpack.c.l.b16 %v196
      %v277 = vunpack.c.l.b16 %v197
      %v278 = vunpack.c.l.b16 %v198
      %v279 = vunpack.c.l.b16 %v199
      %v280 = vunpack.c.l.b16 %v200
      %v281 = vunpack.c.l.b16 %v201
      %v282 = vunpack.c.l.b16 %v202
      %v283 = vunpack.c.l.b16 %v203
      %v284 = vunpack.c.l.b16 %v204
      %v285 = vunpack.c.l.b16 %v205
      %v286 = vunpack.c.l.b16 %v206
      %v287 = vpack.c.b16 %v256, %v255
      %v288 = vpack.c.b16 %v258, %v257
      %v289 = vpack.c.b16 %v260, %v259
      %v290 = vpack.c.b16 %v262, %v261
      %v291 = vpack.c.b16 %v264, %v263
      %v292 = vpack.c.b16 %v266, %v265
      %v293 = vpack.c.b16 %v268, %v267
      %v294 = vpack.c.b16 %v270, %v269
      %v295 = vpack.c.b16 %v272, %v271
      %v296 = vpack.c.b16 %v274, %v273
      %v297 = vpack.c.b16 %v276, %v275
      %v298 = vpack.c.b16 %v278, %v277
      %v299 = vpack.c.b16 %v280, %v279
      %v300 = vpack.c.b16 %v282, %v281
      %v301 = vpack.c.b16 %v284, %v283
      %v302 = vpack.c.b16 %v286, %v285
      %v312 = vunpack.c.l.b16 %v207
      %v313 = vunpack.c.l.b16 %v208
      %v314 = vunpack.c.l.b16 %v209
      %v315 = vunpack.c.l.b16 %v210
      %v316 = vunpack.c.l.b16 %v211
      %v317 = vunpack.c.l.b16 %v212
      %v318 = vunpack.c.l.b16 %v213
      %v319 = vunpack.c.l.b16 %v214
      %v320 = vunpack.c.l.b16 %v215
      %v321 = vpack.c.b16 %v313, %v312
      %v322 = vpack.c.b16 %v315, %v314
      %v323 = vpack.c.b16 %v317, %v316
      %v324 = vpack.c.b16 %v319, %v318
      %v325 = vpack.c.b16 %v320, %v320
      %vm330 = vcmask 588800
      %v332 = vsel %vm330, %v287, 0
      %v335 = vsel %vm330, %v288, 0
      %v338 = vsel %vm330, %v289, 0
      %v341 = vsel %vm330, %v290, 0
      %v344 = vsel %vm330, %v291, 0
      %v347 = vsel %vm330, %v292, 0
      %v350 = vsel %vm330, %v293, 0
      %v353 = vsel %vm330, %v294, 0
      %v356 = vsel %vm330, %v295, 0
      %v359 = vsel %vm330, %v296, 0
      %v362 = vsel %vm330, %v297, 0
      %v365 = vsel %vm330, %v298, 0
      %v368 = vsel %vm330, %v299, 0
      %v371 = vsel %vm330, %v300, 0
      %v374 = vsel %vm330, %v301, 0
      %v377 = vsel %vm330, %v302, 0
      %vm379 = vcmask 1043456
      %v381 = vsel %vm379, %v325, 0
      %383 = vmatprep.subr.bf16.mxu0 0
      %384 = vmatpush1.bf16.msra.mxu0 0
      %385 = vmatprep.subr.bf16.mxu0 0
      %386 = vmatpush1.bf16.msra.mxu0 0
      %387 = vmatprep.subr.bf16.mxu0 0
      %388 = vmatpush1.bf16.msra.mxu0 0
      %389 = vmatprep.subr.bf16.mxu0 0
      %390 = vmatpush1.bf16.msra.mxu0 %v381
      %391 = vmatprep.subr.bf16.mxu0 0
      %392 = vmatpush1.bf16.msra.mxu0 %v324
      %393 = vmatprep.subr.bf16.mxu0 0
      %394 = vmatpush1.bf16.msra.mxu0 %v323
      %395 = vmatprep.subr.bf16.mxu0 0
      %396 = vmatpush1.bf16.msra.mxu0 %v322
      %397 = vmatprep.subr.bf16.mxu0 0
      %398 = vmatpush1.bf16.msra.mxu0 %v321
      %399 = vmatprep.subr.bf16.mxu0 0
      %400 = vmatpush2.bf16.msra.mxu0 0
      %401 = vmatprep.subr.bf16.mxu0 0
      %402 = vmatpush2.bf16.msra.mxu0 0
      %403 = vmatprep.subr.bf16.mxu0 0
      %404 = vmatpush2.bf16.msra.mxu0 0
      %405 = vmatprep.subr.bf16.mxu0 0
      %406 = vmatpush2.bf16.msra.mxu0 0
      %407 = vmatprep.subr.bf16.mxu0 0
      %408 = vmatpush2.bf16.msra.mxu0 0
      %409 = vmatprep.subr.bf16.mxu0 0
      %410 = vmatpush2.bf16.msra.mxu0 0
      %411 = vmatprep.subr.bf16.mxu0 0
      %412 = vmatpush2.bf16.msra.mxu0 0
      %413 = vmatprep.subr.bf16.mxu0 0
      %414 = vmatpush2.bf16.msra.mxu0 0
      %415 = vmatprep.mubr.bf16.mxu0 0
      %416 = vmatmul.mubr.bf16.gmra.mxu0 %v332
      %v417 = vpop.f32.mrf.mxu0
      %v418 = vadd.f32 %v221, %v417
      %v419 = vpop.f32.mrf.mxu0
      %v420 = vpop.f32.mrf.mxu0
      %v421 = vadd.f32 %v221, %v420
      %v422 = vpop.f32.mrf.mxu0
      %423 = vmatprep.mubr.bf16.mxu0 0
      %424 = vmatmul.mubr.bf16.gmra.mxu0 %v335
      %v425 = vpop.f32.mrf.mxu0
      %v426 = vadd.f32 %v221, %v425
      %v427 = vpop.f32.mrf.mxu0
      %v428 = vpop.f32.mrf.mxu0
      %v429 = vadd.f32 %v221, %v428
      %v430 = vpop.f32.mrf.mxu0
      %431 = vmatprep.mubr.bf16.mxu0 0
      %432 = vmatmul.mubr.bf16.gmra.mxu0 %v338
      %v433 = vpop.f32.mrf.mxu0
      %v434 = vadd.f32 %v221, %v433
      %v435 = vpop.f32.mrf.mxu0
      %v436 = vpop.f32.mrf.mxu0
      %v437 = vadd.f32 %v221, %v436
      %v438 = vpop.f32.mrf.mxu0
      %439 = vmatprep.mubr.bf16.mxu0 0
      %440 = vmatmul.mubr.bf16.gmra.mxu0 %v341
      %v441 = vpop.f32.mrf.mxu0
      %v442 = vadd.f32 %v221, %v441
      %v443 = vpop.f32.mrf.mxu0
      %v444 = vpop.f32.mrf.mxu0
      %v445 = vadd.f32 %v221, %v444
      %v446 = vpop.f32.mrf.mxu0
      %447 = vmatprep.mubr.bf16.mxu0 0
      %448 = vmatmul.mubr.bf16.gmra.mxu0 %v344
      %v449 = vpop.f32.mrf.mxu0
      %v450 = vadd.f32 %v221, %v449
      %v451 = vpop.f32.mrf.mxu0
      %v452 = vpop.f32.mrf.mxu0
      %v453 = vadd.f32 %v221, %v452
      %v454 = vpop.f32.mrf.mxu0
      %455 = vmatprep.mubr.bf16.mxu0 0
      %456 = vmatmul.mubr.bf16.gmra.mxu0 %v347
      %v457 = vpop.f32.mrf.mxu0
      %v458 = vadd.f32 %v221, %v457
      %v459 = vpop.f32.mrf.mxu0
      %v460 = vpop.f32.mrf.mxu0
      %v461 = vadd.f32 %v221, %v460
      %v462 = vpop.f32.mrf.mxu0
      %463 = vmatprep.mubr.bf16.mxu0 0
      %464 = vmatmul.mubr.bf16.gmra.mxu0 %v350
      %v465 = vpop.f32.mrf.mxu0
      %v466 = vadd.f32 %v221, %v465
      %v467 = vpop.f32.mrf.mxu0
      %v468 = vpop.f32.mrf.mxu0
      %v469 = vadd.f32 %v221, %v468
      %v470 = vpop.f32.mrf.mxu0
      %471 = vmatprep.mubr.bf16.mxu0 0
      %472 = vmatmul.mubr.bf16.gmra.mxu0 %v353
      %v473 = vpop.f32.mrf.mxu0
      %v474 = vadd.f32 %v221, %v473
      %v475 = vpop.f32.mrf.mxu0
      %v476 = vpop.f32.mrf.mxu0
      %v477 = vadd.f32 %v221, %v476
      %v478 = vpop.f32.mrf.mxu0
      %479 = vmatprep.mubr.bf16.mxu0 0
      %480 = vmatmul.mubr.bf16.gmra.mxu0 %v356
      %v481 = vpop.f32.mrf.mxu0
      %v482 = vadd.f32 %v221, %v481
      %v483 = vpop.f32.mrf.mxu0
      %v484 = vpop.f32.mrf.mxu0
      %v485 = vadd.f32 %v221, %v484
      %v486 = vpop.f32.mrf.mxu0
      %487 = vmatprep.mubr.bf16.mxu0 0
      %488 = vmatmul.mubr.bf16.gmra.mxu0 %v359
      %v489 = vpop.f32.mrf.mxu0
      %v490 = vadd.f32 %v221, %v489
      %v491 = vpop.f32.mrf.mxu0
      %v492 = vpop.f32.mrf.mxu0
      %v493 = vadd.f32 %v221, %v492
      %v494 = vpop.f32.mrf.mxu0
      %495 = vmatprep.mubr.bf16.mxu0 0
      %496 = vmatmul.mubr.bf16.gmra.mxu0 %v362
      %v497 = vpop.f32.mrf.mxu0
      %v498 = vadd.f32 %v221, %v497
      %v499 = vpop.f32.mrf.mxu0
      %v500 = vpop.f32.mrf.mxu0
      %v501 = vadd.f32 %v221, %v500
      %v502 = vpop.f32.mrf.mxu0
      %503 = vmatprep.mubr.bf16.mxu0 0
      %504 = vmatmul.mubr.bf16.gmra.mxu0 %v365
      %v505 = vpop.f32.mrf.mxu0
      %v506 = vadd.f32 %v221, %v505
      %v507 = vpop.f32.mrf.mxu0
      %v508 = vpop.f32.mrf.mxu0
      %v509 = vadd.f32 %v221, %v508
      %v510 = vpop.f32.mrf.mxu0
      %511 = vmatprep.mubr.bf16.mxu0 0
      %512 = vmatmul.mubr.bf16.gmra.mxu0 %v368
      %v513 = vpop.f32.mrf.mxu0
      %v514 = vadd.f32 %v221, %v513
      %v515 = vpop.f32.mrf.mxu0
      %v516 = vpop.f32.mrf.mxu0
      %v517 = vadd.f32 %v221, %v516
      %v518 = vpop.f32.mrf.mxu0
      %519 = vmatprep.mubr.bf16.mxu0 0
      %520 = vmatmul.mubr.bf16.gmra.mxu0 %v371
      %v521 = vpop.f32.mrf.mxu0
      %v522 = vadd.f32 %v221, %v521
      %v523 = vpop.f32.mrf.mxu0
      %v524 = vpop.f32.mrf.mxu0
      %v525 = vadd.f32 %v221, %v524
      %v526 = vpop.f32.mrf.mxu0
      %527 = vmatprep.mubr.bf16.mxu0 0
      %528 = vmatmul.mubr.bf16.gmra.mxu0 %v374
      %v529 = vpop.f32.mrf.mxu0
      %v530 = vadd.f32 %v221, %v529
      %v531 = vpop.f32.mrf.mxu0
      %v532 = vpop.f32.mrf.mxu0
      %v533 = vadd.f32 %v221, %v532
      %v534 = vpop.f32.mrf.mxu0
      %535 = vmatprep.mubr.bf16.mxu0 0
      %536 = vmatmul.mubr.bf16.gmra.mxu0 %v377
      %v537 = vpop.f32.mrf.mxu0
      %v538 = vadd.f32 %v221, %v537
      %v539 = vpop.f32.mrf.mxu0
      %v540 = vpop.f32.mrf.mxu0
      %v541 = vadd.f32 %v221, %v540
      %v542 = vpop.f32.mrf.mxu0
      %543 = vdwg.mxu0
      %v544 = vtanh.pop %v418
      %v545 = vtanh.pop %v421
      %v546 = vtanh.pop %v426
      %v547 = vtanh.pop %v429
      %v548 = vtanh.pop %v434
      %v549 = vtanh.pop %v437
      %v550 = vtanh.pop %v442
      %v551 = vtanh.pop %v445
      %v552 = vtanh.pop %v450
      %v553 = vtanh.pop %v453
      %v554 = vtanh.pop %v458
      %v555 = vtanh.pop %v461
      %v556 = vtanh.pop %v466
      %v557 = vtanh.pop %v469
      %v558 = vtanh.pop %v474
      %v559 = vtanh.pop %v477
      %v560 = vtanh.pop %v482
      %v561 = vtanh.pop %v485
      %v562 = vtanh.pop %v490
      %v563 = vtanh.pop %v493
      %v564 = vtanh.pop %v498
      %v565 = vtanh.pop %v501
      %v566 = vtanh.pop %v506
      %v567 = vtanh.pop %v509
      %v568 = vtanh.pop %v514
      %v569 = vtanh.pop %v517
      %v570 = vtanh.pop %v522
      %v571 = vtanh.pop %v525
      %v572 = vtanh.pop %v530
      %v573 = vtanh.pop %v533
      %v574 = vtanh.pop %v538
      %v575 = vtanh.pop %v541
      %v576 = vpack.c.bf16 %v545, %v544
      %v577 = vpack.c.bf16 %v547, %v546
      %v578 = vpack.c.bf16 %v549, %v548
      %v579 = vpack.c.bf16 %v551, %v550
      %v580 = vpack.c.bf16 %v553, %v552
      %v581 = vpack.c.bf16 %v555, %v554
      %v582 = vpack.c.bf16 %v557, %v556
      %v583 = vpack.c.bf16 %v559, %v558
      %v584 = vpack.c.bf16 %v561, %v560
      %v585 = vpack.c.bf16 %v563, %v562
      %v586 = vpack.c.bf16 %v565, %v564
      %v587 = vpack.c.bf16 %v567, %v566
      %v588 = vpack.c.bf16 %v569, %v568
      %v589 = vpack.c.bf16 %v571, %v570
      %v590 = vpack.c.bf16 %v573, %v572
      %v591 = vpack.c.bf16 %v575, %v574
      %v608 = vunpack.c.l.b16 %v576
      %v609 = vunpack.c.h.b16 %v576
      %v610 = vunpack.c.l.b16 %v577
      %v611 = vunpack.c.h.b16 %v577
      %v612 = vunpack.c.l.b16 %v578
      %v613 = vunpack.c.h.b16 %v578
      %v614 = vunpack.c.l.b16 %v579
      %v615 = vunpack.c.h.b16 %v579
      %v616 = vunpack.c.l.b16 %v580
      %v617 = vunpack.c.h.b16 %v580
      %v618 = vunpack.c.l.b16 %v581
      %v619 = vunpack.c.h.b16 %v581
      %v620 = vunpack.c.l.b16 %v582
      %v621 = vunpack.c.h.b16 %v582
      %v622 = vunpack.c.l.b16 %v583
      %v623 = vunpack.c.h.b16 %v583
      %v624 = vunpack.c.l.b16 %v584
      %v625 = vunpack.c.h.b16 %v584
      %v626 = vunpack.c.l.b16 %v585
      %v627 = vunpack.c.h.b16 %v585
      %v628 = vunpack.c.l.b16 %v586
      %v629 = vunpack.c.h.b16 %v586
      %v630 = vunpack.c.l.b16 %v587
      %v631 = vunpack.c.h.b16 %v587
      %v632 = vunpack.c.l.b16 %v588
      %v633 = vunpack.c.h.b16 %v588
      %v634 = vunpack.c.l.b16 %v589
      %v635 = vunpack.c.h.b16 %v589
      %v636 = vunpack.c.l.b16 %v590
      %v637 = vunpack.c.h.b16 %v590
      %v638 = vunpack.c.l.b16 %v591
      %v639 = vunpack.c.h.b16 %v591
      %v640 = vpack.c.b16 %v608, %v608
      %v641 = vpack.c.b16 %v609, %v609
      %v642 = vpack.c.b16 %v610, %v610
      %v643 = vpack.c.b16 %v611, %v611
      %v644 = vpack.c.b16 %v612, %v612
      %v645 = vpack.c.b16 %v613, %v613
      %v646 = vpack.c.b16 %v614, %v614
      %v647 = vpack.c.b16 %v615, %v615
      %v648 = vpack.c.b16 %v616, %v616
      %v649 = vpack.c.b16 %v617, %v617
      %v650 = vpack.c.b16 %v618, %v618
      %v651 = vpack.c.b16 %v619, %v619
      %v652 = vpack.c.b16 %v620, %v620
      %v653 = vpack.c.b16 %v621, %v621
      %v654 = vpack.c.b16 %v622, %v622
      %v655 = vpack.c.b16 %v623, %v623
      %v656 = vpack.c.b16 %v624, %v624
      %v657 = vpack.c.b16 %v625, %v625
      %v658 = vpack.c.b16 %v626, %v626
      %v659 = vpack.c.b16 %v627, %v627
      %v660 = vpack.c.b16 %v628, %v628
      %v661 = vpack.c.b16 %v629, %v629
      %v662 = vpack.c.b16 %v630, %v630
      %v663 = vpack.c.b16 %v631, %v631
      %v664 = vpack.c.b16 %v632, %v632
      %v665 = vpack.c.b16 %v633, %v633
      %v666 = vpack.c.b16 %v634, %v634
      %v667 = vpack.c.b16 %v635, %v635
      %v668 = vpack.c.b16 %v636, %v636
      %v669 = vpack.c.b16 %v637, %v637
      %v670 = vpack.c.b16 %v638, %v638
      %v671 = vpack.c.b16 %v639, %v639
      %704 = vst [vmem:[%s172] sm:$0xf] %v640
      %705 = vst [vmem:[%s172 + $0x4] sm:$0xf] %v641
      %706 = vst [vmem:[%s172 + $0x8] sm:$0xf] %v642
      %707 = vst [vmem:[%s172 + $0xc] sm:$0xf] %v643
      %708 = vst [vmem:[%s172 + $0x10] sm:$0xf] %v644
      %709 = vst [vmem:[%s172 + $0x14] sm:$0xf] %v645
      %710 = vst [vmem:[%s172 + $0x18] sm:$0xf] %v646
      %711 = vst [vmem:[%s172 + $0x1c] sm:$0xf] %v647
      %712 = vst [vmem:[%s172 + $0x20] sm:$0xf] %v648
      %713 = vst [vmem:[%s172 + $0x24] sm:$0xf] %v649
      %714 = vst [vmem:[%s172 + $0x28] sm:$0xf] %v650
      %715 = vst [vmem:[%s172 + $0x2c] sm:$0xf] %v651
      %716 = vst [vmem:[%s172 + $0x30] sm:$0xf] %v652
      %717 = vst [vmem:[%s172 + $0x34] sm:$0xf] %v653
      %718 = vst [vmem:[%s172 + $0x38] sm:$0xf] %v654
      %719 = vst [vmem:[%s172 + $0x3c] sm:$0xf] %v655
      %720 = vst [vmem:[%s172 + $0x40] sm:$0xf] %v656
      %721 = vst [vmem:[%s172 + $0x44] sm:$0xf] %v657
      %722 = vst [vmem:[%s172 + $0x48] sm:$0xf] %v658
      %723 = vst [vmem:[%s172 + $0x4c] sm:$0xf] %v659
      %724 = vst [vmem:[%s172 + $0x50] sm:$0xf] %v660
      %725 = vst [vmem:[%s172 + $0x54] sm:$0xf] %v661
      %726 = vst [vmem:[%s172 + $0x58] sm:$0xf] %v662
      %727 = vst [vmem:[%s172 + $0x5c] sm:$0xf] %v663
      %728 = vst [vmem:[%s172 + $0x60] sm:$0xf] %v664
      %729 = vst [vmem:[%s172 + $0x64] sm:$0xf] %v665
      %730 = vst [vmem:[%s172 + $0x68] sm:$0xf] %v666
      %731 = vst [vmem:[%s172 + $0x6c] sm:$0xf] %v667
      %732 = vst [vmem:[%s172 + $0x70] sm:$0xf] %v668
      %733 = vst [vmem:[%s172 + $0x74] sm:$0xf] %v669
      %734 = vst [vmem:[%s172 + $0x78] sm:$0xf] %v670
      %735 = vst [vmem:[%s172 + $0x7c] sm:$0xf] %v671
      %s736 = smul.u32 32, %s14
      %p737 = scmp.lt.s32.totalorder %s736, 255
      %s738 = scalar_select %p737, %s736, 255
      %s739 = smul.addr %s738, 4
      %s740 = scalar_lea.vmem %s3, %s739
      // Predicated region
      $region33: #{generator_forward.17} parent=31 // pred_check
        %p741 = pneg %p100
      $region34: #{generator_forward.17} parent=31 // pred_check_branch
        %743 = sbr.rel (%p741) target = $region36
      $region35: #{generator_forward.17} parent=31 // pred_region
        %s744 = smul.u32 32, %s14
      $region36: #{generator_forward.17} parent=31 // pred_fallthru
        _
    $region32: #{generator_forward.17} parent=5 // pred_fallthru
      _
    %p745 = scmp.le.s32.totalorder 2, %s9
    // Predicated region
    $region37: #{generator_forward.17} parent=5 // pred_check
      %p746 = pneg %p745
    $region38: #{generator_forward.17} parent=5 // pred_check_branch
      %748 = sbr.rel (%p746) target = $region40
    $region39: #{generator_forward.17} parent=5 // pred_region
      %s749 = ssub.s32 %s9, 2
      // Predicated region
      $region41: #{generator_forward.17} parent=39 // pred_check
        %p750 = pneg %p106
      $region42: #{generator_forward.17} parent=39 // pred_check_branch
        %752 = sbr.rel (%p750) target = $region44
      $region43: #{generator_forward.17} parent=39 // pred_region
        %s753 = smul.u32 32, %s15
        %p754 = scmp.lt.s32.totalorder %s753, 255
        %s755 = scalar_select %p754, %s753, 255
        %s756 = smul.addr %s755, 4
        %s757 = scalar_lea.vmem %s3, %s756
      $region44: #{generator_forward.17} parent=39 // pred_fallthru
        _
    $region40: #{generator_forward.17} parent=5 // pred_fallthru
      _
  $region6: #{generator_forward.17} parent=0 // loop_footer
    %s13 = sadd.s32 1, %s9
  $region7: #{generator_forward.17} parent=0 // loop_footer_branch
    %8 = sbr.rel target = $region3
  $region8: #{generator_forward.17} parent=0 // loop_exit
    _

</llo_original>
